<compile_context>
chip_gen: v7x
topology: tpu7x:2x2x1
jax: 0.10.0
libtpu: 0.0.40
codegen_flags: <defaults>
</compile_context>

<pallas_src>
import math

import jax
import jax.numpy as jnp
from jax.experimental import pallas as pl
from jax.experimental.pallas import tpu as pltpu


# ----------------------------- Pallas kernel --------------------------------
def lstm_rnn_kernel(gin0_ref, len_ref, h0_ref, c0_ref,
                    whh0_ref, wih1_ref, whh1_ref, b1_ref,
                    wdec_ref, bdec_ref,
                    dec_ref, hN_ref, cN_ref,
                    out_scr):
    """2-layer LSTM (packed-sequence semantics) + post-loop linear decoder + sigmoid.

    Gate layout everywhere is the permuted [i, f, o | g] order.

    gin0_ref : (seq*bpad, 4*nhid) f32  precomputed W_ih0[token] + b0 per timestep
    len_ref  : (bpad, 1)          i32  per-sequence valid length (padded rows = 0)
    h0/c0    : (2, bpad, nhid)    f32  initial hidden / cell
    whh0     : (nhid, 4*nhid)     f32  layer-0 hidden->gates (pre-transposed)
    wih1/whh1: (nhid, 4*nhid)     f32  layer-1 input/hidden->gates (pre-transposed)
    b1       : (1, 4*nhid)        f32  b_ih1 + b_hh1
    wdec     : (nhid, nout_pad)   f32  decoder weight, zero-padded to 128 lanes
    bdec     : (1, nout_pad)      f32
    dec_ref  : (seq*bpad, nout_pad) f32  sigmoid(decoder(padded LSTM output))
    hN/cN    : (2, bpad, nhid)    f32  hidden/cell at each sequence's last valid t
    out_scr  : (seq*bpad, nhid)   f32  VMEM staging for padded LSTM outputs
    """
    nhid = h0_ref.shape[-1]
    bpad = h0_ref.shape[1]
    seq = gin0_ref.shape[0] // bpad

    # hoist invariant loads out of the (unrolled) time loop
    whh0 = whh0_ref[...]
    wih1 = wih1_ref[...]
    whh1 = whh1_ref[...]
    b1 = b1_ref[...]
    len_col = len_ref[...]                     # (bpad, 1) int32, loaded once

    # recurrent state carried as values (vregs), not VMEM scratch
    h0 = h0_ref[0]
    c0 = c0_ref[0]
    h1 = h0_ref[1]
    c1 = c0_ref[1]

    def gate_math(gates, c):
        # gates layout [i, f, o | g]: sigmoid over 3*nhid lanes, tanh over nhid
        # lanes only (vs 2 full-width passes before) -- EUP is the per-step
        # critical-path unit.
        s = jax.nn.sigmoid(gates[:, :3 * nhid])
        g = jnp.tanh(gates[:, 3 * nhid:])
        i = s[:, 0 * nhid:1 * nhid]
        f = s[:, 1 * nhid:2 * nhid]
        o = s[:, 2 * nhid:3 * nhid]
        c_new = f * c + i * g
        h_new = o * jnp.tanh(c_new)
        return h_new, c_new

    for t in range(seq):                       # fully unrolled; all slices static
        r0 = t * bpad
        m = len_col > t                        # (bpad, 1) bool, one VPU compare

        # layer-1 recurrent term: depends only on the previous step's h1, so it
        # sits off the per-step critical path (issued before the layer-0 chain).
        rec1 = jnp.dot(h1, whh1, preferred_element_type=jnp.float32) + b1

        # ---- layer 0 (input projection + bias precomputed in the wrapper) ----
        gates0 = gin0_ref[r0:r0 + bpad, :] + jnp.dot(
            h0, whh0, preferred_element_type=jnp.float32)
        hn0, cn0 = gate_math(gates0, c0)
        h0 = jnp.where(m, hn0, h0)             # packed-seq: freeze past length
        c0 = jnp.where(m, cn0, c0)

        # ---- layer 1 (inter-layer dropout is identity in eval mode) ----
        gates1 = jnp.dot(hn0, wih1, preferred_element_type=jnp.float32) + rec1
        hn1, cn1 = gate_math(gates1, c1)
        h1 = jnp.where(m, hn1, h1)
        c1 = jnp.where(m, cn1, c1)

        # pad_packed_sequence: zero output past each sequence's length
        out_scr[r0:r0 + bpad, :] = jnp.where(m, hn1, jnp.zeros_like(hn1))

    # ---- decoder + sigmoid: one batched matmul over all timesteps, lane-dense ----
    logits = jnp.dot(out_scr[...], wdec_ref[...],
                     preferred_element_type=jnp.float32) + bdec_ref[...]
    dec_ref[...] = jax.nn.sigmoid(logits)

    # final hidden = state at last valid timestep of each sequence
    hN_ref[0] = h0
    hN_ref[1] = h1
    cN_ref[0] = c0
    cN_ref[1] = c1


# ------------------------------- wrapper -------------------------------------
@jax.jit
def rnn_model_forward(tokens, lengths, h0, c0, params):
    """tokens: (seq, batch) int32; lengths: (batch,) int32.  params are in the
    original PyTorch [i, f, g, o] gate order; permutation happens here."""
    seq, batch = tokens.shape
    nhid = params["whh0"].shape[0]
    nout = params["wdec"].shape[1]

    # permute gate columns to [i, f, o, g] so the kernel can split the
    # transcendental passes (sigmoid on 3*nhid lanes, tanh on nhid lanes)
    def perm(w):
        gi, gf, gg, go = jnp.split(w, 4, axis=-1)
        return jnp.concatenate([gi, gf, go, gg], axis=-1)

    wih0 = perm(params["wih0"])
    whh0 = perm(params["whh0"])
    b0 = perm(params["b0"])
    wih1 = perm(params["wih1"])
    whh1 = perm(params["whh1"])
    b1 = perm(params["b1"])

    # lane-dense decoder: zero-pad output columns to a multiple of 128
    nout_pad = ((nout + 127) // 128) * 128
    wdec = jnp.pad(params["wdec"], ((0, 0), (0, nout_pad - nout)))
    bdec = jnp.pad(params["bdec"], ((0, 0), (0, nout_pad - nout)))

    # pad batch to a sublane multiple (8) so every (batch, nhid) tile is dense
    bpad = ((batch + 7) // 8) * 8
    pad = bpad - batch
    tokens_p = jnp.pad(tokens, ((0, 0), (0, pad)))               # pad token id 0 (valid)
    lengths_p = jnp.pad(lengths.astype(jnp.int32), (0, pad))     # pad length 0 (masked out)
    h0_p = jnp.pad(h0, ((0, 0), (0, pad), (0, 0)))
    c0_p = jnp.pad(c0, ((0, 0), (0, pad), (0, 0)))

    # identity one-hot encoder + layer-0 input projection + bias == row gather of W_ih0
    gin0 = jnp.take(wih0, tokens_p, axis=0) + b0                 # (seq, bpad, 4*nhid)
    gin0 = gin0.reshape(seq * bpad, 4 * nhid)

    # per-sequence lengths as a single small column; mask is computed in-kernel
    len_col = lengths_p.reshape(bpad, 1)

    vmem = pl.BlockSpec(memory_space=pltpu.MemorySpace.VMEM)
    dec2d, hN, cN = pl.pallas_call(
        lstm_rnn_kernel,
        out_shape=(
            jax.ShapeDtypeStruct((seq * bpad, nout_pad), jnp.float32),
            jax.ShapeDtypeStruct((2, bpad, nhid), jnp.float32),
            jax.ShapeDtypeStruct((2, bpad, nhid), jnp.float32),
        ),
        in_specs=[vmem] * 10,
        out_specs=(vmem, vmem, vmem),
        scratch_shapes=[
            pltpu.VMEM((seq * bpad, nhid), jnp.float32),  # staged LSTM outputs
        ],
        # matters when scaling up (v5e default scoped VMEM is only 16 MiB;
        # keep <= ~48 MiB when budgeting for v7x's 64 MiB physical VMEM)
        compiler_params=pltpu.CompilerParams(vmem_limit_bytes=32 * 1024 * 1024),
    )(gin0, len_col, h0_p, c0_p, whh0, wih1, whh1, b1, wdec, bdec)

    dec = dec2d.reshape(seq, bpad, nout_pad)[:, :batch, :nout]   # free reshape/slice in HBM
    return dec, (hN[:, :batch], cN[:, :batch])


# --------------------------- pure-JAX reference ------------------------------
def reference_forward(tokens, lengths, h0, c0, params):
    seq, batch = tokens.shape
    ntoken = params["wih0"].shape[0]
    nhid = params["whh0"].shape[0]
    emb = jax.nn.one_hot(tokens, ntoken, dtype=jnp.float32)
    mask_len = lengths.reshape(batch, 1)

    def cell(x, h, c, wih, whh, b):
        gates = x @ wih + h @ whh + b
        i = jax.nn.sigmoid(gates[:, 0 * nhid:1 * nhid])
        f = jax.nn.sigmoid(gates[:, 1 * nhid:2 * nhid])
        g = jnp.tanh(gates[:, 2 * nhid:3 * nhid])
        o = jax.nn.sigmoid(gates[:, 3 * nhid:4 * nhid])
        c_new = f * c + i * g
        return o * jnp.tanh(c_new), c_new

    h = [h0[0], h0[1]]
    c = [c0[0], c0[1]]
    outs = []
    for t in range(seq):
        m = mask_len > t
        hn0, cn0 = cell(emb[t], h[0], c[0],
                        params["wih0"], params["whh0"], params["b0"])
        h[0] = jnp.where(m, hn0, h[0])
        c[0] = jnp.where(m, cn0, c[0])
        hn1, cn1 = cell(hn0, h[1], c[1],
                        params["wih1"], params["whh1"], params["b1"])
        h[1] = jnp.where(m, hn1, h[1])
        c[1] = jnp.where(m, cn1, c[1])
        out_t = jnp.where(m, hn1, 0.0)
        outs.append(jax.nn.sigmoid(out_t @ params["wdec"] + params["bdec"]))
    dec = jnp.stack(outs, axis=0)
    return dec, (jnp.stack(h, 0), jnp.stack(c, 0))


# --------------------------------- main ---------------------------------------
if __name__ == "__main__":
    # model sizes (is_embedding=False  =>  ninp = ntoken, identity encoder)
    ntoken = 16     # == ninp
    nhid = 32
    nlayers = 2
    noutputs = 8
    seq, batch = 8, 4

    key = jax.random.PRNGKey(0)
    ks = jax.random.split(key, 12)
    std = 1.0 / math.sqrt(nhid)

    def u(k, shape, lo, hi):
        return jax.random.uniform(k, shape, jnp.float32, lo, hi)

    # LSTM weights (PyTorch layout: (4*nhid, in)), pre-transposed for x @ W.
    w_ih0 = u(ks[0], (4 * nhid, ntoken), -std, std)
    w_hh0 = u(ks[1], (4 * nhid, nhid), -std, std)
    b_ih0 = u(ks[2], (4 * nhid,), -std, std)
    b_hh0 = u(ks[3], (4 * nhid,), -std, std)
    w_ih1 = u(ks[4], (4 * nhid, nhid), -std, std)
    w_hh1 = u(ks[5], (4 * nhid, nhid), -std, std)
    b_ih1 = u(ks[6], (4 * nhid,), -std, std)
    b_hh1 = u(ks[7], (4 * nhid,), -std, std)
    # decoder: init_weights() -> uniform(-0.1, 0.1) weight, zero bias.
    w_dec = u(ks[8], (noutputs, nhid), -0.1, 0.1)
    b_dec = jnp.zeros((noutputs,), jnp.float32)

    params = {
        "wih0": w_ih0.T, "whh0": w_hh0.T, "b0": (b_ih0 + b_hh0).reshape(1, -1),
        "wih1": w_ih1.T, "whh1": w_hh1.T, "b1": (b_ih1 + b_hh1).reshape(1, -1),
        "wdec": w_dec.T, "bdec": b_dec.reshape(1, -1),
    }

    # inputs
    tokens = jax.random.randint(ks[9], (seq, batch), 0, ntoken, jnp.int32)
    lengths = jnp.array([8, 6, 3, 5], jnp.int32)          # per-sequence lengths
    h0 = jnp.zeros((nlayers, batch, nhid), jnp.float32)   # init_hidden
    c0 = jnp.zeros((nlayers, batch, nhid), jnp.float32)

    dec, (hN, cN) = rnn_model_forward(tokens, lengths, h0, c0, params)
    jax.block_until_ready((dec, hN, cN))

    dec_ref, (hN_ref, cN_ref) = reference_forward(tokens, lengths, h0, c0, params)
    assert jnp.allclose(dec, dec_ref, atol=5e-5, rtol=5e-5)
    assert jnp.allclose(hN, hN_ref, atol=5e-5, rtol=5e-5)
    assert jnp.allclose(cN, cN_ref, atol=5e-5, rtol=5e-5)

    print("KERNEL_OK")
</pallas_src>

<mosaic_0001>
module attributes {stable_mosaic.version = 11 : i64} {
  func.func @lstm_rnn_kernel(%arg0: memref<64x128xf32, #tpu.memory_space<vmem>>, %arg1: memref<8x1xi32, #tpu.memory_space<vmem>>, %arg2: memref<2x8x32xf32, #tpu.memory_space<vmem>>, %arg3: memref<2x8x32xf32, #tpu.memory_space<vmem>>, %arg4: memref<32x128xf32, #tpu.memory_space<vmem>>, %arg5: memref<32x128xf32, #tpu.memory_space<vmem>>, %arg6: memref<32x128xf32, #tpu.memory_space<vmem>>, %arg7: memref<1x128xf32, #tpu.memory_space<vmem>>, %arg8: memref<32x128xf32, #tpu.memory_space<vmem>>, %arg9: memref<1x128xf32, #tpu.memory_space<vmem>>, %arg10: memref<64x128xf32, #tpu.memory_space<vmem>>, %arg11: memref<2x8x32xf32, #tpu.memory_space<vmem>>, %arg12: memref<2x8x32xf32, #tpu.memory_space<vmem>>, %arg13: memref<64x32xf32, #tpu.memory_space<vmem>>) attributes {dimension_semantics = [], scalar_prefetch = 0 : i64, scratch_operands = 1 : i64, tpu.core_type = #tpu.core_type<tc>} {
    %c0 = arith.constant 0 : index
    %c0_0 = arith.constant 0 : index
    %0 = vector.load %arg4[%c0, %c0_0] : memref<32x128xf32, #tpu.memory_space<vmem>>, vector<32x128xf32>
    %c0_1 = arith.constant 0 : index
    %c0_2 = arith.constant 0 : index
    %1 = vector.load %arg5[%c0_1, %c0_2] : memref<32x128xf32, #tpu.memory_space<vmem>>, vector<32x128xf32>
    %c0_3 = arith.constant 0 : index
    %c0_4 = arith.constant 0 : index
    %2 = vector.load %arg6[%c0_3, %c0_4] : memref<32x128xf32, #tpu.memory_space<vmem>>, vector<32x128xf32>
    %c0_5 = arith.constant 0 : index
    %c0_6 = arith.constant 0 : index
    %3 = vector.load %arg7[%c0_5, %c0_6] : memref<1x128xf32, #tpu.memory_space<vmem>>, vector<1x128xf32>
    %c0_7 = arith.constant 0 : index
    %c0_8 = arith.constant 0 : index
    %4 = vector.load %arg1[%c0_7, %c0_8] : memref<8x1xi32, #tpu.memory_space<vmem>>, vector<8x1xi32>
    %c0_9 = arith.constant 0 : index
    %c0_10 = arith.constant 0 : index
    %c0_11 = arith.constant 0 : index
    %5 = vector.load %arg2[%c0_9, %c0_10, %c0_11] : memref<2x8x32xf32, #tpu.memory_space<vmem>>, vector<1x8x32xf32>
    %6 = vector.shape_cast %5 : vector<1x8x32xf32> to vector<8x32xf32>
    %c0_12 = arith.constant 0 : index
    %c0_13 = arith.constant 0 : index
    %c0_14 = arith.constant 0 : index
    %7 = vector.load %arg3[%c0_12, %c0_13, %c0_14] : memref<2x8x32xf32, #tpu.memory_space<vmem>>, vector<1x8x32xf32>
    %8 = vector.shape_cast %7 : vector<1x8x32xf32> to vector<8x32xf32>
    %c1 = arith.constant 1 : index
    %c0_15 = arith.constant 0 : index
    %c0_16 = arith.constant 0 : index
    %9 = vector.load %arg2[%c1, %c0_15, %c0_16] : memref<2x8x32xf32, #tpu.memory_space<vmem>>, vector<1x8x32xf32>
    %10 = vector.shape_cast %9 : vector<1x8x32xf32> to vector<8x32xf32>
    %c1_17 = arith.constant 1 : index
    %c0_18 = arith.constant 0 : index
    %c0_19 = arith.constant 0 : index
    %11 = vector.load %arg3[%c1_17, %c0_18, %c0_19] : memref<2x8x32xf32, #tpu.memory_space<vmem>>, vector<1x8x32xf32>
    %12 = vector.shape_cast %11 : vector<1x8x32xf32> to vector<8x32xf32>
    %c0_i32 = arith.constant 0 : i32
    %13 = vector.broadcast %c0_i32 : i32 to vector<8x1xi32>
    %14 = arith.cmpi sgt, %4, %13 : vector<8x1xi32>
    %cst = arith.constant dense<0.000000e+00> : vector<8x128xf32>
    %15 = tpu.matmul %10, %2, %cst {dimension_numbers = #tpu.dot_dimension_numbers<[1], [0], [0], [1], [0, 0, 1, 1], [], []>} : vector<8x32xf32>, vector<32x128xf32>, vector<8x128xf32> -> vector<8x128xf32>
    %16 = vector.broadcast %3 : vector<1x128xf32> to vector<8x128xf32>
    %17 = arith.addf %15, %16 : vector<8x128xf32>
    %c0_20 = arith.constant 0 : index
    %c0_21 = arith.constant 0 : index
    %18 = vector.load %arg0[%c0_20, %c0_21] : memref<64x128xf32, #tpu.memory_space<vmem>>, vector<8x128xf32>
    %cst_22 = arith.constant dense<0.000000e+00> : vector<8x128xf32>
    %19 = tpu.matmul %6, %0, %cst_22 {dimension_numbers = #tpu.dot_dimension_numbers<[1], [0], [0], [1], [0, 0, 1, 1], [], []>} : vector<8x32xf32>, vector<32x128xf32>, vector<8x128xf32> -> vector<8x128xf32>
    %20 = arith.addf %18, %19 : vector<8x128xf32>
    %21 = vector.extract_strided_slice %20 {offsets = [0, 0], sizes = [8, 96], strides = [1, 1]} : vector<8x128xf32> to vector<8x96xf32>
    %22 = arith.negf %21 : vector<8x96xf32>
    %23 = math.exp %22 : vector<8x96xf32>
    %cst_23 = arith.constant 1.000000e+00 : f32
    %24 = vector.broadcast %cst_23 : f32 to vector<8x96xf32>
    %25 = arith.addf %24, %23 : vector<8x96xf32>
    %26 = arith.divf %24, %25 : vector<8x96xf32>
    %27 = vector.extract_strided_slice %20 {offsets = [0, 96], sizes = [8, 32], strides = [1, 1]} : vector<8x128xf32> to vector<8x32xf32>
    %28 = math.tanh %27 : vector<8x32xf32>
    %29 = vector.extract_strided_slice %26 {offsets = [0, 0], sizes = [8, 32], strides = [1, 1]} : vector<8x96xf32> to vector<8x32xf32>
    %30 = vector.extract_strided_slice %26 {offsets = [0, 32], sizes = [8, 32], strides = [1, 1]} : vector<8x96xf32> to vector<8x32xf32>
    %31 = vector.extract_strided_slice %26 {offsets = [0, 64], sizes = [8, 32], strides = [1, 1]} : vector<8x96xf32> to vector<8x32xf32>
    %32 = arith.mulf %30, %8 : vector<8x32xf32>
    %33 = arith.mulf %29, %28 : vector<8x32xf32>
    %34 = arith.addf %32, %33 : vector<8x32xf32>
    %35 = math.tanh %34 : vector<8x32xf32>
    %36 = arith.mulf %31, %35 : vector<8x32xf32>
    %37 = vector.shape_cast %14 : vector<8x1xi1> to vector<8x1xi1>
    %38 = vector.broadcast %37 : vector<8x1xi1> to vector<8x32xi1>
    %39 = arith.select %38, %36, %6 : vector<8x32xi1>, vector<8x32xf32>
    %40 = vector.shape_cast %14 : vector<8x1xi1> to vector<8x1xi1>
    %41 = vector.broadcast %40 : vector<8x1xi1> to vector<8x32xi1>
    %42 = arith.select %41, %34, %8 : vector<8x32xi1>, vector<8x32xf32>
    %cst_24 = arith.constant dense<0.000000e+00> : vector<8x128xf32>
    %43 = tpu.matmul %36, %1, %cst_24 {dimension_numbers = #tpu.dot_dimension_numbers<[1], [0], [0], [1], [0, 0, 1, 1], [], []>} : vector<8x32xf32>, vector<32x128xf32>, vector<8x128xf32> -> vector<8x128xf32>
    %44 = arith.addf %43, %17 : vector<8x128xf32>
    %45 = vector.extract_strided_slice %44 {offsets = [0, 0], sizes = [8, 96], strides = [1, 1]} : vector<8x128xf32> to vector<8x96xf32>
    %46 = arith.negf %45 : vector<8x96xf32>
    %47 = math.exp %46 : vector<8x96xf32>
    %cst_25 = arith.constant 1.000000e+00 : f32
    %48 = vector.broadcast %cst_25 : f32 to vector<8x96xf32>
    %49 = arith.addf %48, %47 : vector<8x96xf32>
    %50 = arith.divf %48, %49 : vector<8x96xf32>
    %51 = vector.extract_strided_slice %44 {offsets = [0, 96], sizes = [8, 32], strides = [1, 1]} : vector<8x128xf32> to vector<8x32xf32>
    %52 = math.tanh %51 : vector<8x32xf32>
    %53 = vector.extract_strided_slice %50 {offsets = [0, 0], sizes = [8, 32], strides = [1, 1]} : vector<8x96xf32> to vector<8x32xf32>
    %54 = vector.extract_strided_slice %50 {offsets = [0, 32], sizes = [8, 32], strides = [1, 1]} : vector<8x96xf32> to vector<8x32xf32>
    %55 = vector.extract_strided_slice %50 {offsets = [0, 64], sizes = [8, 32], strides = [1, 1]} : vector<8x96xf32> to vector<8x32xf32>
    %56 = arith.mulf %54, %12 : vector<8x32xf32>
    %57 = arith.mulf %53, %52 : vector<8x32xf32>
    %58 = arith.addf %56, %57 : vector<8x32xf32>
    %59 = math.tanh %58 : vector<8x32xf32>
    %60 = arith.mulf %55, %59 : vector<8x32xf32>
    %61 = vector.shape_cast %14 : vector<8x1xi1> to vector<8x1xi1>
    %62 = vector.broadcast %61 : vector<8x1xi1> to vector<8x32xi1>
    %63 = arith.select %62, %60, %10 : vector<8x32xi1>, vector<8x32xf32>
    %64 = vector.shape_cast %14 : vector<8x1xi1> to vector<8x1xi1>
    %65 = vector.broadcast %64 : vector<8x1xi1> to vector<8x32xi1>
    %66 = arith.select %65, %58, %12 : vector<8x32xi1>, vector<8x32xf32>
    %cst_26 = arith.constant 0.000000e+00 : f32
    %67 = vector.broadcast %cst_26 : f32 to vector<8x32xf32>
    %68 = vector.shape_cast %14 : vector<8x1xi1> to vector<8x1xi1>
    %69 = vector.broadcast %68 : vector<8x1xi1> to vector<8x32xi1>
    %70 = arith.select %69, %60, %67 : vector<8x32xi1>, vector<8x32xf32>
    %c0_27 = arith.constant 0 : index
    %c0_28 = arith.constant 0 : index
    %71 = vector.load %arg13[%c0_27, %c0_28] : memref<64x32xf32, #tpu.memory_space<vmem>>, vector<8x32xf32>
    tpu.vector_store %arg13[%c0_27, %c0_28], %70 {strides = array<i32>} : memref<64x32xf32, #tpu.memory_space<vmem>>, vector<8x32xf32>,
    %c1_i32 = arith.constant 1 : i32
    %72 = vector.broadcast %c1_i32 : i32 to vector<8x1xi32>
    %73 = arith.cmpi sgt, %4, %72 : vector<8x1xi32>
    %cst_29 = arith.constant dense<0.000000e+00> : vector<8x128xf32>
    %74 = tpu.matmul %63, %2, %cst_29 {dimension_numbers = #tpu.dot_dimension_numbers<[1], [0], [0], [1], [0, 0, 1, 1], [], []>} : vector<8x32xf32>, vector<32x128xf32>, vector<8x128xf32> -> vector<8x128xf32>
    %75 = vector.broadcast %3 : vector<1x128xf32> to vector<8x128xf32>
    %76 = arith.addf %74, %75 : vector<8x128xf32>
    %c8 = arith.constant 8 : index
    %c0_30 = arith.constant 0 : index
    %77 = vector.load %arg0[%c8, %c0_30] : memref<64x128xf32, #tpu.memory_space<vmem>>, vector<8x128xf32>
    %cst_31 = arith.constant dense<0.000000e+00> : vector<8x128xf32>
    %78 = tpu.matmul %39, %0, %cst_31 {dimension_numbers = #tpu.dot_dimension_numbers<[1], [0], [0], [1], [0, 0, 1, 1], [], []>} : vector<8x32xf32>, vector<32x128xf32>, vector<8x128xf32> -> vector<8x128xf32>
    %79 = arith.addf %77, %78 : vector<8x128xf32>
    %80 = vector.extract_strided_slice %79 {offsets = [0, 0], sizes = [8, 96], strides = [1, 1]} : vector<8x128xf32> to vector<8x96xf32>
    %81 = arith.negf %80 : vector<8x96xf32>
    %82 = math.exp %81 : vector<8x96xf32>
    %cst_32 = arith.constant 1.000000e+00 : f32
    %83 = vector.broadcast %cst_32 : f32 to vector<8x96xf32>
    %84 = arith.addf %83, %82 : vector<8x96xf32>
    %85 = arith.divf %83, %84 : vector<8x96xf32>
    %86 = vector.extract_strided_slice %79 {offsets = [0, 96], sizes = [8, 32], strides = [1, 1]} : vector<8x128xf32> to vector<8x32xf32>
    %87 = math.tanh %86 : vector<8x32xf32>
    %88 = vector.extract_strided_slice %85 {offsets = [0, 0], sizes = [8, 32], strides = [1, 1]} : vector<8x96xf32> to vector<8x32xf32>
    %89 = vector.extract_strided_slice %85 {offsets = [0, 32], sizes = [8, 32], strides = [1, 1]} : vector<8x96xf32> to vector<8x32xf32>
    %90 = vector.extract_strided_slice %85 {offsets = [0, 64], sizes = [8, 32], strides = [1, 1]} : vector<8x96xf32> to vector<8x32xf32>
    %91 = arith.mulf %89, %42 : vector<8x32xf32>
    %92 = arith.mulf %88, %87 : vector<8x32xf32>
    %93 = arith.addf %91, %92 : vector<8x32xf32>
    %94 = math.tanh %93 : vector<8x32xf32>
    %95 = arith.mulf %90, %94 : vector<8x32xf32>
    %96 = vector.shape_cast %73 : vector<8x1xi1> to vector<8x1xi1>
    %97 = vector.broadcast %96 : vector<8x1xi1> to vector<8x32xi1>
    %98 = arith.select %97, %95, %39 : vector<8x32xi1>, vector<8x32xf32>
    %99 = vector.shape_cast %73 : vector<8x1xi1> to vector<8x1xi1>
    %100 = vector.broadcast %99 : vector<8x1xi1> to vector<8x32xi1>
    %101 = arith.select %100, %93, %42 : vector<8x32xi1>, vector<8x32xf32>
    %cst_33 = arith.constant dense<0.000000e+00> : vector<8x128xf32>
    %102 = tpu.matmul %95, %1, %cst_33 {dimension_numbers = #tpu.dot_dimension_numbers<[1], [0], [0], [1], [0, 0, 1, 1], [], []>} : vector<8x32xf32>, vector<32x128xf32>, vector<8x128xf32> -> vector<8x128xf32>
    %103 = arith.addf %102, %76 : vector<8x128xf32>
    %104 = vector.extract_strided_slice %103 {offsets = [0, 0], sizes = [8, 96], strides = [1, 1]} : vector<8x128xf32> to vector<8x96xf32>
    %105 = arith.negf %104 : vector<8x96xf32>
    %106 = math.exp %105 : vector<8x96xf32>
    %cst_34 = arith.constant 1.000000e+00 : f32
    %107 = vector.broadcast %cst_34 : f32 to vector<8x96xf32>
    %108 = arith.addf %107, %106 : vector<8x96xf32>
    %109 = arith.divf %107, %108 : vector<8x96xf32>
    %110 = vector.extract_strided_slice %103 {offsets = [0, 96], sizes = [8, 32], strides = [1, 1]} : vector<8x128xf32> to vector<8x32xf32>
    %111 = math.tanh %110 : vector<8x32xf32>
    %112 = vector.extract_strided_slice %109 {offsets = [0, 0], sizes = [8, 32], strides = [1, 1]} : vector<8x96xf32> to vector<8x32xf32>
    %113 = vector.extract_strided_slice %109 {offsets = [0, 32], sizes = [8, 32], strides = [1, 1]} : vector<8x96xf32> to vector<8x32xf32>
    %114 = vector.extract_strided_slice %109 {offsets = [0, 64], sizes = [8, 32], strides = [1, 1]} : vector<8x96xf32> to vector<8x32xf32>
    %115 = arith.mulf %113, %66 : vector<8x32xf32>
    %116 = arith.mulf %112, %111 : vector<8x32xf32>
    %117 = arith.addf %115, %116 : vector<8x32xf32>
    %118 = math.tanh %117 : vector<8x32xf32>
    %119 = arith.mulf %114, %118 : vector<8x32xf32>
    %120 = vector.shape_cast %73 : vector<8x1xi1> to vector<8x1xi1>
    %121 = vector.broadcast %120 : vector<8x1xi1> to vector<8x32xi1>
    %122 = arith.select %121, %119, %63 : vector<8x32xi1>, vector<8x32xf32>
    %123 = vector.shape_cast %73 : vector<8x1xi1> to vector<8x1xi1>
    %124 = vector.broadcast %123 : vector<8x1xi1> to vector<8x32xi1>
    %125 = arith.select %124, %117, %66 : vector<8x32xi1>, vector<8x32xf32>
    %cst_35 = arith.constant 0.000000e+00 : f32
    %126 = vector.broadcast %cst_35 : f32 to vector<8x32xf32>
    %127 = vector.shape_cast %73 : vector<8x1xi1> to vector<8x1xi1>
    %128 = vector.broadcast %127 : vector<8x1xi1> to vector<8x32xi1>
    %129 = arith.select %128, %119, %126 : vector<8x32xi1>, vector<8x32xf32>
    %c8_36 = arith.constant 8 : index
    %c0_37 = arith.constant 0 : index
    %130 = vector.load %arg13[%c8_36, %c0_37] : memref<64x32xf32, #tpu.memory_space<vmem>>, vector<8x32xf32>
    tpu.vector_store %arg13[%c8_36, %c0_37], %129 {strides = array<i32>} : memref<64x32xf32, #tpu.memory_space<vmem>>, vector<8x32xf32>,
    %c2_i32 = arith.constant 2 : i32
    %131 = vector.broadcast %c2_i32 : i32 to vector<8x1xi32>
    %132 = arith.cmpi sgt, %4, %131 : vector<8x1xi32>
    %cst_38 = arith.constant dense<0.000000e+00> : vector<8x128xf32>
    %133 = tpu.matmul %122, %2, %cst_38 {dimension_numbers = #tpu.dot_dimension_numbers<[1], [0], [0], [1], [0, 0, 1, 1], [], []>} : vector<8x32xf32>, vector<32x128xf32>, vector<8x128xf32> -> vector<8x128xf32>
    %134 = vector.broadcast %3 : vector<1x128xf32> to vector<8x128xf32>
    %135 = arith.addf %133, %134 : vector<8x128xf32>
    %c16 = arith.constant 16 : index
    %c0_39 = arith.constant 0 : index
    %136 = vector.load %arg0[%c16, %c0_39] : memref<64x128xf32, #tpu.memory_space<vmem>>, vector<8x128xf32>
    %cst_40 = arith.constant dense<0.000000e+00> : vector<8x128xf32>
    %137 = tpu.matmul %98, %0, %cst_40 {dimension_numbers = #tpu.dot_dimension_numbers<[1], [0], [0], [1], [0, 0, 1, 1], [], []>} : vector<8x32xf32>, vector<32x128xf32>, vector<8x128xf32> -> vector<8x128xf32>
    %138 = arith.addf %136, %137 : vector<8x128xf32>
    %139 = vector.extract_strided_slice %138 {offsets = [0, 0], sizes = [8, 96], strides = [1, 1]} : vector<8x128xf32> to vector<8x96xf32>
    %140 = arith.negf %139 : vector<8x96xf32>
    %141 = math.exp %140 : vector<8x96xf32>
    %cst_41 = arith.constant 1.000000e+00 : f32
    %142 = vector.broadcast %cst_41 : f32 to vector<8x96xf32>
    %143 = arith.addf %142, %141 : vector<8x96xf32>
    %144 = arith.divf %142, %143 : vector<8x96xf32>
    %145 = vector.extract_strided_slice %138 {offsets = [0, 96], sizes = [8, 32], strides = [1, 1]} : vector<8x128xf32> to vector<8x32xf32>
    %146 = math.tanh %145 : vector<8x32xf32>
    %147 = vector.extract_strided_slice %144 {offsets = [0, 0], sizes = [8, 32], strides = [1, 1]} : vector<8x96xf32> to vector<8x32xf32>
    %148 = vector.extract_strided_slice %144 {offsets = [0, 32], sizes = [8, 32], strides = [1, 1]} : vector<8x96xf32> to vector<8x32xf32>
    %149 = vector.extract_strided_slice %144 {offsets = [0, 64], sizes = [8, 32], strides = [1, 1]} : vector<8x96xf32> to vector<8x32xf32>
    %150 = arith.mulf %148, %101 : vector<8x32xf32>
    %151 = arith.mulf %147, %146 : vector<8x32xf32>
    %152 = arith.addf %150, %151 : vector<8x32xf32>
    %153 = math.tanh %152 : vector<8x32xf32>
    %154 = arith.mulf %149, %153 : vector<8x32xf32>
    %155 = vector.shape_cast %132 : vector<8x1xi1> to vector<8x1xi1>
    %156 = vector.broadcast %155 : vector<8x1xi1> to vector<8x32xi1>
    %157 = arith.select %156, %154, %98 : vector<8x32xi1>, vector<8x32xf32>
    %158 = vector.shape_cast %132 : vector<8x1xi1> to vector<8x1xi1>
    %159 = vector.broadcast %158 : vector<8x1xi1> to vector<8x32xi1>
    %160 = arith.select %159, %152, %101 : vector<8x32xi1>, vector<8x32xf32>
    %cst_42 = arith.constant dense<0.000000e+00> : vector<8x128xf32>
    %161 = tpu.matmul %154, %1, %cst_42 {dimension_numbers = #tpu.dot_dimension_numbers<[1], [0], [0], [1], [0, 0, 1, 1], [], []>} : vector<8x32xf32>, vector<32x128xf32>, vector<8x128xf32> -> vector<8x128xf32>
    %162 = arith.addf %161, %135 : vector<8x128xf32>
    %163 = vector.extract_strided_slice %162 {offsets = [0, 0], sizes = [8, 96], strides = [1, 1]} : vector<8x128xf32> to vector<8x96xf32>
    %164 = arith.negf %163 : vector<8x96xf32>
    %165 = math.exp %164 : vector<8x96xf32>
    %cst_43 = arith.constant 1.000000e+00 : f32
    %166 = vector.broadcast %cst_43 : f32 to vector<8x96xf32>
    %167 = arith.addf %166, %165 : vector<8x96xf32>
    %168 = arith.divf %166, %167 : vector<8x96xf32>
    %169 = vector.extract_strided_slice %162 {offsets = [0, 96], sizes = [8, 32], strides = [1, 1]} : vector<8x128xf32> to vector<8x32xf32>
    %170 = math.tanh %169 : vector<8x32xf32>
    %171 = vector.extract_strided_slice %168 {offsets = [0, 0], sizes = [8, 32], strides = [1, 1]} : vector<8x96xf32> to vector<8x32xf32>
    %172 = vector.extract_strided_slice %168 {offsets = [0, 32], sizes = [8, 32], strides = [1, 1]} : vector<8x96xf32> to vector<8x32xf32>
    %173 = vector.extract_strided_slice %168 {offsets = [0, 64], sizes = [8, 32], strides = [1, 1]} : vector<8x96xf32> to vector<8x32xf32>
    %174 = arith.mulf %172, %125 : vector<8x32xf32>
    %175 = arith.mulf %171, %170 : vector<8x32xf32>
    %176 = arith.addf %174, %175 : vector<8x32xf32>
    %177 = math.tanh %176 : vector<8x32xf32>
    %178 = arith.mulf %173, %177 : vector<8x32xf32>
    %179 = vector.shape_cast %132 : vector<8x1xi1> to vector<8x1xi1>
    %180 = vector.broadcast %179 : vector<8x1xi1> to vector<8x32xi1>
    %181 = arith.select %180, %178, %122 : vector<8x32xi1>, vector<8x32xf32>
    %182 = vector.shape_cast %132 : vector<8x1xi1> to vector<8x1xi1>
    %183 = vector.broadcast %182 : vector<8x1xi1> to vector<8x32xi1>
    %184 = arith.select %183, %176, %125 : vector<8x32xi1>, vector<8x32xf32>
    %cst_44 = arith.constant 0.000000e+00 : f32
    %185 = vector.broadcast %cst_44 : f32 to vector<8x32xf32>
    %186 = vector.shape_cast %132 : vector<8x1xi1> to vector<8x1xi1>
    %187 = vector.broadcast %186 : vector<8x1xi1> to vector<8x32xi1>
    %188 = arith.select %187, %178, %185 : vector<8x32xi1>, vector<8x32xf32>
    %c16_45 = arith.constant 16 : index
    %c0_46 = arith.constant 0 : index
    %189 = vector.load %arg13[%c16_45, %c0_46] : memref<64x32xf32, #tpu.memory_space<vmem>>, vector<8x32xf32>
    tpu.vector_store %arg13[%c16_45, %c0_46], %188 {strides = array<i32>} : memref<64x32xf32, #tpu.memory_space<vmem>>, vector<8x32xf32>,
    %c3_i32 = arith.constant 3 : i32
    %190 = vector.broadcast %c3_i32 : i32 to vector<8x1xi32>
    %191 = arith.cmpi sgt, %4, %190 : vector<8x1xi32>
    %cst_47 = arith.constant dense<0.000000e+00> : vector<8x128xf32>
    %192 = tpu.matmul %181, %2, %cst_47 {dimension_numbers = #tpu.dot_dimension_numbers<[1], [0], [0], [1], [0, 0, 1, 1], [], []>} : vector<8x32xf32>, vector<32x128xf32>, vector<8x128xf32> -> vector<8x128xf32>
    %193 = vector.broadcast %3 : vector<1x128xf32> to vector<8x128xf32>
    %194 = arith.addf %192, %193 : vector<8x128xf32>
    %c24 = arith.constant 24 : index
    %c0_48 = arith.constant 0 : index
    %195 = vector.load %arg0[%c24, %c0_48] : memref<64x128xf32, #tpu.memory_space<vmem>>, vector<8x128xf32>
    %cst_49 = arith.constant dense<0.000000e+00> : vector<8x128xf32>
    %196 = tpu.matmul %157, %0, %cst_49 {dimension_numbers = #tpu.dot_dimension_numbers<[1], [0], [0], [1], [0, 0, 1, 1], [], []>} : vector<8x32xf32>, vector<32x128xf32>, vector<8x128xf32> -> vector<8x128xf32>
    %197 = arith.addf %195, %196 : vector<8x128xf32>
    %198 = vector.extract_strided_slice %197 {offsets = [0, 0], sizes = [8, 96], strides = [1, 1]} : vector<8x128xf32> to vector<8x96xf32>
    %199 = arith.negf %198 : vector<8x96xf32>
    %200 = math.exp %199 : vector<8x96xf32>
    %cst_50 = arith.constant 1.000000e+00 : f32
    %201 = vector.broadcast %cst_50 : f32 to vector<8x96xf32>
    %202 = arith.addf %201, %200 : vector<8x96xf32>
    %203 = arith.divf %201, %202 : vector<8x96xf32>
    %204 = vector.extract_strided_slice %197 {offsets = [0, 96], sizes = [8, 32], strides = [1, 1]} : vector<8x128xf32> to vector<8x32xf32>
    %205 = math.tanh %204 : vector<8x32xf32>
    %206 = vector.extract_strided_slice %203 {offsets = [0, 0], sizes = [8, 32], strides = [1, 1]} : vector<8x96xf32> to vector<8x32xf32>
    %207 = vector.extract_strided_slice %203 {offsets = [0, 32], sizes = [8, 32], strides = [1, 1]} : vector<8x96xf32> to vector<8x32xf32>
    %208 = vector.extract_strided_slice %203 {offsets = [0, 64], sizes = [8, 32], strides = [1, 1]} : vector<8x96xf32> to vector<8x32xf32>
    %209 = arith.mulf %207, %160 : vector<8x32xf32>
    %210 = arith.mulf %206, %205 : vector<8x32xf32>
    %211 = arith.addf %209, %210 : vector<8x32xf32>
    %212 = math.tanh %211 : vector<8x32xf32>
    %213 = arith.mulf %208, %212 : vector<8x32xf32>
    %214 = vector.shape_cast %191 : vector<8x1xi1> to vector<8x1xi1>
    %215 = vector.broadcast %214 : vector<8x1xi1> to vector<8x32xi1>
    %216 = arith.select %215, %213, %157 : vector<8x32xi1>, vector<8x32xf32>
    %217 = vector.shape_cast %191 : vector<8x1xi1> to vector<8x1xi1>
    %218 = vector.broadcast %217 : vector<8x1xi1> to vector<8x32xi1>
    %219 = arith.select %218, %211, %160 : vector<8x32xi1>, vector<8x32xf32>
    %cst_51 = arith.constant dense<0.000000e+00> : vector<8x128xf32>
    %220 = tpu.matmul %213, %1, %cst_51 {dimension_numbers = #tpu.dot_dimension_numbers<[1], [0], [0], [1], [0, 0, 1, 1], [], []>} : vector<8x32xf32>, vector<32x128xf32>, vector<8x128xf32> -> vector<8x128xf32>
    %221 = arith.addf %220, %194 : vector<8x128xf32>
    %222 = vector.extract_strided_slice %221 {offsets = [0, 0], sizes = [8, 96], strides = [1, 1]} : vector<8x128xf32> to vector<8x96xf32>
    %223 = arith.negf %222 : vector<8x96xf32>
    %224 = math.exp %223 : vector<8x96xf32>
    %cst_52 = arith.constant 1.000000e+00 : f32
    %225 = vector.broadcast %cst_52 : f32 to vector<8x96xf32>
    %226 = arith.addf %225, %224 : vector<8x96xf32>
    %227 = arith.divf %225, %226 : vector<8x96xf32>
    %228 = vector.extract_strided_slice %221 {offsets = [0, 96], sizes = [8, 32], strides = [1, 1]} : vector<8x128xf32> to vector<8x32xf32>
    %229 = math.tanh %228 : vector<8x32xf32>
    %230 = vector.extract_strided_slice %227 {offsets = [0, 0], sizes = [8, 32], strides = [1, 1]} : vector<8x96xf32> to vector<8x32xf32>
    %231 = vector.extract_strided_slice %227 {offsets = [0, 32], sizes = [8, 32], strides = [1, 1]} : vector<8x96xf32> to vector<8x32xf32>
    %232 = vector.extract_strided_slice %227 {offsets = [0, 64], sizes = [8, 32], strides = [1, 1]} : vector<8x96xf32> to vector<8x32xf32>
    %233 = arith.mulf %231, %184 : vector<8x32xf32>
    %234 = arith.mulf %230, %229 : vector<8x32xf32>
    %235 = arith.addf %233, %234 : vector<8x32xf32>
    %236 = math.tanh %235 : vector<8x32xf32>
    %237 = arith.mulf %232, %236 : vector<8x32xf32>
    %238 = vector.shape_cast %191 : vector<8x1xi1> to vector<8x1xi1>
    %239 = vector.broadcast %238 : vector<8x1xi1> to vector<8x32xi1>
    %240 = arith.select %239, %237, %181 : vector<8x32xi1>, vector<8x32xf32>
    %241 = vector.shape_cast %191 : vector<8x1xi1> to vector<8x1xi1>
    %242 = vector.broadcast %241 : vector<8x1xi1> to vector<8x32xi1>
    %243 = arith.select %242, %235, %184 : vector<8x32xi1>, vector<8x32xf32>
    %cst_53 = arith.constant 0.000000e+00 : f32
    %244 = vector.broadcast %cst_53 : f32 to vector<8x32xf32>
    %245 = vector.shape_cast %191 : vector<8x1xi1> to vector<8x1xi1>
    %246 = vector.broadcast %245 : vector<8x1xi1> to vector<8x32xi1>
    %247 = arith.select %246, %237, %244 : vector<8x32xi1>, vector<8x32xf32>
    %c24_54 = arith.constant 24 : index
    %c0_55 = arith.constant 0 : index
    %248 = vector.load %arg13[%c24_54, %c0_55] : memref<64x32xf32, #tpu.memory_space<vmem>>, vector<8x32xf32>
    tpu.vector_store %arg13[%c24_54, %c0_55], %247 {strides = array<i32>} : memref<64x32xf32, #tpu.memory_space<vmem>>, vector<8x32xf32>,
    %c4_i32 = arith.constant 4 : i32
    %249 = vector.broadcast %c4_i32 : i32 to vector<8x1xi32>
    %250 = arith.cmpi sgt, %4, %249 : vector<8x1xi32>
    %cst_56 = arith.constant dense<0.000000e+00> : vector<8x128xf32>
    %251 = tpu.matmul %240, %2, %cst_56 {dimension_numbers = #tpu.dot_dimension_numbers<[1], [0], [0], [1], [0, 0, 1, 1], [], []>} : vector<8x32xf32>, vector<32x128xf32>, vector<8x128xf32> -> vector<8x128xf32>
    %252 = vector.broadcast %3 : vector<1x128xf32> to vector<8x128xf32>
    %253 = arith.addf %251, %252 : vector<8x128xf32>
    %c32 = arith.constant 32 : index
    %c0_57 = arith.constant 0 : index
    %254 = vector.load %arg0[%c32, %c0_57] : memref<64x128xf32, #tpu.memory_space<vmem>>, vector<8x128xf32>
    %cst_58 = arith.constant dense<0.000000e+00> : vector<8x128xf32>
    %255 = tpu.matmul %216, %0, %cst_58 {dimension_numbers = #tpu.dot_dimension_numbers<[1], [0], [0], [1], [0, 0, 1, 1], [], []>} : vector<8x32xf32>, vector<32x128xf32>, vector<8x128xf32> -> vector<8x128xf32>
    %256 = arith.addf %254, %255 : vector<8x128xf32>
    %257 = vector.extract_strided_slice %256 {offsets = [0, 0], sizes = [8, 96], strides = [1, 1]} : vector<8x128xf32> to vector<8x96xf32>
    %258 = arith.negf %257 : vector<8x96xf32>
    %259 = math.exp %258 : vector<8x96xf32>
    %cst_59 = arith.constant 1.000000e+00 : f32
    %260 = vector.broadcast %cst_59 : f32 to vector<8x96xf32>
    %261 = arith.addf %260, %259 : vector<8x96xf32>
    %262 = arith.divf %260, %261 : vector<8x96xf32>
    %263 = vector.extract_strided_slice %256 {offsets = [0, 96], sizes = [8, 32], strides = [1, 1]} : vector<8x128xf32> to vector<8x32xf32>
    %264 = math.tanh %263 : vector<8x32xf32>
    %265 = vector.extract_strided_slice %262 {offsets = [0, 0], sizes = [8, 32], strides = [1, 1]} : vector<8x96xf32> to vector<8x32xf32>
    %266 = vector.extract_strided_slice %262 {offsets = [0, 32], sizes = [8, 32], strides = [1, 1]} : vector<8x96xf32> to vector<8x32xf32>
    %267 = vector.extract_strided_slice %262 {offsets = [0, 64], sizes = [8, 32], strides = [1, 1]} : vector<8x96xf32> to vector<8x32xf32>
    %268 = arith.mulf %266, %219 : vector<8x32xf32>
    %269 = arith.mulf %265, %264 : vector<8x32xf32>
    %270 = arith.addf %268, %269 : vector<8x32xf32>
    %271 = math.tanh %270 : vector<8x32xf32>
    %272 = arith.mulf %267, %271 : vector<8x32xf32>
    %273 = vector.shape_cast %250 : vector<8x1xi1> to vector<8x1xi1>
    %274 = vector.broadcast %273 : vector<8x1xi1> to vector<8x32xi1>
    %275 = arith.select %274, %272, %216 : vector<8x32xi1>, vector<8x32xf32>
    %276 = vector.shape_cast %250 : vector<8x1xi1> to vector<8x1xi1>
    %277 = vector.broadcast %276 : vector<8x1xi1> to vector<8x32xi1>
    %278 = arith.select %277, %270, %219 : vector<8x32xi1>, vector<8x32xf32>
    %cst_60 = arith.constant dense<0.000000e+00> : vector<8x128xf32>
    %279 = tpu.matmul %272, %1, %cst_60 {dimension_numbers = #tpu.dot_dimension_numbers<[1], [0], [0], [1], [0, 0, 1, 1], [], []>} : vector<8x32xf32>, vector<32x128xf32>, vector<8x128xf32> -> vector<8x128xf32>
    %280 = arith.addf %279, %253 : vector<8x128xf32>
    %281 = vector.extract_strided_slice %280 {offsets = [0, 0], sizes = [8, 96], strides = [1, 1]} : vector<8x128xf32> to vector<8x96xf32>
    %282 = arith.negf %281 : vector<8x96xf32>
    %283 = math.exp %282 : vector<8x96xf32>
    %cst_61 = arith.constant 1.000000e+00 : f32
    %284 = vector.broadcast %cst_61 : f32 to vector<8x96xf32>
    %285 = arith.addf %284, %283 : vector<8x96xf32>
    %286 = arith.divf %284, %285 : vector<8x96xf32>
    %287 = vector.extract_strided_slice %280 {offsets = [0, 96], sizes = [8, 32], strides = [1, 1]} : vector<8x128xf32> to vector<8x32xf32>
    %288 = math.tanh %287 : vector<8x32xf32>
    %289 = vector.extract_strided_slice %286 {offsets = [0, 0], sizes = [8, 32], strides = [1, 1]} : vector<8x96xf32> to vector<8x32xf32>
    %290 = vector.extract_strided_slice %286 {offsets = [0, 32], sizes = [8, 32], strides = [1, 1]} : vector<8x96xf32> to vector<8x32xf32>
    %291 = vector.extract_strided_slice %286 {offsets = [0, 64], sizes = [8, 32], strides = [1, 1]} : vector<8x96xf32> to vector<8x32xf32>
    %292 = arith.mulf %290, %243 : vector<8x32xf32>
    %293 = arith.mulf %289, %288 : vector<8x32xf32>
    %294 = arith.addf %292, %293 : vector<8x32xf32>
    %295 = math.tanh %294 : vector<8x32xf32>
    %296 = arith.mulf %291, %295 : vector<8x32xf32>
    %297 = vector.shape_cast %250 : vector<8x1xi1> to vector<8x1xi1>
    %298 = vector.broadcast %297 : vector<8x1xi1> to vector<8x32xi1>
    %299 = arith.select %298, %296, %240 : vector<8x32xi1>, vector<8x32xf32>
    %300 = vector.shape_cast %250 : vector<8x1xi1> to vector<8x1xi1>
    %301 = vector.broadcast %300 : vector<8x1xi1> to vector<8x32xi1>
    %302 = arith.select %301, %294, %243 : vector<8x32xi1>, vector<8x32xf32>
    %cst_62 = arith.constant 0.000000e+00 : f32
    %303 = vector.broadcast %cst_62 : f32 to vector<8x32xf32>
    %304 = vector.shape_cast %250 : vector<8x1xi1> to vector<8x1xi1>
    %305 = vector.broadcast %304 : vector<8x1xi1> to vector<8x32xi1>
    %306 = arith.select %305, %296, %303 : vector<8x32xi1>, vector<8x32xf32>
    %c32_63 = arith.constant 32 : index
    %c0_64 = arith.constant 0 : index
    %307 = vector.load %arg13[%c32_63, %c0_64] : memref<64x32xf32, #tpu.memory_space<vmem>>, vector<8x32xf32>
    tpu.vector_store %arg13[%c32_63, %c0_64], %306 {strides = array<i32>} : memref<64x32xf32, #tpu.memory_space<vmem>>, vector<8x32xf32>,
    %c5_i32 = arith.constant 5 : i32
    %308 = vector.broadcast %c5_i32 : i32 to vector<8x1xi32>
    %309 = arith.cmpi sgt, %4, %308 : vector<8x1xi32>
    %cst_65 = arith.constant dense<0.000000e+00> : vector<8x128xf32>
    %310 = tpu.matmul %299, %2, %cst_65 {dimension_numbers = #tpu.dot_dimension_numbers<[1], [0], [0], [1], [0, 0, 1, 1], [], []>} : vector<8x32xf32>, vector<32x128xf32>, vector<8x128xf32> -> vector<8x128xf32>
    %311 = vector.broadcast %3 : vector<1x128xf32> to vector<8x128xf32>
    %312 = arith.addf %310, %311 : vector<8x128xf32>
    %c40 = arith.constant 40 : index
    %c0_66 = arith.constant 0 : index
    %313 = vector.load %arg0[%c40, %c0_66] : memref<64x128xf32, #tpu.memory_space<vmem>>, vector<8x128xf32>
    %cst_67 = arith.constant dense<0.000000e+00> : vector<8x128xf32>
    %314 = tpu.matmul %275, %0, %cst_67 {dimension_numbers = #tpu.dot_dimension_numbers<[1], [0], [0], [1], [0, 0, 1, 1], [], []>} : vector<8x32xf32>, vector<32x128xf32>, vector<8x128xf32> -> vector<8x128xf32>
    %315 = arith.addf %313, %314 : vector<8x128xf32>
    %316 = vector.extract_strided_slice %315 {offsets = [0, 0], sizes = [8, 96], strides = [1, 1]} : vector<8x128xf32> to vector<8x96xf32>
    %317 = arith.negf %316 : vector<8x96xf32>
    %318 = math.exp %317 : vector<8x96xf32>
    %cst_68 = arith.constant 1.000000e+00 : f32
    %319 = vector.broadcast %cst_68 : f32 to vector<8x96xf32>
    %320 = arith.addf %319, %318 : vector<8x96xf32>
    %321 = arith.divf %319, %320 : vector<8x96xf32>
    %322 = vector.extract_strided_slice %315 {offsets = [0, 96], sizes = [8, 32], strides = [1, 1]} : vector<8x128xf32> to vector<8x32xf32>
    %323 = math.tanh %322 : vector<8x32xf32>
    %324 = vector.extract_strided_slice %321 {offsets = [0, 0], sizes = [8, 32], strides = [1, 1]} : vector<8x96xf32> to vector<8x32xf32>
    %325 = vector.extract_strided_slice %321 {offsets = [0, 32], sizes = [8, 32], strides = [1, 1]} : vector<8x96xf32> to vector<8x32xf32>
    %326 = vector.extract_strided_slice %321 {offsets = [0, 64], sizes = [8, 32], strides = [1, 1]} : vector<8x96xf32> to vector<8x32xf32>
    %327 = arith.mulf %325, %278 : vector<8x32xf32>
    %328 = arith.mulf %324, %323 : vector<8x32xf32>
    %329 = arith.addf %327, %328 : vector<8x32xf32>
    %330 = math.tanh %329 : vector<8x32xf32>
    %331 = arith.mulf %326, %330 : vector<8x32xf32>
    %332 = vector.shape_cast %309 : vector<8x1xi1> to vector<8x1xi1>
    %333 = vector.broadcast %332 : vector<8x1xi1> to vector<8x32xi1>
    %334 = arith.select %333, %331, %275 : vector<8x32xi1>, vector<8x32xf32>
    %335 = vector.shape_cast %309 : vector<8x1xi1> to vector<8x1xi1>
    %336 = vector.broadcast %335 : vector<8x1xi1> to vector<8x32xi1>
    %337 = arith.select %336, %329, %278 : vector<8x32xi1>, vector<8x32xf32>
    %cst_69 = arith.constant dense<0.000000e+00> : vector<8x128xf32>
    %338 = tpu.matmul %331, %1, %cst_69 {dimension_numbers = #tpu.dot_dimension_numbers<[1], [0], [0], [1], [0, 0, 1, 1], [], []>} : vector<8x32xf32>, vector<32x128xf32>, vector<8x128xf32> -> vector<8x128xf32>
    %339 = arith.addf %338, %312 : vector<8x128xf32>
    %340 = vector.extract_strided_slice %339 {offsets = [0, 0], sizes = [8, 96], strides = [1, 1]} : vector<8x128xf32> to vector<8x96xf32>
    %341 = arith.negf %340 : vector<8x96xf32>
    %342 = math.exp %341 : vector<8x96xf32>
    %cst_70 = arith.constant 1.000000e+00 : f32
    %343 = vector.broadcast %cst_70 : f32 to vector<8x96xf32>
    %344 = arith.addf %343, %342 : vector<8x96xf32>
    %345 = arith.divf %343, %344 : vector<8x96xf32>
    %346 = vector.extract_strided_slice %339 {offsets = [0, 96], sizes = [8, 32], strides = [1, 1]} : vector<8x128xf32> to vector<8x32xf32>
    %347 = math.tanh %346 : vector<8x32xf32>
    %348 = vector.extract_strided_slice %345 {offsets = [0, 0], sizes = [8, 32], strides = [1, 1]} : vector<8x96xf32> to vector<8x32xf32>
    %349 = vector.extract_strided_slice %345 {offsets = [0, 32], sizes = [8, 32], strides = [1, 1]} : vector<8x96xf32> to vector<8x32xf32>
    %350 = vector.extract_strided_slice %345 {offsets = [0, 64], sizes = [8, 32], strides = [1, 1]} : vector<8x96xf32> to vector<8x32xf32>
    %351 = arith.mulf %349, %302 : vector<8x32xf32>
    %352 = arith.mulf %348, %347 : vector<8x32xf32>
    %353 = arith.addf %351, %352 : vector<8x32xf32>
    %354 = math.tanh %353 : vector<8x32xf32>
    %355 = arith.mulf %350, %354 : vector<8x32xf32>
    %356 = vector.shape_cast %309 : vector<8x1xi1> to vector<8x1xi1>
    %357 = vector.broadcast %356 : vector<8x1xi1> to vector<8x32xi1>
    %358 = arith.select %357, %355, %299 : vector<8x32xi1>, vector<8x32xf32>
    %359 = vector.shape_cast %309 : vector<8x1xi1> to vector<8x1xi1>
    %360 = vector.broadcast %359 : vector<8x1xi1> to vector<8x32xi1>
    %361 = arith.select %360, %353, %302 : vector<8x32xi1>, vector<8x32xf32>
    %cst_71 = arith.constant 0.000000e+00 : f32
    %362 = vector.broadcast %cst_71 : f32 to vector<8x32xf32>
    %363 = vector.shape_cast %309 : vector<8x1xi1> to vector<8x1xi1>
    %364 = vector.broadcast %363 : vector<8x1xi1> to vector<8x32xi1>
    %365 = arith.select %364, %355, %362 : vector<8x32xi1>, vector<8x32xf32>
    %c40_72 = arith.constant 40 : index
    %c0_73 = arith.constant 0 : index
    %366 = vector.load %arg13[%c40_72, %c0_73] : memref<64x32xf32, #tpu.memory_space<vmem>>, vector<8x32xf32>
    tpu.vector_store %arg13[%c40_72, %c0_73], %365 {strides = array<i32>} : memref<64x32xf32, #tpu.memory_space<vmem>>, vector<8x32xf32>,
    %c6_i32 = arith.constant 6 : i32
    %367 = vector.broadcast %c6_i32 : i32 to vector<8x1xi32>
    %368 = arith.cmpi sgt, %4, %367 : vector<8x1xi32>
    %cst_74 = arith.constant dense<0.000000e+00> : vector<8x128xf32>
    %369 = tpu.matmul %358, %2, %cst_74 {dimension_numbers = #tpu.dot_dimension_numbers<[1], [0], [0], [1], [0, 0, 1, 1], [], []>} : vector<8x32xf32>, vector<32x128xf32>, vector<8x128xf32> -> vector<8x128xf32>
    %370 = vector.broadcast %3 : vector<1x128xf32> to vector<8x128xf32>
    %371 = arith.addf %369, %370 : vector<8x128xf32>
    %c48 = arith.constant 48 : index
    %c0_75 = arith.constant 0 : index
    %372 = vector.load %arg0[%c48, %c0_75] : memref<64x128xf32, #tpu.memory_space<vmem>>, vector<8x128xf32>
    %cst_76 = arith.constant dense<0.000000e+00> : vector<8x128xf32>
    %373 = tpu.matmul %334, %0, %cst_76 {dimension_numbers = #tpu.dot_dimension_numbers<[1], [0], [0], [1], [0, 0, 1, 1], [], []>} : vector<8x32xf32>, vector<32x128xf32>, vector<8x128xf32> -> vector<8x128xf32>
    %374 = arith.addf %372, %373 : vector<8x128xf32>
    %375 = vector.extract_strided_slice %374 {offsets = [0, 0], sizes = [8, 96], strides = [1, 1]} : vector<8x128xf32> to vector<8x96xf32>
    %376 = arith.negf %375 : vector<8x96xf32>
    %377 = math.exp %376 : vector<8x96xf32>
    %cst_77 = arith.constant 1.000000e+00 : f32
    %378 = vector.broadcast %cst_77 : f32 to vector<8x96xf32>
    %379 = arith.addf %378, %377 : vector<8x96xf32>
    %380 = arith.divf %378, %379 : vector<8x96xf32>
    %381 = vector.extract_strided_slice %374 {offsets = [0, 96], sizes = [8, 32], strides = [1, 1]} : vector<8x128xf32> to vector<8x32xf32>
    %382 = math.tanh %381 : vector<8x32xf32>
    %383 = vector.extract_strided_slice %380 {offsets = [0, 0], sizes = [8, 32], strides = [1, 1]} : vector<8x96xf32> to vector<8x32xf32>
    %384 = vector.extract_strided_slice %380 {offsets = [0, 32], sizes = [8, 32], strides = [1, 1]} : vector<8x96xf32> to vector<8x32xf32>
    %385 = vector.extract_strided_slice %380 {offsets = [0, 64], sizes = [8, 32], strides = [1, 1]} : vector<8x96xf32> to vector<8x32xf32>
    %386 = arith.mulf %384, %337 : vector<8x32xf32>
    %387 = arith.mulf %383, %382 : vector<8x32xf32>
    %388 = arith.addf %386, %387 : vector<8x32xf32>
    %389 = math.tanh %388 : vector<8x32xf32>
    %390 = arith.mulf %385, %389 : vector<8x32xf32>
    %391 = vector.shape_cast %368 : vector<8x1xi1> to vector<8x1xi1>
    %392 = vector.broadcast %391 : vector<8x1xi1> to vector<8x32xi1>
    %393 = arith.select %392, %390, %334 : vector<8x32xi1>, vector<8x32xf32>
    %394 = vector.shape_cast %368 : vector<8x1xi1> to vector<8x1xi1>
    %395 = vector.broadcast %394 : vector<8x1xi1> to vector<8x32xi1>
    %396 = arith.select %395, %388, %337 : vector<8x32xi1>, vector<8x32xf32>
    %cst_78 = arith.constant dense<0.000000e+00> : vector<8x128xf32>
    %397 = tpu.matmul %390, %1, %cst_78 {dimension_numbers = #tpu.dot_dimension_numbers<[1], [0], [0], [1], [0, 0, 1, 1], [], []>} : vector<8x32xf32>, vector<32x128xf32>, vector<8x128xf32> -> vector<8x128xf32>
    %398 = arith.addf %397, %371 : vector<8x128xf32>
    %399 = vector.extract_strided_slice %398 {offsets = [0, 0], sizes = [8, 96], strides = [1, 1]} : vector<8x128xf32> to vector<8x96xf32>
    %400 = arith.negf %399 : vector<8x96xf32>
    %401 = math.exp %400 : vector<8x96xf32>
    %cst_79 = arith.constant 1.000000e+00 : f32
    %402 = vector.broadcast %cst_79 : f32 to vector<8x96xf32>
    %403 = arith.addf %402, %401 : vector<8x96xf32>
    %404 = arith.divf %402, %403 : vector<8x96xf32>
    %405 = vector.extract_strided_slice %398 {offsets = [0, 96], sizes = [8, 32], strides = [1, 1]} : vector<8x128xf32> to vector<8x32xf32>
    %406 = math.tanh %405 : vector<8x32xf32>
    %407 = vector.extract_strided_slice %404 {offsets = [0, 0], sizes = [8, 32], strides = [1, 1]} : vector<8x96xf32> to vector<8x32xf32>
    %408 = vector.extract_strided_slice %404 {offsets = [0, 32], sizes = [8, 32], strides = [1, 1]} : vector<8x96xf32> to vector<8x32xf32>
    %409 = vector.extract_strided_slice %404 {offsets = [0, 64], sizes = [8, 32], strides = [1, 1]} : vector<8x96xf32> to vector<8x32xf32>
    %410 = arith.mulf %408, %361 : vector<8x32xf32>
    %411 = arith.mulf %407, %406 : vector<8x32xf32>
    %412 = arith.addf %410, %411 : vector<8x32xf32>
    %413 = math.tanh %412 : vector<8x32xf32>
    %414 = arith.mulf %409, %413 : vector<8x32xf32>
    %415 = vector.shape_cast %368 : vector<8x1xi1> to vector<8x1xi1>
    %416 = vector.broadcast %415 : vector<8x1xi1> to vector<8x32xi1>
    %417 = arith.select %416, %414, %358 : vector<8x32xi1>, vector<8x32xf32>
    %418 = vector.shape_cast %368 : vector<8x1xi1> to vector<8x1xi1>
    %419 = vector.broadcast %418 : vector<8x1xi1> to vector<8x32xi1>
    %420 = arith.select %419, %412, %361 : vector<8x32xi1>, vector<8x32xf32>
    %cst_80 = arith.constant 0.000000e+00 : f32
    %421 = vector.broadcast %cst_80 : f32 to vector<8x32xf32>
    %422 = vector.shape_cast %368 : vector<8x1xi1> to vector<8x1xi1>
    %423 = vector.broadcast %422 : vector<8x1xi1> to vector<8x32xi1>
    %424 = arith.select %423, %414, %421 : vector<8x32xi1>, vector<8x32xf32>
    %c48_81 = arith.constant 48 : index
    %c0_82 = arith.constant 0 : index
    %425 = vector.load %arg13[%c48_81, %c0_82] : memref<64x32xf32, #tpu.memory_space<vmem>>, vector<8x32xf32>
    tpu.vector_store %arg13[%c48_81, %c0_82], %424 {strides = array<i32>} : memref<64x32xf32, #tpu.memory_space<vmem>>, vector<8x32xf32>,
    %c7_i32 = arith.constant 7 : i32
    %426 = vector.broadcast %c7_i32 : i32 to vector<8x1xi32>
    %427 = arith.cmpi sgt, %4, %426 : vector<8x1xi32>
    %cst_83 = arith.constant dense<0.000000e+00> : vector<8x128xf32>
    %428 = tpu.matmul %417, %2, %cst_83 {dimension_numbers = #tpu.dot_dimension_numbers<[1], [0], [0], [1], [0, 0, 1, 1], [], []>} : vector<8x32xf32>, vector<32x128xf32>, vector<8x128xf32> -> vector<8x128xf32>
    %429 = vector.broadcast %3 : vector<1x128xf32> to vector<8x128xf32>
    %430 = arith.addf %428, %429 : vector<8x128xf32>
    %c56 = arith.constant 56 : index
    %c0_84 = arith.constant 0 : index
    %431 = vector.load %arg0[%c56, %c0_84] : memref<64x128xf32, #tpu.memory_space<vmem>>, vector<8x128xf32>
    %cst_85 = arith.constant dense<0.000000e+00> : vector<8x128xf32>
    %432 = tpu.matmul %393, %0, %cst_85 {dimension_numbers = #tpu.dot_dimension_numbers<[1], [0], [0], [1], [0, 0, 1, 1], [], []>} : vector<8x32xf32>, vector<32x128xf32>, vector<8x128xf32> -> vector<8x128xf32>
    %433 = arith.addf %431, %432 : vector<8x128xf32>
    %434 = vector.extract_strided_slice %433 {offsets = [0, 0], sizes = [8, 96], strides = [1, 1]} : vector<8x128xf32> to vector<8x96xf32>
    %435 = arith.negf %434 : vector<8x96xf32>
    %436 = math.exp %435 : vector<8x96xf32>
    %cst_86 = arith.constant 1.000000e+00 : f32
    %437 = vector.broadcast %cst_86 : f32 to vector<8x96xf32>
    %438 = arith.addf %437, %436 : vector<8x96xf32>
    %439 = arith.divf %437, %438 : vector<8x96xf32>
    %440 = vector.extract_strided_slice %433 {offsets = [0, 96], sizes = [8, 32], strides = [1, 1]} : vector<8x128xf32> to vector<8x32xf32>
    %441 = math.tanh %440 : vector<8x32xf32>
    %442 = vector.extract_strided_slice %439 {offsets = [0, 0], sizes = [8, 32], strides = [1, 1]} : vector<8x96xf32> to vector<8x32xf32>
    %443 = vector.extract_strided_slice %439 {offsets = [0, 32], sizes = [8, 32], strides = [1, 1]} : vector<8x96xf32> to vector<8x32xf32>
    %444 = vector.extract_strided_slice %439 {offsets = [0, 64], sizes = [8, 32], strides = [1, 1]} : vector<8x96xf32> to vector<8x32xf32>
    %445 = arith.mulf %443, %396 : vector<8x32xf32>
    %446 = arith.mulf %442, %441 : vector<8x32xf32>
    %447 = arith.addf %445, %446 : vector<8x32xf32>
    %448 = math.tanh %447 : vector<8x32xf32>
    %449 = arith.mulf %444, %448 : vector<8x32xf32>
    %450 = vector.shape_cast %427 : vector<8x1xi1> to vector<8x1xi1>
    %451 = vector.broadcast %450 : vector<8x1xi1> to vector<8x32xi1>
    %452 = arith.select %451, %449, %393 : vector<8x32xi1>, vector<8x32xf32>
    %453 = vector.shape_cast %427 : vector<8x1xi1> to vector<8x1xi1>
    %454 = vector.broadcast %453 : vector<8x1xi1> to vector<8x32xi1>
    %455 = arith.select %454, %447, %396 : vector<8x32xi1>, vector<8x32xf32>
    %cst_87 = arith.constant dense<0.000000e+00> : vector<8x128xf32>
    %456 = tpu.matmul %449, %1, %cst_87 {dimension_numbers = #tpu.dot_dimension_numbers<[1], [0], [0], [1], [0, 0, 1, 1], [], []>} : vector<8x32xf32>, vector<32x128xf32>, vector<8x128xf32> -> vector<8x128xf32>
    %457 = arith.addf %456, %430 : vector<8x128xf32>
    %458 = vector.extract_strided_slice %457 {offsets = [0, 0], sizes = [8, 96], strides = [1, 1]} : vector<8x128xf32> to vector<8x96xf32>
    %459 = arith.negf %458 : vector<8x96xf32>
    %460 = math.exp %459 : vector<8x96xf32>
    %cst_88 = arith.constant 1.000000e+00 : f32
    %461 = vector.broadcast %cst_88 : f32 to vector<8x96xf32>
    %462 = arith.addf %461, %460 : vector<8x96xf32>
    %463 = arith.divf %461, %462 : vector<8x96xf32>
    %464 = vector.extract_strided_slice %457 {offsets = [0, 96], sizes = [8, 32], strides = [1, 1]} : vector<8x128xf32> to vector<8x32xf32>
    %465 = math.tanh %464 : vector<8x32xf32>
    %466 = vector.extract_strided_slice %463 {offsets = [0, 0], sizes = [8, 32], strides = [1, 1]} : vector<8x96xf32> to vector<8x32xf32>
    %467 = vector.extract_strided_slice %463 {offsets = [0, 32], sizes = [8, 32], strides = [1, 1]} : vector<8x96xf32> to vector<8x32xf32>
    %468 = vector.extract_strided_slice %463 {offsets = [0, 64], sizes = [8, 32], strides = [1, 1]} : vector<8x96xf32> to vector<8x32xf32>
    %469 = arith.mulf %467, %420 : vector<8x32xf32>
    %470 = arith.mulf %466, %465 : vector<8x32xf32>
    %471 = arith.addf %469, %470 : vector<8x32xf32>
    %472 = math.tanh %471 : vector<8x32xf32>
    %473 = arith.mulf %468, %472 : vector<8x32xf32>
    %474 = vector.shape_cast %427 : vector<8x1xi1> to vector<8x1xi1>
    %475 = vector.broadcast %474 : vector<8x1xi1> to vector<8x32xi1>
    %476 = arith.select %475, %473, %417 : vector<8x32xi1>, vector<8x32xf32>
    %477 = vector.shape_cast %427 : vector<8x1xi1> to vector<8x1xi1>
    %478 = vector.broadcast %477 : vector<8x1xi1> to vector<8x32xi1>
    %479 = arith.select %478, %471, %420 : vector<8x32xi1>, vector<8x32xf32>
    %cst_89 = arith.constant 0.000000e+00 : f32
    %480 = vector.broadcast %cst_89 : f32 to vector<8x32xf32>
    %481 = vector.shape_cast %427 : vector<8x1xi1> to vector<8x1xi1>
    %482 = vector.broadcast %481 : vector<8x1xi1> to vector<8x32xi1>
    %483 = arith.select %482, %473, %480 : vector<8x32xi1>, vector<8x32xf32>
    %c56_90 = arith.constant 56 : index
    %c0_91 = arith.constant 0 : index
    %484 = vector.load %arg13[%c56_90, %c0_91] : memref<64x32xf32, #tpu.memory_space<vmem>>, vector<8x32xf32>
    tpu.vector_store %arg13[%c56_90, %c0_91], %483 {strides = array<i32>} : memref<64x32xf32, #tpu.memory_space<vmem>>, vector<8x32xf32>,
    %c0_92 = arith.constant 0 : index
    %c0_93 = arith.constant 0 : index
    %485 = vector.load %arg13[%c0_92, %c0_93] : memref<64x32xf32, #tpu.memory_space<vmem>>, vector<64x32xf32>
    %c0_94 = arith.constant 0 : index
    %c0_95 = arith.constant 0 : index
    %486 = vector.load %arg8[%c0_94, %c0_95] : memref<32x128xf32, #tpu.memory_space<vmem>>, vector<32x128xf32>
    %cst_96 = arith.constant dense<0.000000e+00> : vector<64x128xf32>
    %487 = tpu.matmul %485, %486, %cst_96 {dimension_numbers = #tpu.dot_dimension_numbers<[1], [0], [0], [1], [0, 0, 1, 1], [], []>} : vector<64x32xf32>, vector<32x128xf32>, vector<64x128xf32> -> vector<64x128xf32>
    %c0_97 = arith.constant 0 : index
    %c0_98 = arith.constant 0 : index
    %488 = vector.load %arg9[%c0_97, %c0_98] : memref<1x128xf32, #tpu.memory_space<vmem>>, vector<1x128xf32>
    %489 = vector.broadcast %488 : vector<1x128xf32> to vector<64x128xf32>
    %490 = arith.addf %487, %489 : vector<64x128xf32>
    %491 = arith.negf %490 : vector<64x128xf32>
    %492 = math.exp %491 : vector<64x128xf32>
    %cst_99 = arith.constant 1.000000e+00 : f32
    %493 = vector.broadcast %cst_99 : f32 to vector<64x128xf32>
    %494 = arith.addf %493, %492 : vector<64x128xf32>
    %495 = arith.divf %493, %494 : vector<64x128xf32>
    %c0_100 = arith.constant 0 : index
    %c0_101 = arith.constant 0 : index
    %496 = vector.load %arg10[%c0_100, %c0_101] : memref<64x128xf32, #tpu.memory_space<vmem>>, vector<64x128xf32>
    tpu.vector_store %arg10[%c0_100, %c0_101], %495 {strides = array<i32>} : memref<64x128xf32, #tpu.memory_space<vmem>>, vector<64x128xf32>,
    %c0_102 = arith.constant 0 : index
    %c0_103 = arith.constant 0 : index
    %c0_104 = arith.constant 0 : index
    %497 = vector.load %arg11[%c0_102, %c0_103, %c0_104] : memref<2x8x32xf32, #tpu.memory_space<vmem>>, vector<1x8x32xf32>
    %498 = vector.shape_cast %497 : vector<1x8x32xf32> to vector<8x32xf32>
    %499 = vector.shape_cast %452 : vector<8x32xf32> to vector<1x8x32xf32>
    tpu.vector_store %arg11[%c0_102, %c0_103, %c0_104], %499 {strides = array<i32>} : memref<2x8x32xf32, #tpu.memory_space<vmem>>, vector<1x8x32xf32>,
    %c1_105 = arith.constant 1 : index
    %c0_106 = arith.constant 0 : index
    %c0_107 = arith.constant 0 : index
    %500 = vector.load %arg11[%c1_105, %c0_106, %c0_107] : memref<2x8x32xf32, #tpu.memory_space<vmem>>, vector<1x8x32xf32>
    %501 = vector.shape_cast %500 : vector<1x8x32xf32> to vector<8x32xf32>
    %502 = vector.shape_cast %476 : vector<8x32xf32> to vector<1x8x32xf32>
    tpu.vector_store %arg11[%c1_105, %c0_106, %c0_107], %502 {strides = array<i32>} : memref<2x8x32xf32, #tpu.memory_space<vmem>>, vector<1x8x32xf32>,
    %c0_108 = arith.constant 0 : index
    %c0_109 = arith.constant 0 : index
    %c0_110 = arith.constant 0 : index
    %503 = vector.load %arg12[%c0_108, %c0_109, %c0_110] : memref<2x8x32xf32, #tpu.memory_space<vmem>>, vector<1x8x32xf32>
    %504 = vector.shape_cast %503 : vector<1x8x32xf32> to vector<8x32xf32>
    %505 = vector.shape_cast %455 : vector<8x32xf32> to vector<1x8x32xf32>
    tpu.vector_store %arg12[%c0_108, %c0_109, %c0_110], %505 {strides = array<i32>} : memref<2x8x32xf32, #tpu.memory_space<vmem>>, vector<1x8x32xf32>,
    %c1_111 = arith.constant 1 : index
    %c0_112 = arith.constant 0 : index
    %c0_113 = arith.constant 0 : index
    %506 = vector.load %arg12[%c1_111, %c0_112, %c0_113] : memref<2x8x32xf32, #tpu.memory_space<vmem>>, vector<1x8x32xf32>
    %507 = vector.shape_cast %506 : vector<1x8x32xf32> to vector<8x32xf32>
    %508 = vector.shape_cast %479 : vector<8x32xf32> to vector<1x8x32xf32>
    tpu.vector_store %arg12[%c1_111, %c0_112, %c0_113], %508 {strides = array<i32>} : memref<2x8x32xf32, #tpu.memory_space<vmem>>, vector<1x8x32xf32>,
    return
  }
}

</mosaic_0001>

<llo_original>
// kernel: rnn_model_forward.1
$region0: #{rnn_model_forward.1}
  #allocation0 [shape = 'u32[]', space=smem, size = 0x4, offset = 0x4, fixed_abs, tag = 'smem constant byte address 0x4 - core index']
  #allocation1 [shape = 'u32[144,128]{1,0:T(1,128)}', space=vmem, size = 0x12000, scoped, tag = 'internal scratch']
  #allocation2 [shape = 'f32[64,32]{1,0:T(8,128)}', space=vmem, size = 0x8000, scoped, tag = 'scratch operand']
  %s0 = inlined_call_operand.vmem [shape: f32[64,128], index: 0, kind: input, shape index: {}]
  %s1 = inlined_call_operand.vmem [shape: s32[8,1], index: 1, kind: input, shape index: {}]
  %s2 = inlined_call_operand.vmem [shape: f32[2,8,32], index: 2, kind: input, shape index: {}]
  %s3 = inlined_call_operand.vmem [shape: f32[2,8,32], index: 3, kind: input, shape index: {}]
  %s4 = inlined_call_operand.vmem [shape: f32[32,128], index: 4, kind: input, shape index: {}]
  %s5 = inlined_call_operand.vmem [shape: f32[32,128], index: 5, kind: input, shape index: {}]
  %s6 = inlined_call_operand.vmem [shape: f32[32,128], index: 6, kind: input, shape index: {}]
  %s7 = inlined_call_operand.vmem [shape: f32[1,128], index: 7, kind: input, shape index: {}]
  %s8 = inlined_call_operand.vmem [shape: f32[32,128], index: 8, kind: input, shape index: {}]
  %s9 = inlined_call_operand.vmem [shape: f32[1,128], index: 9, kind: input, shape index: {}]
  %s10 = inlined_call_operand.vmem [shape: f32[64,128], index: 10, kind: output, shape index: {0}]
  %s11 = inlined_call_operand.vmem [shape: f32[2,8,32], index: 11, kind: output, shape index: {1}]
  %s12 = inlined_call_operand.vmem [shape: f32[2,8,32], index: 12, kind: output, shape index: {2}]
  %13 = xla_tuple %s10, %s11, %s12
  %s14 = sld [smem:[#allocation0]]
  $region66: #{rnn_model_forward.1} parent=0
    _
  %s16 = ssub.s32 1, %s14
  %s17 = scalar_select 0, %s16, %s14
  // Predicated region
  $region2: #{rnn_model_forward.1} parent=0 // pred_check
    _
  $region3: #{rnn_model_forward.1} parent=0 // pred_check_branch
    %19 = sbr.rel (0) target = $region5
  $region4: #{rnn_model_forward.1} parent=0 // pred_region
    _
  $region5: #{rnn_model_forward.1} parent=0 // pred_fallthru
    _
  // Predicated region
  $region6: #{rnn_model_forward.1} parent=0 // pred_check
    _
  $region7: #{rnn_model_forward.1} parent=0 // pred_check_branch
    %21 = sbr.rel (0) target = $region9
  $region8: #{rnn_model_forward.1} parent=0 // pred_region
    _
  $region9: #{rnn_model_forward.1} parent=0 // pred_fallthru
    _
  // Predicated region
  $region10: #{rnn_model_forward.1} parent=0 // pred_check
    _
  $region11: #{rnn_model_forward.1} parent=0 // pred_check_branch
    %23 = sbr.rel (0) target = $region13
  $region12: #{rnn_model_forward.1} parent=0 // pred_region
    _
  $region13: #{rnn_model_forward.1} parent=0 // pred_fallthru
    _
  // Predicated region
  $region14: #{rnn_model_forward.1} parent=0 // pred_check
    _
  $region15: #{rnn_model_forward.1} parent=0 // pred_check_branch
    %25 = sbr.rel (0) target = $region17
  $region16: #{rnn_model_forward.1} parent=0 // pred_region
    _
  $region17: #{rnn_model_forward.1} parent=0 // pred_fallthru
    _
  // Predicated region
  $region18: #{rnn_model_forward.1} parent=0 // pred_check
    _
  $region19: #{rnn_model_forward.1} parent=0 // pred_check_branch
    %27 = sbr.rel (0) target = $region21
  $region20: #{rnn_model_forward.1} parent=0 // pred_region
    _
  $region21: #{rnn_model_forward.1} parent=0 // pred_fallthru
    _
  // Predicated region
  $region22: #{rnn_model_forward.1} parent=0 // pred_check
    _
  $region23: #{rnn_model_forward.1} parent=0 // pred_check_branch
    %29 = sbr.rel (0) target = $region25
  $region24: #{rnn_model_forward.1} parent=0 // pred_region
    _
  $region25: #{rnn_model_forward.1} parent=0 // pred_fallthru
    _
  // Predicated region
  $region26: #{rnn_model_forward.1} parent=0 // pred_check
    _
  $region27: #{rnn_model_forward.1} parent=0 // pred_check_branch
    %31 = sbr.rel (0) target = $region29
  $region28: #{rnn_model_forward.1} parent=0 // pred_region
    _
  $region29: #{rnn_model_forward.1} parent=0 // pred_fallthru
    _
  // Predicated region
  $region30: #{rnn_model_forward.1} parent=0 // pred_check
    _
  $region31: #{rnn_model_forward.1} parent=0 // pred_check_branch
    %33 = sbr.rel (0) target = $region33
  $region32: #{rnn_model_forward.1} parent=0 // pred_region
    _
  $region33: #{rnn_model_forward.1} parent=0 // pred_fallthru
    _
  // Predicated region
  $region34: #{rnn_model_forward.1} parent=0 // pred_check
    _
  $region35: #{rnn_model_forward.1} parent=0 // pred_check_branch
    %35 = sbr.rel (0) target = $region37
  $region36: #{rnn_model_forward.1} parent=0 // pred_region
    _
  $region37: #{rnn_model_forward.1} parent=0 // pred_fallthru
    _
  // Predicated region
  $region38: #{rnn_model_forward.1} parent=0 // pred_check
    _
  $region39: #{rnn_model_forward.1} parent=0 // pred_check_branch
    %37 = sbr.rel (0) target = $region41
  $region40: #{rnn_model_forward.1} parent=0 // pred_region
    _
  $region41: #{rnn_model_forward.1} parent=0 // pred_fallthru
    _
  %v38 = vld [vmem:[%s4] sm:$0xff]
  %v39 = vld [vmem:[%s4 + $0x8] sm:$0xff]
  %v40 = vld [vmem:[%s4 + $0x10] sm:$0xff]
  %v41 = vld [vmem:[%s4 + $0x18] sm:$0xff]
  %v42 = vld [vmem:[%s5] sm:$0xff]
  %v43 = vld [vmem:[%s5 + $0x8] sm:$0xff]
  %v44 = vld [vmem:[%s5 + $0x10] sm:$0xff]
  %v45 = vld [vmem:[%s5 + $0x18] sm:$0xff]
  %v46 = vld [vmem:[%s6] sm:$0xff]
  %v47 = vld [vmem:[%s6 + $0x8] sm:$0xff]
  %v48 = vld [vmem:[%s6 + $0x10] sm:$0xff]
  %v49 = vld [vmem:[%s6 + $0x18] sm:$0xff]
  %v50 = vld [vmem:[%s7] sm:$0x1]
  %v51 = vld [vmem:[%s1] sm:$0xff]
  %v52 = vld [vmem:[%s2] sm:$0xff]
  %v53 = vld [vmem:[%s3] sm:$0xff]
  %s54 = scalar_lea.vmem %s2, 8
  %v55 = vld [vmem:[%s54] sm:$0xff]
  %s56 = scalar_lea.vmem %s3, 8
  %v57 = vld [vmem:[%s56] sm:$0xff]
  %vm58 = vcmp.gt.s32.totalorder %v51, 0
  %v60 = vlaneseq
  %v61 = vshrl.u32 %v60, 7
  %v62 = vsub.s32 0, %v61
  %v63 = vrot.slane %v50, %v62
  %vm65 = vcmask 261120
  %v67 = vsel %vm65, %v55, 0
  %69 = vmatprep.subr.mxu0 0.0
  %70 = vmatpush1.msra.mxu0 %v46
  %71 = vmatprep.subr.mxu0 0.0
  %72 = vmatpush1.msra.mxu0 %v47
  %73 = vmatprep.subr.mxu0 0.0
  %74 = vmatpush1.msra.mxu0 %v48
  %75 = vmatprep.subr.mxu0 0.0
  %76 = vmatpush1.msra.mxu0 %v49
  %77 = vmatprep.subr.mxu0 0.0
  %78 = vmatpush1.msra.mxu0 0.0
  %79 = vmatprep.subr.mxu0 0.0
  %80 = vmatpush1.msra.mxu0 0.0
  %81 = vmatprep.subr.mxu0 0.0
  %82 = vmatpush1.msra.mxu0 0.0
  %83 = vmatprep.subr.mxu0 0.0
  %84 = vmatpush1.msra.mxu0 0.0
  %85 = vmatprep.subr.mxu0 0.0
  %86 = vmatpush1.msra.mxu0 0.0
  %87 = vmatprep.subr.mxu0 0.0
  %88 = vmatpush1.msra.mxu0 0.0
  %89 = vmatprep.subr.mxu0 0.0
  %90 = vmatpush1.msra.mxu0 0.0
  %91 = vmatprep.subr.mxu0 0.0
  %92 = vmatpush1.msra.mxu0 0.0
  %93 = vmatprep.subr.mxu0 0.0
  %94 = vmatpush1.msra.mxu0 0.0
  %95 = vmatprep.subr.mxu0 0.0
  %96 = vmatpush1.msra.mxu0 0.0
  %97 = vmatprep.subr.mxu0 0.0
  %98 = vmatpush1.msra.mxu0 0.0
  %99 = vmatprep.subr.mxu0 0.0
  %100 = vmatpush1.msra.mxu0 0.0
  %101 = vmatprep.subr.mxu0 0.0
  %102 = vmatpush1.msra.mxu0 0.0
  %103 = vmatprep.subr.mxu0 0.0
  %104 = vmatpush1.msra.mxu0 0.0
  %105 = vmatprep.subr.mxu0 0.0
  %106 = vmatpush1.msra.mxu0 0.0
  %107 = vmatprep.subr.mxu0 0.0
  %108 = vmatpush1.msra.mxu0 0.0
  %109 = vmatprep.subr.mxu0 0.0
  %110 = vmatpush1.msra.mxu0 0.0
  %111 = vmatprep.subr.mxu0 0.0
  %112 = vmatpush1.msra.mxu0 0.0
  %113 = vmatprep.subr.mxu0 0.0
  %114 = vmatpush1.msra.mxu0 0.0
  %115 = vmatprep.subr.mxu0 0.0
  %116 = vmatpush1.msra.mxu0 0.0
  %117 = vmatprep.subr.mxu0 0.0
  %118 = vmatpush1.msra.mxu0 0.0
  %119 = vmatprep.subr.mxu0 0.0
  %120 = vmatpush1.msra.mxu0 0.0
  %121 = vmatprep.subr.mxu0 0.0
  %122 = vmatpush1.msra.mxu0 0.0
  %123 = vmatprep.subr.mxu0 0.0
  %124 = vmatpush1.msra.mxu0 0.0
  %125 = vmatprep.subr.mxu0 0.0
  %126 = vmatpush1.msra.mxu0 0.0
  %127 = vmatprep.subr.mxu0 0.0
  %128 = vmatpush1.msra.mxu0 0.0
  %129 = vmatprep.subr.mxu0 0.0
  %130 = vmatpush1.msra.mxu0 0.0
  %131 = vmatprep.subr.mxu0 0.0
  %132 = vmatpush1.msra.mxu0 0.0
  %133 = vmatprep.mubr.f32.mxu0 0.0
  %134 = vmatmul.mubr.f32.gmra.mrb[0].mxu0 %v67
  %v135 = vpop.f32.mrb[0].mxu0
  %v136 = vadd.f32 %v63, %v135
  %v137 = vpop.f32.mrb[0].mxu0
  %138 = vdwg.mxu0
  %v139 = vld [vmem:[%s0] sm:$0xff]
  %v141 = vsel %vm65, %v52, 0
  %143 = vmatprep.subr.mxu0 0.0
  %144 = vmatpush1.msra.mxu0 %v38
  %145 = vmatprep.subr.mxu0 0.0
  %146 = vmatpush1.msra.mxu0 %v39
  %147 = vmatprep.subr.mxu0 0.0
  %148 = vmatpush1.msra.mxu0 %v40
  %149 = vmatprep.subr.mxu0 0.0
  %150 = vmatpush1.msra.mxu0 %v41
  %151 = vmatprep.subr.mxu0 0.0
  %152 = vmatpush1.msra.mxu0 0.0
  %153 = vmatprep.subr.mxu0 0.0
  %154 = vmatpush1.msra.mxu0 0.0
  %155 = vmatprep.subr.mxu0 0.0
  %156 = vmatpush1.msra.mxu0 0.0
  %157 = vmatprep.subr.mxu0 0.0
  %158 = vmatpush1.msra.mxu0 0.0
  %159 = vmatprep.subr.mxu0 0.0
  %160 = vmatpush1.msra.mxu0 0.0
  %161 = vmatprep.subr.mxu0 0.0
  %162 = vmatpush1.msra.mxu0 0.0
  %163 = vmatprep.subr.mxu0 0.0
  %164 = vmatpush1.msra.mxu0 0.0
  %165 = vmatprep.subr.mxu0 0.0
  %166 = vmatpush1.msra.mxu0 0.0
  %167 = vmatprep.subr.mxu0 0.0
  %168 = vmatpush1.msra.mxu0 0.0
  %169 = vmatprep.subr.mxu0 0.0
  %170 = vmatpush1.msra.mxu0 0.0
  %171 = vmatprep.subr.mxu0 0.0
  %172 = vmatpush1.msra.mxu0 0.0
  %173 = vmatprep.subr.mxu0 0.0
  %174 = vmatpush1.msra.mxu0 0.0
  %175 = vmatprep.subr.mxu0 0.0
  %176 = vmatpush1.msra.mxu0 0.0
  %177 = vmatprep.subr.mxu0 0.0
  %178 = vmatpush1.msra.mxu0 0.0
  %179 = vmatprep.subr.mxu0 0.0
  %180 = vmatpush1.msra.mxu0 0.0
  %181 = vmatprep.subr.mxu0 0.0
  %182 = vmatpush1.msra.mxu0 0.0
  %183 = vmatprep.subr.mxu0 0.0
  %184 = vmatpush1.msra.mxu0 0.0
  %185 = vmatprep.subr.mxu0 0.0
  %186 = vmatpush1.msra.mxu0 0.0
  %187 = vmatprep.subr.mxu0 0.0
  %188 = vmatpush1.msra.mxu0 0.0
  %189 = vmatprep.subr.mxu0 0.0
  %190 = vmatpush1.msra.mxu0 0.0
  %191 = vmatprep.subr.mxu0 0.0
  %192 = vmatpush1.msra.mxu0 0.0
  %193 = vmatprep.subr.mxu0 0.0
  %194 = vmatpush1.msra.mxu0 0.0
  %195 = vmatprep.subr.mxu0 0.0
  %196 = vmatpush1.msra.mxu0 0.0
  %197 = vmatprep.subr.mxu0 0.0
  %198 = vmatpush1.msra.mxu0 0.0
  %199 = vmatprep.subr.mxu0 0.0
  %200 = vmatpush1.msra.mxu0 0.0
  %201 = vmatprep.subr.mxu0 0.0
  %202 = vmatpush1.msra.mxu0 0.0
  %203 = vmatprep.subr.mxu0 0.0
  %204 = vmatpush1.msra.mxu0 0.0
  %205 = vmatprep.subr.mxu0 0.0
  %206 = vmatpush1.msra.mxu0 0.0
  %207 = vmatprep.mubr.f32.mxu0 0.0
  %208 = vmatmul.mubr.f32.gmra.mrb[0].mxu0 %v141
  %v209 = vpop.f32.mrb[0].mxu0
  %v210 = vadd.f32 0.0, %v209
  %v211 = vpop.f32.mrb[0].mxu0
  %212 = vdwg.mxu0
  %v213 = vadd.f32 %v139, %v210
  %v214 = vxor.u32 %v213, 2147483648
  %v215 = vmul.f32 %v214, 1.442695
  %v216 = vpow.pop %v215
  %v217 = vadd.f32 %v216, 1.0
  %v218 = vrcp.pop %v217
  %v219 = vmul.f32 1.0, %v218
  %v220 = vtanh.pop %v213
  %222 = vrot.lane.b32.xlu0 %v53, 32
  %v223 = vpop.permute.xlu0 %222
  %v225 = vmul.f32 %v219, %v223
  %227 = vrot.lane.b32.xlu0 %v220, 32
  %v228 = vpop.permute.xlu0 %227
  %v230 = vmul.f32 %v219, %v228
  %232 = vrot.lane.b32.xlu0 %v230, 32
  %v233 = vpop.permute.xlu0 %232
  %v235 = vadd.f32 %v225, %v233
  %v236 = vtanh.pop %v235
  %238 = vrot.lane.b32.xlu0 %v236, 32
  %v239 = vpop.permute.xlu0 %238
  %v241 = vmul.f32 %v219, %v239
  %v242 = vsel %vm58, 1, 0
  %243 = vset.pattern.permute.xlu0 0
  %244 = vperm.xlu0 %243, %v242
  %v245 = vpop.permute.xlu0 %244
  %vm246 = vcmp.eq.s32.totalorder %v245, 1
  %247 = vrot.lane.b32.xlu0 %v52, 64
  %v248 = vpop.permute.xlu0 %247
  %v250 = vsel %vm246, %v241, %v248
  %v251 = vsel %vm246, %v235, %v223
  %253 = vrot.lane.b32.xlu0 %v241, 64
  %v254 = vpop.permute.xlu0 %253
  %v255 = vsel %vm65, %v254, 0
  %257 = vmatprep.subr.mxu0 0.0
  %258 = vmatpush1.msra.mxu0 %v42
  %259 = vmatprep.subr.mxu0 0.0
  %260 = vmatpush1.msra.mxu0 %v43
  %261 = vmatprep.subr.mxu0 0.0
  %262 = vmatpush1.msra.mxu0 %v44
  %263 = vmatprep.subr.mxu0 0.0
  %264 = vmatpush1.msra.mxu0 %v45
  %265 = vmatprep.subr.mxu0 0.0
  %266 = vmatpush1.msra.mxu0 0.0
  %267 = vmatprep.subr.mxu0 0.0
  %268 = vmatpush1.msra.mxu0 0.0
  %269 = vmatprep.subr.mxu0 0.0
  %270 = vmatpush1.msra.mxu0 0.0
  %271 = vmatprep.subr.mxu0 0.0
  %272 = vmatpush1.msra.mxu0 0.0
  %273 = vmatprep.subr.mxu0 0.0
  %274 = vmatpush1.msra.mxu0 0.0
  %275 = vmatprep.subr.mxu0 0.0
  %276 = vmatpush1.msra.mxu0 0.0
  %277 = vmatprep.subr.mxu0 0.0
  %278 = vmatpush1.msra.mxu0 0.0
  %279 = vmatprep.subr.mxu0 0.0
  %280 = vmatpush1.msra.mxu0 0.0
  %281 = vmatprep.subr.mxu0 0.0
  %282 = vmatpush1.msra.mxu0 0.0
  %283 = vmatprep.subr.mxu0 0.0
  %284 = vmatpush1.msra.mxu0 0.0
  %285 = vmatprep.subr.mxu0 0.0
  %286 = vmatpush1.msra.mxu0 0.0
  %287 = vmatprep.subr.mxu0 0.0
  %288 = vmatpush1.msra.mxu0 0.0
  %289 = vmatprep.subr.mxu0 0.0
  %290 = vmatpush1.msra.mxu0 0.0
  %291 = vmatprep.subr.mxu0 0.0
  %292 = vmatpush1.msra.mxu0 0.0
  %293 = vmatprep.subr.mxu0 0.0
  %294 = vmatpush1.msra.mxu0 0.0
  %295 = vmatprep.subr.mxu0 0.0
  %296 = vmatpush1.msra.mxu0 0.0
  %297 = vmatprep.subr.mxu0 0.0
  %298 = vmatpush1.msra.mxu0 0.0
  %299 = vmatprep.subr.mxu0 0.0
  %300 = vmatpush1.msra.mxu0 0.0
  %301 = vmatprep.subr.mxu0 0.0
  %302 = vmatpush1.msra.mxu0 0.0
  %303 = vmatprep.subr.mxu0 0.0
  %304 = vmatpush1.msra.mxu0 0.0
  %305 = vmatprep.subr.mxu0 0.0
  %306 = vmatpush1.msra.mxu0 0.0
  %307 = vmatprep.subr.mxu0 0.0
  %308 = vmatpush1.msra.mxu0 0.0
  %309 = vmatprep.subr.mxu0 0.0
  %310 = vmatpush1.msra.mxu0 0.0
  %311 = vmatprep.subr.mxu0 0.0
  %312 = vmatpush1.msra.mxu0 0.0
  %313 = vmatprep.subr.mxu0 0.0
  %314 = vmatpush1.msra.mxu0 0.0
  %315 = vmatprep.subr.mxu0 0.0
  %316 = vmatpush1.msra.mxu0 0.0
  %317 = vmatprep.subr.mxu0 0.0
  %318 = vmatpush1.msra.mxu0 0.0
  %319 = vmatprep.subr.mxu0 0.0
  %320 = vmatpush1.msra.mxu0 0.0
  %321 = vmatprep.mubr.f32.mxu0 0.0
  %322 = vmatmul.mubr.f32.gmra.mrb[0].mxu0 %v255
  %v323 = vpop.f32.mrb[0].mxu0
  %v324 = vadd.f32 %v136, %v323
  %v325 = vpop.f32.mrb[0].mxu0
  %326 = vdwg.mxu0
  %v327 = vxor.u32 %v324, 2147483648
  %v328 = vmul.f32 %v327, 1.442695
  %v329 = vpow.pop %v328
  %v330 = vadd.f32 %v329, 1.0
  %v331 = vrcp.pop %v330
  %v332 = vmul.f32 1.0, %v331
  %v333 = vtanh.pop %v324
  %335 = vrot.lane.b32.xlu0 %v57, 32
  %v336 = vpop.permute.xlu0 %335
  %v338 = vmul.f32 %v332, %v336
  %340 = vrot.lane.b32.xlu0 %v333, 32
  %v341 = vpop.permute.xlu0 %340
  %v343 = vmul.f32 %v332, %v341
  %345 = vrot.lane.b32.xlu0 %v343, 32
  %v346 = vpop.permute.xlu0 %345
  %v348 = vadd.f32 %v338, %v346
  %v349 = vtanh.pop %v348
  %351 = vrot.lane.b32.xlu0 %v349, 32
  %v352 = vpop.permute.xlu0 %351
  %v354 = vmul.f32 %v332, %v352
  %355 = vrot.lane.b32.xlu0 %v55, 64
  %v356 = vpop.permute.xlu0 %355
  %v358 = vsel %vm246, %v354, %v356
  %v359 = vsel %vm246, %v348, %v336
  %v360 = vsel %vm246, %v354, 0.0
  %362 = vrot.lane.b32.xlu0 %v360, 64
  %v363 = vpop.permute.xlu0 %362
  %365 = vst.msk [vmem:[#allocation2] sm:$0xff] %vm65, %v363
  %vm366 = vcmp.gt.s32.totalorder %v51, 1
  %368 = vrot.lane.b32.xlu0 %v358, 64
  %v369 = vpop.permute.xlu0 %368
  %v370 = vsel %vm65, %v369, 0
  %372 = vmatprep.subr.mxu0 0.0
  %373 = vmatpush1.msra.mxu0 %v46
  %374 = vmatprep.subr.mxu0 0.0
  %375 = vmatpush1.msra.mxu0 %v47
  %376 = vmatprep.subr.mxu0 0.0
  %377 = vmatpush1.msra.mxu0 %v48
  %378 = vmatprep.subr.mxu0 0.0
  %379 = vmatpush1.msra.mxu0 %v49
  %380 = vmatprep.subr.mxu0 0.0
  %381 = vmatpush1.msra.mxu0 0.0
  %382 = vmatprep.subr.mxu0 0.0
  %383 = vmatpush1.msra.mxu0 0.0
  %384 = vmatprep.subr.mxu0 0.0
  %385 = vmatpush1.msra.mxu0 0.0
  %386 = vmatprep.subr.mxu0 0.0
  %387 = vmatpush1.msra.mxu0 0.0
  %388 = vmatprep.subr.mxu0 0.0
  %389 = vmatpush1.msra.mxu0 0.0
  %390 = vmatprep.subr.mxu0 0.0
  %391 = vmatpush1.msra.mxu0 0.0
  %392 = vmatprep.subr.mxu0 0.0
  %393 = vmatpush1.msra.mxu0 0.0
  %394 = vmatprep.subr.mxu0 0.0
  %395 = vmatpush1.msra.mxu0 0.0
  %396 = vmatprep.subr.mxu0 0.0
  %397 = vmatpush1.msra.mxu0 0.0
  %398 = vmatprep.subr.mxu0 0.0
  %399 = vmatpush1.msra.mxu0 0.0
  %400 = vmatprep.subr.mxu0 0.0
  %401 = vmatpush1.msra.mxu0 0.0
  %402 = vmatprep.subr.mxu0 0.0
  %403 = vmatpush1.msra.mxu0 0.0
  %404 = vmatprep.subr.mxu0 0.0
  %405 = vmatpush1.msra.mxu0 0.0
  %406 = vmatprep.subr.mxu0 0.0
  %407 = vmatpush1.msra.mxu0 0.0
  %408 = vmatprep.subr.mxu0 0.0
  %409 = vmatpush1.msra.mxu0 0.0
  %410 = vmatprep.subr.mxu0 0.0
  %411 = vmatpush1.msra.mxu0 0.0
  %412 = vmatprep.subr.mxu0 0.0
  %413 = vmatpush1.msra.mxu0 0.0
  %414 = vmatprep.subr.mxu0 0.0
  %415 = vmatpush1.msra.mxu0 0.0
  %416 = vmatprep.subr.mxu0 0.0
  %417 = vmatpush1.msra.mxu0 0.0
  %418 = vmatprep.subr.mxu0 0.0
  %419 = vmatpush1.msra.mxu0 0.0
  %420 = vmatprep.subr.mxu0 0.0
  %421 = vmatpush1.msra.mxu0 0.0
  %422 = vmatprep.subr.mxu0 0.0
  %423 = vmatpush1.msra.mxu0 0.0
  %424 = vmatprep.subr.mxu0 0.0
  %425 = vmatpush1.msra.mxu0 0.0
  %426 = vmatprep.subr.mxu0 0.0
  %427 = vmatpush1.msra.mxu0 0.0
  %428 = vmatprep.subr.mxu0 0.0
  %429 = vmatpush1.msra.mxu0 0.0
  %430 = vmatprep.subr.mxu0 0.0
  %431 = vmatpush1.msra.mxu0 0.0
  %432 = vmatprep.subr.mxu0 0.0
  %433 = vmatpush1.msra.mxu0 0.0
  %434 = vmatprep.subr.mxu0 0.0
  %435 = vmatpush1.msra.mxu0 0.0
  %436 = vmatprep.mubr.f32.mxu0 0.0
  %437 = vmatmul.mubr.f32.gmra.mrb[0].mxu0 %v370
  %v438 = vpop.f32.mrb[0].mxu0
  %v439 = vadd.f32 %v63, %v438
  %v440 = vpop.f32.mrb[0].mxu0
  %441 = vdwg.mxu0
  %v442 = vld [vmem:[%s0 + $0x8] sm:$0xff]
  %444 = vrot.lane.b32.xlu0 %v250, 64
  %v445 = vpop.permute.xlu0 %444
  %v446 = vsel %vm65, %v445, 0
  %448 = vmatprep.subr.mxu0 0.0
  %449 = vmatpush1.msra.mxu0 %v38
  %450 = vmatprep.subr.mxu0 0.0
  %451 = vmatpush1.msra.mxu0 %v39
  %452 = vmatprep.subr.mxu0 0.0
  %453 = vmatpush1.msra.mxu0 %v40
  %454 = vmatprep.subr.mxu0 0.0
  %455 = vmatpush1.msra.mxu0 %v41
  %456 = vmatprep.subr.mxu0 0.0
  %457 = vmatpush1.msra.mxu0 0.0
  %458 = vmatprep.subr.mxu0 0.0
  %459 = vmatpush1.msra.mxu0 0.0
  %460 = vmatprep.subr.mxu0 0.0
  %461 = vmatpush1.msra.mxu0 0.0
  %462 = vmatprep.subr.mxu0 0.0
  %463 = vmatpush1.msra.mxu0 0.0
  %464 = vmatprep.subr.mxu0 0.0
  %465 = vmatpush1.msra.mxu0 0.0
  %466 = vmatprep.subr.mxu0 0.0
  %467 = vmatpush1.msra.mxu0 0.0
  %468 = vmatprep.subr.mxu0 0.0
  %469 = vmatpush1.msra.mxu0 0.0
  %470 = vmatprep.subr.mxu0 0.0
  %471 = vmatpush1.msra.mxu0 0.0
  %472 = vmatprep.subr.mxu0 0.0
  %473 = vmatpush1.msra.mxu0 0.0
  %474 = vmatprep.subr.mxu0 0.0
  %475 = vmatpush1.msra.mxu0 0.0
  %476 = vmatprep.subr.mxu0 0.0
  %477 = vmatpush1.msra.mxu0 0.0
  %478 = vmatprep.subr.mxu0 0.0
  %479 = vmatpush1.msra.mxu0 0.0
  %480 = vmatprep.subr.mxu0 0.0
  %481 = vmatpush1.msra.mxu0 0.0
  %482 = vmatprep.subr.mxu0 0.0
  %483 = vmatpush1.msra.mxu0 0.0
  %484 = vmatprep.subr.mxu0 0.0
  %485 = vmatpush1.msra.mxu0 0.0
  %486 = vmatprep.subr.mxu0 0.0
  %487 = vmatpush1.msra.mxu0 0.0
  %488 = vmatprep.subr.mxu0 0.0
  %489 = vmatpush1.msra.mxu0 0.0
  %490 = vmatprep.subr.mxu0 0.0
  %491 = vmatpush1.msra.mxu0 0.0
  %492 = vmatprep.subr.mxu0 0.0
  %493 = vmatpush1.msra.mxu0 0.0
  %494 = vmatprep.subr.mxu0 0.0
  %495 = vmatpush1.msra.mxu0 0.0
  %496 = vmatprep.subr.mxu0 0.0
  %497 = vmatpush1.msra.mxu0 0.0
  %498 = vmatprep.subr.mxu0 0.0
  %499 = vmatpush1.msra.mxu0 0.0
  %500 = vmatprep.subr.mxu0 0.0
  %501 = vmatpush1.msra.mxu0 0.0
  %502 = vmatprep.subr.mxu0 0.0
  %503 = vmatpush1.msra.mxu0 0.0
  %504 = vmatprep.subr.mxu0 0.0
  %505 = vmatpush1.msra.mxu0 0.0
  %506 = vmatprep.subr.mxu0 0.0
  %507 = vmatpush1.msra.mxu0 0.0
  %508 = vmatprep.subr.mxu0 0.0
  %509 = vmatpush1.msra.mxu0 0.0
  %510 = vmatprep.subr.mxu0 0.0
  %511 = vmatpush1.msra.mxu0 0.0
  %512 = vmatprep.mubr.f32.mxu0 0.0
  %513 = vmatmul.mubr.f32.gmra.mrb[0].mxu0 %v446
  %v514 = vpop.f32.mrb[0].mxu0
  %v515 = vadd.f32 0.0, %v514
  %v516 = vpop.f32.mrb[0].mxu0
  %517 = vdwg.mxu0
  %v518 = vadd.f32 %v442, %v515
  %v519 = vxor.u32 %v518, 2147483648
  %v520 = vmul.f32 %v519, 1.442695
  %v521 = vpow.pop %v520
  %v522 = vadd.f32 %v521, 1.0
  %v523 = vrcp.pop %v522
  %v524 = vmul.f32 1.0, %v523
  %v525 = vtanh.pop %v518
  %v526 = vmul.f32 %v524, %v251
  %528 = vrot.lane.b32.xlu0 %v525, 32
  %v529 = vpop.permute.xlu0 %528
  %v531 = vmul.f32 %v524, %v529
  %533 = vrot.lane.b32.xlu0 %v531, 32
  %v534 = vpop.permute.xlu0 %533
  %v536 = vadd.f32 %v526, %v534
  %v537 = vtanh.pop %v536
  %539 = vrot.lane.b32.xlu0 %v537, 32
  %v540 = vpop.permute.xlu0 %539
  %v542 = vmul.f32 %v524, %v540
  %v543 = vsel %vm366, 1, 0
  %544 = vset.pattern.permute.xlu0 0
  %545 = vperm.xlu0 %544, %v543
  %v546 = vpop.permute.xlu0 %545
  %vm547 = vcmp.eq.s32.totalorder %v546, 1
  %v548 = vsel %vm547, %v542, %v250
  %v549 = vsel %vm547, %v536, %v251
  %551 = vrot.lane.b32.xlu0 %v542, 64
  %v552 = vpop.permute.xlu0 %551
  %v553 = vsel %vm65, %v552, 0
  %555 = vmatprep.subr.mxu0 0.0
  %556 = vmatpush1.msra.mxu0 %v42
  %557 = vmatprep.subr.mxu0 0.0
  %558 = vmatpush1.msra.mxu0 %v43
  %559 = vmatprep.subr.mxu0 0.0
  %560 = vmatpush1.msra.mxu0 %v44
  %561 = vmatprep.subr.mxu0 0.0
  %562 = vmatpush1.msra.mxu0 %v45
  %563 = vmatprep.subr.mxu0 0.0
  %564 = vmatpush1.msra.mxu0 0.0
  %565 = vmatprep.subr.mxu0 0.0
  %566 = vmatpush1.msra.mxu0 0.0
  %567 = vmatprep.subr.mxu0 0.0
  %568 = vmatpush1.msra.mxu0 0.0
  %569 = vmatprep.subr.mxu0 0.0
  %570 = vmatpush1.msra.mxu0 0.0
  %571 = vmatprep.subr.mxu0 0.0
  %572 = vmatpush1.msra.mxu0 0.0
  %573 = vmatprep.subr.mxu0 0.0
  %574 = vmatpush1.msra.mxu0 0.0
  %575 = vmatprep.subr.mxu0 0.0
  %576 = vmatpush1.msra.mxu0 0.0
  %577 = vmatprep.subr.mxu0 0.0
  %578 = vmatpush1.msra.mxu0 0.0
  %579 = vmatprep.subr.mxu0 0.0
  %580 = vmatpush1.msra.mxu0 0.0
  %581 = vmatprep.subr.mxu0 0.0
  %582 = vmatpush1.msra.mxu0 0.0
  %583 = vmatprep.subr.mxu0 0.0
  %584 = vmatpush1.msra.mxu0 0.0
  %585 = vmatprep.subr.mxu0 0.0
  %586 = vmatpush1.msra.mxu0 0.0
  %587 = vmatprep.subr.mxu0 0.0
  %588 = vmatpush1.msra.mxu0 0.0
  %589 = vmatprep.subr.mxu0 0.0
  %590 = vmatpush1.msra.mxu0 0.0
  %591 = vmatprep.subr.mxu0 0.0
  %592 = vmatpush1.msra.mxu0 0.0
  %593 = vmatprep.subr.mxu0 0.0
  %594 = vmatpush1.msra.mxu0 0.0
  %595 = vmatprep.subr.mxu0 0.0
  %596 = vmatpush1.msra.mxu0 0.0
  %597 = vmatprep.subr.mxu0 0.0
  %598 = vmatpush1.msra.mxu0 0.0
  %599 = vmatprep.subr.mxu0 0.0
  %600 = vmatpush1.msra.mxu0 0.0
  %601 = vmatprep.subr.mxu0 0.0
  %602 = vmatpush1.msra.mxu0 0.0
  %603 = vmatprep.subr.mxu0 0.0
  %604 = vmatpush1.msra.mxu0 0.0
  %605 = vmatprep.subr.mxu0 0.0
  %606 = vmatpush1.msra.mxu0 0.0
  %607 = vmatprep.subr.mxu0 0.0
  %608 = vmatpush1.msra.mxu0 0.0
  %609 = vmatprep.subr.mxu0 0.0
  %610 = vmatpush1.msra.mxu0 0.0
  %611 = vmatprep.subr.mxu0 0.0
  %612 = vmatpush1.msra.mxu0 0.0
  %613 = vmatprep.subr.mxu0 0.0
  %614 = vmatpush1.msra.mxu0 0.0
  %615 = vmatprep.subr.mxu0 0.0
  %616 = vmatpush1.msra.mxu0 0.0
  %617 = vmatprep.subr.mxu0 0.0
  %618 = vmatpush1.msra.mxu0 0.0
  %619 = vmatprep.mubr.f32.mxu0 0.0
  %620 = vmatmul.mubr.f32.gmra.mrb[0].mxu0 %v553
  %v621 = vpop.f32.mrb[0].mxu0
  %v622 = vadd.f32 %v439, %v621
  %v623 = vpop.f32.mrb[0].mxu0
  %624 = vdwg.mxu0
  %v625 = vxor.u32 %v622, 2147483648
  %v626 = vmul.f32 %v625, 1.442695
  %v627 = vpow.pop %v626
  %v628 = vadd.f32 %v627, 1.0
  %v629 = vrcp.pop %v628
  %v630 = vmul.f32 1.0, %v629
  %v631 = vtanh.pop %v622
  %v632 = vmul.f32 %v630, %v359
  %634 = vrot.lane.b32.xlu0 %v631, 32
  %v635 = vpop.permute.xlu0 %634
  %v637 = vmul.f32 %v630, %v635
  %639 = vrot.lane.b32.xlu0 %v637, 32
  %v640 = vpop.permute.xlu0 %639
  %v642 = vadd.f32 %v632, %v640
  %v643 = vtanh.pop %v642
  %645 = vrot.lane.b32.xlu0 %v643, 32
  %v646 = vpop.permute.xlu0 %645
  %v648 = vmul.f32 %v630, %v646
  %v649 = vsel %vm547, %v648, %v358
  %v650 = vsel %vm547, %v642, %v359
  %v651 = vsel %vm547, %v648, 0.0
  %653 = vrot.lane.b32.xlu0 %v651, 64
  %v654 = vpop.permute.xlu0 %653
  %656 = vst.msk [vmem:[#allocation2 + $0x8] sm:$0xff] %vm65, %v654
  %vm657 = vcmp.gt.s32.totalorder %v51, 2
  %659 = vrot.lane.b32.xlu0 %v649, 64
  %v660 = vpop.permute.xlu0 %659
  %v661 = vsel %vm65, %v660, 0
  %663 = vmatprep.subr.mxu0 0.0
  %664 = vmatpush1.msra.mxu0 %v46
  %665 = vmatprep.subr.mxu0 0.0
  %666 = vmatpush1.msra.mxu0 %v47
  %667 = vmatprep.subr.mxu0 0.0
  %668 = vmatpush1.msra.mxu0 %v48
  %669 = vmatprep.subr.mxu0 0.0
  %670 = vmatpush1.msra.mxu0 %v49
  %671 = vmatprep.subr.mxu0 0.0
  %672 = vmatpush1.msra.mxu0 0.0
  %673 = vmatprep.subr.mxu0 0.0
  %674 = vmatpush1.msra.mxu0 0.0
  %675 = vmatprep.subr.mxu0 0.0
  %676 = vmatpush1.msra.mxu0 0.0
  %677 = vmatprep.subr.mxu0 0.0
  %678 = vmatpush1.msra.mxu0 0.0
  %679 = vmatprep.subr.mxu0 0.0
  %680 = vmatpush1.msra.mxu0 0.0
  %681 = vmatprep.subr.mxu0 0.0
  %682 = vmatpush1.msra.mxu0 0.0
  %683 = vmatprep.subr.mxu0 0.0
  %684 = vmatpush1.msra.mxu0 0.0
  %685 = vmatprep.subr.mxu0 0.0
  %686 = vmatpush1.msra.mxu0 0.0
  %687 = vmatprep.subr.mxu0 0.0
  %688 = vmatpush1.msra.mxu0 0.0
  %689 = vmatprep.subr.mxu0 0.0
  %690 = vmatpush1.msra.mxu0 0.0
  %691 = vmatprep.subr.mxu0 0.0
  %692 = vmatpush1.msra.mxu0 0.0
  %693 = vmatprep.subr.mxu0 0.0
  %694 = vmatpush1.msra.mxu0 0.0
  %695 = vmatprep.subr.mxu0 0.0
  %696 = vmatpush1.msra.mxu0 0.0
  %697 = vmatprep.subr.mxu0 0.0
  %698 = vmatpush1.msra.mxu0 0.0
  %699 = vmatprep.subr.mxu0 0.0
  %700 = vmatpush1.msra.mxu0 0.0
  %701 = vmatprep.subr.mxu0 0.0
  %702 = vmatpush1.msra.mxu0 0.0
  %703 = vmatprep.subr.mxu0 0.0
  %704 = vmatpush1.msra.mxu0 0.0
  %705 = vmatprep.subr.mxu0 0.0
  %706 = vmatpush1.msra.mxu0 0.0
  %707 = vmatprep.subr.mxu0 0.0
  %708 = vmatpush1.msra.mxu0 0.0
  %709 = vmatprep.subr.mxu0 0.0
  %710 = vmatpush1.msra.mxu0 0.0
  %711 = vmatprep.subr.mxu0 0.0
  %712 = vmatpush1.msra.mxu0 0.0
  %713 = vmatprep.subr.mxu0 0.0
  %714 = vmatpush1.msra.mxu0 0.0
  %715 = vmatprep.subr.mxu0 0.0
  %716 = vmatpush1.msra.mxu0 0.0
  %717 = vmatprep.subr.mxu0 0.0
  %718 = vmatpush1.msra.mxu0 0.0
  %719 = vmatprep.subr.mxu0 0.0
  %720 = vmatpush1.msra.mxu0 0.0
  %721 = vmatprep.subr.mxu0 0.0
  %722 = vmatpush1.msra.mxu0 0.0
  %723 = vmatprep.subr.mxu0 0.0
  %724 = vmatpush1.msra.mxu0 0.0
  %725 = vmatprep.subr.mxu0 0.0
  %726 = vmatpush1.msra.mxu0 0.0
  %727 = vmatprep.mubr.f32.mxu0 0.0
  %728 = vmatmul.mubr.f32.gmra.mrb[0].mxu0 %v661
  %v729 = vpop.f32.mrb[0].mxu0
  %v730 = vadd.f32 %v63, %v729
  %v731 = vpop.f32.mrb[0].mxu0
  %732 = vdwg.mxu0
  %v733 = vld [vmem:[%s0 + $0x10] sm:$0xff]
  %735 = vrot.lane.b32.xlu0 %v548, 64
  %v736 = vpop.permute.xlu0 %735
  %v737 = vsel %vm65, %v736, 0
  %739 = vmatprep.subr.mxu0 0.0
  %740 = vmatpush1.msra.mxu0 %v38
  %741 = vmatprep.subr.mxu0 0.0
  %742 = vmatpush1.msra.mxu0 %v39
  %743 = vmatprep.subr.mxu0 0.0
  %744 = vmatpush1.msra.mxu0 %v40
  %745 = vmatprep.subr.mxu0 0.0
  %746 = vmatpush1.msra.mxu0 %v41
  %747 = vmatprep.subr.mxu0 0.0
  %748 = vmatpush1.msra.mxu0 0.0
  %749 = vmatprep.subr.mxu0 0.0
  %750 = vmatpush1.msra.mxu0 0.0
  %751 = vmatprep.subr.mxu0 0.0
  %752 = vmatpush1.msra.mxu0 0.0
  %753 = vmatprep.subr.mxu0 0.0
  %754 = vmatpush1.msra.mxu0 0.0
  %755 = vmatprep.subr.mxu0 0.0
  %756 = vmatpush1.msra.mxu0 0.0
  %757 = vmatprep.subr.mxu0 0.0
  %758 = vmatpush1.msra.mxu0 0.0
  %759 = vmatprep.subr.mxu0 0.0
  %760 = vmatpush1.msra.mxu0 0.0
  %761 = vmatprep.subr.mxu0 0.0
  %762 = vmatpush1.msra.mxu0 0.0
  %763 = vmatprep.subr.mxu0 0.0
  %764 = vmatpush1.msra.mxu0 0.0
  %765 = vmatprep.subr.mxu0 0.0
  %766 = vmatpush1.msra.mxu0 0.0
  %767 = vmatprep.subr.mxu0 0.0
  %768 = vmatpush1.msra.mxu0 0.0
  %769 = vmatprep.subr.mxu0 0.0
  %770 = vmatpush1.msra.mxu0 0.0
  %771 = vmatprep.subr.mxu0 0.0
  %772 = vmatpush1.msra.mxu0 0.0
  %773 = vmatprep.subr.mxu0 0.0
  %774 = vmatpush1.msra.mxu0 0.0
  %775 = vmatprep.subr.mxu0 0.0
  %776 = vmatpush1.msra.mxu0 0.0
  %777 = vmatprep.subr.mxu0 0.0
  %778 = vmatpush1.msra.mxu0 0.0
  %779 = vmatprep.subr.mxu0 0.0
  %780 = vmatpush1.msra.mxu0 0.0
  %781 = vmatprep.subr.mxu0 0.0
  %782 = vmatpush1.msra.mxu0 0.0
  %783 = vmatprep.subr.mxu0 0.0
  %784 = vmatpush1.msra.mxu0 0.0
  %785 = vmatprep.subr.mxu0 0.0
  %786 = vmatpush1.msra.mxu0 0.0
  %787 = vmatprep.subr.mxu0 0.0
  %788 = vmatpush1.msra.mxu0 0.0
  %789 = vmatprep.subr.mxu0 0.0
  %790 = vmatpush1.msra.mxu0 0.0
  %791 = vmatprep.subr.mxu0 0.0
  %792 = vmatpush1.msra.mxu0 0.0
  %793 = vmatprep.subr.mxu0 0.0
  %794 = vmatpush1.msra.mxu0 0.0
  %795 = vmatprep.subr.mxu0 0.0
  %796 = vmatpush1.msra.mxu0 0.0
  %797 = vmatprep.subr.mxu0 0.0
  %798 = vmatpush1.msra.mxu0 0.0
  %799 = vmatprep.subr.mxu0 0.0
  %800 = vmatpush1.msra.mxu0 0.0
  %801 = vmatprep.subr.mxu0 0.0
  %802 = vmatpush1.msra.mxu0 0.0
  %803 = vmatprep.mubr.f32.mxu0 0.0
  %804 = vmatmul.mubr.f32.gmra.mrb[0].mxu0 %v737
  %v805 = vpop.f32.mrb[0].mxu0
  %v806 = vadd.f32 0.0, %v805
  %v807 = vpop.f32.mrb[0].mxu0
  %808 = vdwg.mxu0
  %v809 = vadd.f32 %v733, %v806
  %v810 = vxor.u32 %v809, 2147483648
  %v811 = vmul.f32 %v810, 1.442695
  %v812 = vpow.pop %v811
  %v813 = vadd.f32 %v812, 1.0
  %v814 = vrcp.pop %v813
  %v815 = vmul.f32 1.0, %v814
  %v816 = vtanh.pop %v809
  %v817 = vmul.f32 %v815, %v549
  %819 = vrot.lane.b32.xlu0 %v816, 32
  %v820 = vpop.permute.xlu0 %819
  %v822 = vmul.f32 %v815, %v820
  %824 = vrot.lane.b32.xlu0 %v822, 32
  %v825 = vpop.permute.xlu0 %824
  %v827 = vadd.f32 %v817, %v825
  %v828 = vtanh.pop %v827
  %830 = vrot.lane.b32.xlu0 %v828, 32
  %v831 = vpop.permute.xlu0 %830
  %v833 = vmul.f32 %v815, %v831
  %v834 = vsel %vm657, 1, 0
  %835 = vset.pattern.permute.xlu0 0
  %836 = vperm.xlu0 %835, %v834
  %v837 = vpop.permute.xlu0 %836
  %vm838 = vcmp.eq.s32.totalorder %v837, 1
  %v839 = vsel %vm838, %v833, %v548
  %v840 = vsel %vm838, %v827, %v549
  %842 = vrot.lane.b32.xlu0 %v833, 64
  %v843 = vpop.permute.xlu0 %842
  %v844 = vsel %vm65, %v843, 0
  %846 = vmatprep.subr.mxu0 0.0
  %847 = vmatpush1.msra.mxu0 %v42
  %848 = vmatprep.subr.mxu0 0.0
  %849 = vmatpush1.msra.mxu0 %v43
  %850 = vmatprep.subr.mxu0 0.0
  %851 = vmatpush1.msra.mxu0 %v44
  %852 = vmatprep.subr.mxu0 0.0
  %853 = vmatpush1.msra.mxu0 %v45
  %854 = vmatprep.subr.mxu0 0.0
  %855 = vmatpush1.msra.mxu0 0.0
  %856 = vmatprep.subr.mxu0 0.0
  %857 = vmatpush1.msra.mxu0 0.0
  %858 = vmatprep.subr.mxu0 0.0
  %859 = vmatpush1.msra.mxu0 0.0
  %860 = vmatprep.subr.mxu0 0.0
  %861 = vmatpush1.msra.mxu0 0.0
  %862 = vmatprep.subr.mxu0 0.0
  %863 = vmatpush1.msra.mxu0 0.0
  %864 = vmatprep.subr.mxu0 0.0
  %865 = vmatpush1.msra.mxu0 0.0
  %866 = vmatprep.subr.mxu0 0.0
  %867 = vmatpush1.msra.mxu0 0.0
  %868 = vmatprep.subr.mxu0 0.0
  %869 = vmatpush1.msra.mxu0 0.0
  %870 = vmatprep.subr.mxu0 0.0
  %871 = vmatpush1.msra.mxu0 0.0
  %872 = vmatprep.subr.mxu0 0.0
  %873 = vmatpush1.msra.mxu0 0.0
  %874 = vmatprep.subr.mxu0 0.0
  %875 = vmatpush1.msra.mxu0 0.0
  %876 = vmatprep.subr.mxu0 0.0
  %877 = vmatpush1.msra.mxu0 0.0
  %878 = vmatprep.subr.mxu0 0.0
  %879 = vmatpush1.msra.mxu0 0.0
  %880 = vmatprep.subr.mxu0 0.0
  %881 = vmatpush1.msra.mxu0 0.0
  %882 = vmatprep.subr.mxu0 0.0
  %883 = vmatpush1.msra.mxu0 0.0
  %884 = vmatprep.subr.mxu0 0.0
  %885 = vmatpush1.msra.mxu0 0.0
  %886 = vmatprep.subr.mxu0 0.0
  %887 = vmatpush1.msra.mxu0 0.0
  %888 = vmatprep.subr.mxu0 0.0
  %889 = vmatpush1.msra.mxu0 0.0
  %890 = vmatprep.subr.mxu0 0.0
  %891 = vmatpush1.msra.mxu0 0.0
  %892 = vmatprep.subr.mxu0 0.0
  %893 = vmatpush1.msra.mxu0 0.0
  %894 = vmatprep.subr.mxu0 0.0
  %895 = vmatpush1.msra.mxu0 0.0
  %896 = vmatprep.subr.mxu0 0.0
  %897 = vmatpush1.msra.mxu0 0.0
  %898 = vmatprep.subr.mxu0 0.0
  %899 = vmatpush1.msra.mxu0 0.0
  %900 = vmatprep.subr.mxu0 0.0
  %901 = vmatpush1.msra.mxu0 0.0
  %902 = vmatprep.subr.mxu0 0.0
  %903 = vmatpush1.msra.mxu0 0.0
  %904 = vmatprep.subr.mxu0 0.0
  %905 = vmatpush1.msra.mxu0 0.0
  %906 = vmatprep.subr.mxu0 0.0
  %907 = vmatpush1.msra.mxu0 0.0
  %908 = vmatprep.subr.mxu0 0.0
  %909 = vmatpush1.msra.mxu0 0.0
  %910 = vmatprep.mubr.f32.mxu0 0.0
  %911 = vmatmul.mubr.f32.gmra.mrb[0].mxu0 %v844
  %v912 = vpop.f32.mrb[0].mxu0
  %v913 = vadd.f32 %v730, %v912
  %v914 = vpop.f32.mrb[0].mxu0
  %915 = vdwg.mxu0
  %v916 = vxor.u32 %v913, 2147483648
  %v917 = vmul.f32 %v916, 1.442695
  %v918 = vpow.pop %v917
  %v919 = vadd.f32 %v918, 1.0
  %v920 = vrcp.pop %v919
  %v921 = vmul.f32 1.0, %v920
  %v922 = vtanh.pop %v913
  %v923 = vmul.f32 %v921, %v650
  %925 = vrot.lane.b32.xlu0 %v922, 32
  %v926 = vpop.permute.xlu0 %925
  %v928 = vmul.f32 %v921, %v926
  %930 = vrot.lane.b32.xlu0 %v928, 32
  %v931 = vpop.permute.xlu0 %930
  %v933 = vadd.f32 %v923, %v931
  %v934 = vtanh.pop %v933
  %936 = vrot.lane.b32.xlu0 %v934, 32
  %v937 = vpop.permute.xlu0 %936
  %v939 = vmul.f32 %v921, %v937
  %v940 = vsel %vm838, %v939, %v649
  %v941 = vsel %vm838, %v933, %v650
  %v942 = vsel %vm838, %v939, 0.0
  %944 = vrot.lane.b32.xlu0 %v942, 64
  %v945 = vpop.permute.xlu0 %944
  %947 = vst.msk [vmem:[#allocation2 + $0x10] sm:$0xff] %vm65, %v945
  %vm948 = vcmp.gt.s32.totalorder %v51, 3
  %950 = vrot.lane.b32.xlu0 %v940, 64
  %v951 = vpop.permute.xlu0 %950
  %v952 = vsel %vm65, %v951, 0
  %954 = vmatprep.subr.mxu0 0.0
  %955 = vmatpush1.msra.mxu0 %v46
  %956 = vmatprep.subr.mxu0 0.0
  %957 = vmatpush1.msra.mxu0 %v47
  %958 = vmatprep.subr.mxu0 0.0
  %959 = vmatpush1.msra.mxu0 %v48
  %960 = vmatprep.subr.mxu0 0.0
  %961 = vmatpush1.msra.mxu0 %v49
  %962 = vmatprep.subr.mxu0 0.0
  %963 = vmatpush1.msra.mxu0 0.0
  %964 = vmatprep.subr.mxu0 0.0
  %965 = vmatpush1.msra.mxu0 0.0
  %966 = vmatprep.subr.mxu0 0.0
  %967 = vmatpush1.msra.mxu0 0.0
  %968 = vmatprep.subr.mxu0 0.0
  %969 = vmatpush1.msra.mxu0 0.0
  %970 = vmatprep.subr.mxu0 0.0
  %971 = vmatpush1.msra.mxu0 0.0
  %972 = vmatprep.subr.mxu0 0.0
  %973 = vmatpush1.msra.mxu0 0.0
  %974 = vmatprep.subr.mxu0 0.0
  %975 = vmatpush1.msra.mxu0 0.0
  %976 = vmatprep.subr.mxu0 0.0
  %977 = vmatpush1.msra.mxu0 0.0
  %978 = vmatprep.subr.mxu0 0.0
  %979 = vmatpush1.msra.mxu0 0.0
  %980 = vmatprep.subr.mxu0 0.0
  %981 = vmatpush1.msra.mxu0 0.0
  %982 = vmatprep.subr.mxu0 0.0
  %983 = vmatpush1.msra.mxu0 0.0
  %984 = vmatprep.subr.mxu0 0.0
  %985 = vmatpush1.msra.mxu0 0.0
  %986 = vmatprep.subr.mxu0 0.0
  %987 = vmatpush1.msra.mxu0 0.0
  %988 = vmatprep.subr.mxu0 0.0
  %989 = vmatpush1.msra.mxu0 0.0
  %990 = vmatprep.subr.mxu0 0.0
  %991 = vmatpush1.msra.mxu0 0.0
  %992 = vmatprep.subr.mxu0 0.0
  %993 = vmatpush1.msra.mxu0 0.0
  %994 = vmatprep.subr.mxu0 0.0
  %995 = vmatpush1.msra.mxu0 0.0
  %996 = vmatprep.subr.mxu0 0.0
  %997 = vmatpush1.msra.mxu0 0.0
  %998 = vmatprep.subr.mxu0 0.0
  %999 = vmatpush1.msra.mxu0 0.0
  %1000 = vmatprep.subr.mxu0 0.0
  %1001 = vmatpush1.msra.mxu0 0.0
  %1002 = vmatprep.subr.mxu0 0.0
  %1003 = vmatpush1.msra.mxu0 0.0
  %1004 = vmatprep.subr.mxu0 0.0
  %1005 = vmatpush1.msra.mxu0 0.0
  %1006 = vmatprep.subr.mxu0 0.0
  %1007 = vmatpush1.msra.mxu0 0.0
  %1008 = vmatprep.subr.mxu0 0.0
  %1009 = vmatpush1.msra.mxu0 0.0
  %1010 = vmatprep.subr.mxu0 0.0
  %1011 = vmatpush1.msra.mxu0 0.0
  %1012 = vmatprep.subr.mxu0 0.0
  %1013 = vmatpush1.msra.mxu0 0.0
  %1014 = vmatprep.subr.mxu0 0.0
  %1015 = vmatpush1.msra.mxu0 0.0
  %1016 = vmatprep.subr.mxu0 0.0
  %1017 = vmatpush1.msra.mxu0 0.0
  %1018 = vmatprep.mubr.f32.mxu0 0.0
  %1019 = vmatmul.mubr.f32.gmra.mrb[0].mxu0 %v952
  %v1020 = vpop.f32.mrb[0].mxu0
  %v1021 = vadd.f32 %v63, %v1020
  %v1022 = vpop.f32.mrb[0].mxu0
  %1023 = vdwg.mxu0
  %v1024 = vld [vmem:[%s0 + $0x18] sm:$0xff]
  %1026 = vrot.lane.b32.xlu0 %v839, 64
  %v1027 = vpop.permute.xlu0 %1026
  %v1028 = vsel %vm65, %v1027, 0
  %1030 = vmatprep.subr.mxu0 0.0
  %1031 = vmatpush1.msra.mxu0 %v38
  %1032 = vmatprep.subr.mxu0 0.0
  %1033 = vmatpush1.msra.mxu0 %v39
  %1034 = vmatprep.subr.mxu0 0.0
  %1035 = vmatpush1.msra.mxu0 %v40
  %1036 = vmatprep.subr.mxu0 0.0
  %1037 = vmatpush1.msra.mxu0 %v41
  %1038 = vmatprep.subr.mxu0 0.0
  %1039 = vmatpush1.msra.mxu0 0.0
  %1040 = vmatprep.subr.mxu0 0.0
  %1041 = vmatpush1.msra.mxu0 0.0
  %1042 = vmatprep.subr.mxu0 0.0
  %1043 = vmatpush1.msra.mxu0 0.0
  %1044 = vmatprep.subr.mxu0 0.0
  %1045 = vmatpush1.msra.mxu0 0.0
  %1046 = vmatprep.subr.mxu0 0.0
  %1047 = vmatpush1.msra.mxu0 0.0
  %1048 = vmatprep.subr.mxu0 0.0
  %1049 = vmatpush1.msra.mxu0 0.0
  %1050 = vmatprep.subr.mxu0 0.0
  %1051 = vmatpush1.msra.mxu0 0.0
  %1052 = vmatprep.subr.mxu0 0.0
  %1053 = vmatpush1.msra.mxu0 0.0
  %1054 = vmatprep.subr.mxu0 0.0
  %1055 = vmatpush1.msra.mxu0 0.0
  %1056 = vmatprep.subr.mxu0 0.0
  %1057 = vmatpush1.msra.mxu0 0.0
  %1058 = vmatprep.subr.mxu0 0.0
  %1059 = vmatpush1.msra.mxu0 0.0
  %1060 = vmatprep.subr.mxu0 0.0
  %1061 = vmatpush1.msra.mxu0 0.0
  %1062 = vmatprep.subr.mxu0 0.0
  %1063 = vmatpush1.msra.mxu0 0.0
  %1064 = vmatprep.subr.mxu0 0.0
  %1065 = vmatpush1.msra.mxu0 0.0
  %1066 = vmatprep.subr.mxu0 0.0
  %1067 = vmatpush1.msra.mxu0 0.0
  %1068 = vmatprep.subr.mxu0 0.0
  %1069 = vmatpush1.msra.mxu0 0.0
  %1070 = vmatprep.subr.mxu0 0.0
  %1071 = vmatpush1.msra.mxu0 0.0
  %1072 = vmatprep.subr.mxu0 0.0
  %1073 = vmatpush1.msra.mxu0 0.0
  %1074 = vmatprep.subr.mxu0 0.0
  %1075 = vmatpush1.msra.mxu0 0.0
  %1076 = vmatprep.subr.mxu0 0.0
  %1077 = vmatpush1.msra.mxu0 0.0
  %1078 = vmatprep.subr.mxu0 0.0
  %1079 = vmatpush1.msra.mxu0 0.0
  %1080 = vmatprep.subr.mxu0 0.0
  %1081 = vmatpush1.msra.mxu0 0.0
  %1082 = vmatprep.subr.mxu0 0.0
  %1083 = vmatpush1.msra.mxu0 0.0
  %1084 = vmatprep.subr.mxu0 0.0
  %1085 = vmatpush1.msra.mxu0 0.0
  %1086 = vmatprep.subr.mxu0 0.0
  %1087 = vmatpush1.msra.mxu0 0.0
  %1088 = vmatprep.subr.mxu0 0.0
  %1089 = vmatpush1.msra.mxu0 0.0
  %1090 = vmatprep.subr.mxu0 0.0
  %1091 = vmatpush1.msra.mxu0 0.0
  %1092 = vmatprep.subr.mxu0 0.0
  %1093 = vmatpush1.msra.mxu0 0.0
  %1094 = vmatprep.mubr.f32.mxu0 0.0
  %1095 = vmatmul.mubr.f32.gmra.mrb[0].mxu0 %v1028
  %v1096 = vpop.f32.mrb[0].mxu0
  %v1097 = vadd.f32 0.0, %v1096
  %v1098 = vpop.f32.mrb[0].mxu0
  %1099 = vdwg.mxu0
  %v1100 = vadd.f32 %v1024, %v1097
  %v1101 = vxor.u32 %v1100, 2147483648
  %v1102 = vmul.f32 %v1101, 1.442695
  %v1103 = vpow.pop %v1102
  %v1104 = vadd.f32 %v1103, 1.0
  %v1105 = vrcp.pop %v1104
  %v1106 = vmul.f32 1.0, %v1105
  %v1107 = vtanh.pop %v1100
  %v1108 = vmul.f32 %v1106, %v840
  %1110 = vrot.lane.b32.xlu0 %v1107, 32
  %v1111 = vpop.permute.xlu0 %1110
  %v1113 = vmul.f32 %v1106, %v1111
  %1115 = vrot.lane.b32.xlu0 %v1113, 32
  %v1116 = vpop.permute.xlu0 %1115
  %v1118 = vadd.f32 %v1108, %v1116
  %v1119 = vtanh.pop %v1118
  %1121 = vrot.lane.b32.xlu0 %v1119, 32
  %v1122 = vpop.permute.xlu0 %1121
  %v1124 = vmul.f32 %v1106, %v1122
  %v1125 = vsel %vm948, 1, 0
  %1126 = vset.pattern.permute.xlu0 0
  %1127 = vperm.xlu0 %1126, %v1125
  %v1128 = vpop.permute.xlu0 %1127
  %vm1129 = vcmp.eq.s32.totalorder %v1128, 1
  %v1130 = vsel %vm1129, %v1124, %v839
  %v1131 = vsel %vm1129, %v1118, %v840
  %1133 = vrot.lane.b32.xlu0 %v1124, 64
  %v1134 = vpop.permute.xlu0 %1133
  %v1135 = vsel %vm65, %v1134, 0
  %1137 = vmatprep.subr.mxu0 0.0
  %1138 = vmatpush1.msra.mxu0 %v42
  %1139 = vmatprep.subr.mxu0 0.0
  %1140 = vmatpush1.msra.mxu0 %v43
  %1141 = vmatprep.subr.mxu0 0.0
  %1142 = vmatpush1.msra.mxu0 %v44
  %1143 = vmatprep.subr.mxu0 0.0
  %1144 = vmatpush1.msra.mxu0 %v45
  %1145 = vmatprep.subr.mxu0 0.0
  %1146 = vmatpush1.msra.mxu0 0.0
  %1147 = vmatprep.subr.mxu0 0.0
  %1148 = vmatpush1.msra.mxu0 0.0
  %1149 = vmatprep.subr.mxu0 0.0
  %1150 = vmatpush1.msra.mxu0 0.0
  %1151 = vmatprep.subr.mxu0 0.0
  %1152 = vmatpush1.msra.mxu0 0.0
  %1153 = vmatprep.subr.mxu0 0.0
  %1154 = vmatpush1.msra.mxu0 0.0
  %1155 = vmatprep.subr.mxu0 0.0
  %1156 = vmatpush1.msra.mxu0 0.0
  %1157 = vmatprep.subr.mxu0 0.0
  %1158 = vmatpush1.msra.mxu0 0.0
  %1159 = vmatprep.subr.mxu0 0.0
  %1160 = vmatpush1.msra.mxu0 0.0
  %1161 = vmatprep.subr.mxu0 0.0
  %1162 = vmatpush1.msra.mxu0 0.0
  %1163 = vmatprep.subr.mxu0 0.0
  %1164 = vmatpush1.msra.mxu0 0.0
  %1165 = vmatprep.subr.mxu0 0.0
  %1166 = vmatpush1.msra.mxu0 0.0
  %1167 = vmatprep.subr.mxu0 0.0
  %1168 = vmatpush1.msra.mxu0 0.0
  %1169 = vmatprep.subr.mxu0 0.0
  %1170 = vmatpush1.msra.mxu0 0.0
  %1171 = vmatprep.subr.mxu0 0.0
  %1172 = vmatpush1.msra.mxu0 0.0
  %1173 = vmatprep.subr.mxu0 0.0
  %1174 = vmatpush1.msra.mxu0 0.0
  %1175 = vmatprep.subr.mxu0 0.0
  %1176 = vmatpush1.msra.mxu0 0.0
  %1177 = vmatprep.subr.mxu0 0.0
  %1178 = vmatpush1.msra.mxu0 0.0
  %1179 = vmatprep.subr.mxu0 0.0
  %1180 = vmatpush1.msra.mxu0 0.0
  %1181 = vmatprep.subr.mxu0 0.0
  %1182 = vmatpush1.msra.mxu0 0.0
  %1183 = vmatprep.subr.mxu0 0.0
  %1184 = vmatpush1.msra.mxu0 0.0
  %1185 = vmatprep.subr.mxu0 0.0
  %1186 = vmatpush1.msra.mxu0 0.0
  %1187 = vmatprep.subr.mxu0 0.0
  %1188 = vmatpush1.msra.mxu0 0.0
  %1189 = vmatprep.subr.mxu0 0.0
  %1190 = vmatpush1.msra.mxu0 0.0
  %1191 = vmatprep.subr.mxu0 0.0
  %1192 = vmatpush1.msra.mxu0 0.0
  %1193 = vmatprep.subr.mxu0 0.0
  %1194 = vmatpush1.msra.mxu0 0.0
  %1195 = vmatprep.subr.mxu0 0.0
  %1196 = vmatpush1.msra.mxu0 0.0
  %1197 = vmatprep.subr.mxu0 0.0
  %1198 = vmatpush1.msra.mxu0 0.0
  %1199 = vmatprep.subr.mxu0 0.0
  %1200 = vmatpush1.msra.mxu0 0.0
  %1201 = vmatprep.mubr.f32.mxu0 0.0
  %1202 = vmatmul.mubr.f32.gmra.mrb[0].mxu0 %v1135
  %v1203 = vpop.f32.mrb[0].mxu0
  %v1204 = vadd.f32 %v1021, %v1203
  %v1205 = vpop.f32.mrb[0].mxu0
  %1206 = vdwg.mxu0
  %v1207 = vxor.u32 %v1204, 2147483648
  %v1208 = vmul.f32 %v1207, 1.442695
  %v1209 = vpow.pop %v1208
  %v1210 = vadd.f32 %v1209, 1.0
  %v1211 = vrcp.pop %v1210
  %v1212 = vmul.f32 1.0, %v1211
  %v1213 = vtanh.pop %v1204
  %v1214 = vmul.f32 %v1212, %v941
  %1216 = vrot.lane.b32.xlu0 %v1213, 32
  %v1217 = vpop.permute.xlu0 %1216
  %v1219 = vmul.f32 %v1212, %v1217
  %1221 = vrot.lane.b32.xlu0 %v1219, 32
  %v1222 = vpop.permute.xlu0 %1221
  %v1224 = vadd.f32 %v1214, %v1222
  %v1225 = vtanh.pop %v1224
  %1227 = vrot.lane.b32.xlu0 %v1225, 32
  %v1228 = vpop.permute.xlu0 %1227
  %v1230 = vmul.f32 %v1212, %v1228
  %v1231 = vsel %vm1129, %v1230, %v940
  %v1232 = vsel %vm1129, %v1224, %v941
  %v1233 = vsel %vm1129, %v1230, 0.0
  %1235 = vrot.lane.b32.xlu0 %v1233, 64
  %v1236 = vpop.permute.xlu0 %1235
  %1238 = vst.msk [vmem:[#allocation2 + $0x18] sm:$0xff] %vm65, %v1236
  %vm1239 = vcmp.gt.s32.totalorder %v51, 4
  %1241 = vrot.lane.b32.xlu0 %v1231, 64
  %v1242 = vpop.permute.xlu0 %1241
  %v1243 = vsel %vm65, %v1242, 0
  %1245 = vmatprep.subr.mxu0 0.0
  %1246 = vmatpush1.msra.mxu0 %v46
  %1247 = vmatprep.subr.mxu0 0.0
  %1248 = vmatpush1.msra.mxu0 %v47
  %1249 = vmatprep.subr.mxu0 0.0
  %1250 = vmatpush1.msra.mxu0 %v48
  %1251 = vmatprep.subr.mxu0 0.0
  %1252 = vmatpush1.msra.mxu0 %v49
  %1253 = vmatprep.subr.mxu0 0.0
  %1254 = vmatpush1.msra.mxu0 0.0
  %1255 = vmatprep.subr.mxu0 0.0
  %1256 = vmatpush1.msra.mxu0 0.0
  %1257 = vmatprep.subr.mxu0 0.0
  %1258 = vmatpush1.msra.mxu0 0.0
  %1259 = vmatprep.subr.mxu0 0.0
  %1260 = vmatpush1.msra.mxu0 0.0
  %1261 = vmatprep.subr.mxu0 0.0
  %1262 = vmatpush1.msra.mxu0 0.0
  %1263 = vmatprep.subr.mxu0 0.0
  %1264 = vmatpush1.msra.mxu0 0.0
  %1265 = vmatprep.subr.mxu0 0.0
  %1266 = vmatpush1.msra.mxu0 0.0
  %1267 = vmatprep.subr.mxu0 0.0
  %1268 = vmatpush1.msra.mxu0 0.0
  %1269 = vmatprep.subr.mxu0 0.0
  %1270 = vmatpush1.msra.mxu0 0.0
  %1271 = vmatprep.subr.mxu0 0.0
  %1272 = vmatpush1.msra.mxu0 0.0
  %1273 = vmatprep.subr.mxu0 0.0
  %1274 = vmatpush1.msra.mxu0 0.0
  %1275 = vmatprep.subr.mxu0 0.0
  %1276 = vmatpush1.msra.mxu0 0.0
  %1277 = vmatprep.subr.mxu0 0.0
  %1278 = vmatpush1.msra.mxu0 0.0
  %1279 = vmatprep.subr.mxu0 0.0
  %1280 = vmatpush1.msra.mxu0 0.0
  %1281 = vmatprep.subr.mxu0 0.0
  %1282 = vmatpush1.msra.mxu0 0.0
  %1283 = vmatprep.subr.mxu0 0.0
  %1284 = vmatpush1.msra.mxu0 0.0
  %1285 = vmatprep.subr.mxu0 0.0
  %1286 = vmatpush1.msra.mxu0 0.0
  %1287 = vmatprep.subr.mxu0 0.0
  %1288 = vmatpush1.msra.mxu0 0.0
  %1289 = vmatprep.subr.mxu0 0.0
  %1290 = vmatpush1.msra.mxu0 0.0
  %1291 = vmatprep.subr.mxu0 0.0
  %1292 = vmatpush1.msra.mxu0 0.0
  %1293 = vmatprep.subr.mxu0 0.0
  %1294 = vmatpush1.msra.mxu0 0.0
  %1295 = vmatprep.subr.mxu0 0.0
  %1296 = vmatpush1.msra.mxu0 0.0
  %1297 = vmatprep.subr.mxu0 0.0
  %1298 = vmatpush1.msra.mxu0 0.0
  %1299 = vmatprep.subr.mxu0 0.0
  %1300 = vmatpush1.msra.mxu0 0.0
  %1301 = vmatprep.subr.mxu0 0.0
  %1302 = vmatpush1.msra.mxu0 0.0
  %1303 = vmatprep.subr.mxu0 0.0
  %1304 = vmatpush1.msra.mxu0 0.0
  %1305 = vmatprep.subr.mxu0 0.0
  %1306 = vmatpush1.msra.mxu0 0.0
  %1307 = vmatprep.subr.mxu0 0.0
  %1308 = vmatpush1.msra.mxu0 0.0
  %1309 = vmatprep.mubr.f32.mxu0 0.0
  %1310 = vmatmul.mubr.f32.gmra.mrb[0].mxu0 %v1243
  %v1311 = vpop.f32.mrb[0].mxu0
  %v1312 = vadd.f32 %v63, %v1311
  %v1313 = vpop.f32.mrb[0].mxu0
  %1314 = vdwg.mxu0
  %v1315 = vld [vmem:[%s0 + $0x20] sm:$0xff]
  %1317 = vrot.lane.b32.xlu0 %v1130, 64
  %v1318 = vpop.permute.xlu0 %1317
  %v1319 = vsel %vm65, %v1318, 0
  %1321 = vmatprep.subr.mxu0 0.0
  %1322 = vmatpush1.msra.mxu0 %v38
  %1323 = vmatprep.subr.mxu0 0.0
  %1324 = vmatpush1.msra.mxu0 %v39
  %1325 = vmatprep.subr.mxu0 0.0
  %1326 = vmatpush1.msra.mxu0 %v40
  %1327 = vmatprep.subr.mxu0 0.0
  %1328 = vmatpush1.msra.mxu0 %v41
  %1329 = vmatprep.subr.mxu0 0.0
  %1330 = vmatpush1.msra.mxu0 0.0
  %1331 = vmatprep.subr.mxu0 0.0
  %1332 = vmatpush1.msra.mxu0 0.0
  %1333 = vmatprep.subr.mxu0 0.0
  %1334 = vmatpush1.msra.mxu0 0.0
  %1335 = vmatprep.subr.mxu0 0.0
  %1336 = vmatpush1.msra.mxu0 0.0
  %1337 = vmatprep.subr.mxu0 0.0
  %1338 = vmatpush1.msra.mxu0 0.0
  %1339 = vmatprep.subr.mxu0 0.0
  %1340 = vmatpush1.msra.mxu0 0.0
  %1341 = vmatprep.subr.mxu0 0.0
  %1342 = vmatpush1.msra.mxu0 0.0
  %1343 = vmatprep.subr.mxu0 0.0
  %1344 = vmatpush1.msra.mxu0 0.0
  %1345 = vmatprep.subr.mxu0 0.0
  %1346 = vmatpush1.msra.mxu0 0.0
  %1347 = vmatprep.subr.mxu0 0.0
  %1348 = vmatpush1.msra.mxu0 0.0
  %1349 = vmatprep.subr.mxu0 0.0
  %1350 = vmatpush1.msra.mxu0 0.0
  %1351 = vmatprep.subr.mxu0 0.0
  %1352 = vmatpush1.msra.mxu0 0.0
  %1353 = vmatprep.subr.mxu0 0.0
  %1354 = vmatpush1.msra.mxu0 0.0
  %1355 = vmatprep.subr.mxu0 0.0
  %1356 = vmatpush1.msra.mxu0 0.0
  %1357 = vmatprep.subr.mxu0 0.0
  %1358 = vmatpush1.msra.mxu0 0.0
  %1359 = vmatprep.subr.mxu0 0.0
  %1360 = vmatpush1.msra.mxu0 0.0
  %1361 = vmatprep.subr.mxu0 0.0
  %1362 = vmatpush1.msra.mxu0 0.0
  %1363 = vmatprep.subr.mxu0 0.0
  %1364 = vmatpush1.msra.mxu0 0.0
  %1365 = vmatprep.subr.mxu0 0.0
  %1366 = vmatpush1.msra.mxu0 0.0
  %1367 = vmatprep.subr.mxu0 0.0
  %1368 = vmatpush1.msra.mxu0 0.0
  %1369 = vmatprep.subr.mxu0 0.0
  %1370 = vmatpush1.msra.mxu0 0.0
  %1371 = vmatprep.subr.mxu0 0.0
  %1372 = vmatpush1.msra.mxu0 0.0
  %1373 = vmatprep.subr.mxu0 0.0
  %1374 = vmatpush1.msra.mxu0 0.0
  %1375 = vmatprep.subr.mxu0 0.0
  %1376 = vmatpush1.msra.mxu0 0.0
  %1377 = vmatprep.subr.mxu0 0.0
  %1378 = vmatpush1.msra.mxu0 0.0
  %1379 = vmatprep.subr.mxu0 0.0
  %1380 = vmatpush1.msra.mxu0 0.0
  %1381 = vmatprep.subr.mxu0 0.0
  %1382 = vmatpush1.msra.mxu0 0.0
  %1383 = vmatprep.subr.mxu0 0.0
  %1384 = vmatpush1.msra.mxu0 0.0
  %1385 = vmatprep.mubr.f32.mxu0 0.0
  %1386 = vmatmul.mubr.f32.gmra.mrb[0].mxu0 %v1319
  %v1387 = vpop.f32.mrb[0].mxu0
  %v1388 = vadd.f32 0.0, %v1387
  %v1389 = vpop.f32.mrb[0].mxu0
  %1390 = vdwg.mxu0
  %v1391 = vadd.f32 %v1315, %v1388
  %v1392 = vxor.u32 %v1391, 2147483648
  %v1393 = vmul.f32 %v1392, 1.442695
  %v1394 = vpow.pop %v1393
  %v1395 = vadd.f32 %v1394, 1.0
  %v1396 = vrcp.pop %v1395
  %v1397 = vmul.f32 1.0, %v1396
  %v1398 = vtanh.pop %v1391
  %v1399 = vmul.f32 %v1397, %v1131
  %1401 = vrot.lane.b32.xlu0 %v1398, 32
  %v1402 = vpop.permute.xlu0 %1401
  %v1404 = vmul.f32 %v1397, %v1402
  %1406 = vrot.lane.b32.xlu0 %v1404, 32
  %v1407 = vpop.permute.xlu0 %1406
  %v1409 = vadd.f32 %v1399, %v1407
  %v1410 = vtanh.pop %v1409
  %1412 = vrot.lane.b32.xlu0 %v1410, 32
  %v1413 = vpop.permute.xlu0 %1412
  %v1415 = vmul.f32 %v1397, %v1413
  %v1416 = vsel %vm1239, 1, 0
  %1417 = vset.pattern.permute.xlu0 0
  %1418 = vperm.xlu0 %1417, %v1416
  %v1419 = vpop.permute.xlu0 %1418
  %vm1420 = vcmp.eq.s32.totalorder %v1419, 1
  %v1421 = vsel %vm1420, %v1415, %v1130
  %v1422 = vsel %vm1420, %v1409, %v1131
  %1424 = vrot.lane.b32.xlu0 %v1415, 64
  %v1425 = vpop.permute.xlu0 %1424
  %v1426 = vsel %vm65, %v1425, 0
  %1428 = vmatprep.subr.mxu0 0.0
  %1429 = vmatpush1.msra.mxu0 %v42
  %1430 = vmatprep.subr.mxu0 0.0
  %1431 = vmatpush1.msra.mxu0 %v43
  %1432 = vmatprep.subr.mxu0 0.0
  %1433 = vmatpush1.msra.mxu0 %v44
  %1434 = vmatprep.subr.mxu0 0.0
  %1435 = vmatpush1.msra.mxu0 %v45
  %1436 = vmatprep.subr.mxu0 0.0
  %1437 = vmatpush1.msra.mxu0 0.0
  %1438 = vmatprep.subr.mxu0 0.0
  %1439 = vmatpush1.msra.mxu0 0.0
  %1440 = vmatprep.subr.mxu0 0.0
  %1441 = vmatpush1.msra.mxu0 0.0
  %1442 = vmatprep.subr.mxu0 0.0
  %1443 = vmatpush1.msra.mxu0 0.0
  %1444 = vmatprep.subr.mxu0 0.0
  %1445 = vmatpush1.msra.mxu0 0.0
  %1446 = vmatprep.subr.mxu0 0.0
  %1447 = vmatpush1.msra.mxu0 0.0
  %1448 = vmatprep.subr.mxu0 0.0
  %1449 = vmatpush1.msra.mxu0 0.0
  %1450 = vmatprep.subr.mxu0 0.0
  %1451 = vmatpush1.msra.mxu0 0.0
  %1452 = vmatprep.subr.mxu0 0.0
  %1453 = vmatpush1.msra.mxu0 0.0
  %1454 = vmatprep.subr.mxu0 0.0
  %1455 = vmatpush1.msra.mxu0 0.0
  %1456 = vmatprep.subr.mxu0 0.0
  %1457 = vmatpush1.msra.mxu0 0.0
  %1458 = vmatprep.subr.mxu0 0.0
  %1459 = vmatpush1.msra.mxu0 0.0
  %1460 = vmatprep.subr.mxu0 0.0
  %1461 = vmatpush1.msra.mxu0 0.0
  %1462 = vmatprep.subr.mxu0 0.0
  %1463 = vmatpush1.msra.mxu0 0.0
  %1464 = vmatprep.subr.mxu0 0.0
  %1465 = vmatpush1.msra.mxu0 0.0
  %1466 = vmatprep.subr.mxu0 0.0
  %1467 = vmatpush1.msra.mxu0 0.0
  %1468 = vmatprep.subr.mxu0 0.0
  %1469 = vmatpush1.msra.mxu0 0.0
  %1470 = vmatprep.subr.mxu0 0.0
  %1471 = vmatpush1.msra.mxu0 0.0
  %1472 = vmatprep.subr.mxu0 0.0
  %1473 = vmatpush1.msra.mxu0 0.0
  %1474 = vmatprep.subr.mxu0 0.0
  %1475 = vmatpush1.msra.mxu0 0.0
  %1476 = vmatprep.subr.mxu0 0.0
  %1477 = vmatpush1.msra.mxu0 0.0
  %1478 = vmatprep.subr.mxu0 0.0
  %1479 = vmatpush1.msra.mxu0 0.0
  %1480 = vmatprep.subr.mxu0 0.0
  %1481 = vmatpush1.msra.mxu0 0.0
  %1482 = vmatprep.subr.mxu0 0.0
  %1483 = vmatpush1.msra.mxu0 0.0
  %1484 = vmatprep.subr.mxu0 0.0
  %1485 = vmatpush1.msra.mxu0 0.0
  %1486 = vmatprep.subr.mxu0 0.0
  %1487 = vmatpush1.msra.mxu0 0.0
  %1488 = vmatprep.subr.mxu0 0.0
  %1489 = vmatpush1.msra.mxu0 0.0
  %1490 = vmatprep.subr.mxu0 0.0
  %1491 = vmatpush1.msra.mxu0 0.0
  %1492 = vmatprep.mubr.f32.mxu0 0.0
  %1493 = vmatmul.mubr.f32.gmra.mrb[0].mxu0 %v1426
  %v1494 = vpop.f32.mrb[0].mxu0
  %v1495 = vadd.f32 %v1312, %v1494
  %v1496 = vpop.f32.mrb[0].mxu0
  %1497 = vdwg.mxu0
  %v1498 = vxor.u32 %v1495, 2147483648
  %v1499 = vmul.f32 %v1498, 1.442695
  %v1500 = vpow.pop %v1499
  %v1501 = vadd.f32 %v1500, 1.0
  %v1502 = vrcp.pop %v1501
  %v1503 = vmul.f32 1.0, %v1502
  %v1504 = vtanh.pop %v1495
  %v1505 = vmul.f32 %v1503, %v1232
  %1507 = vrot.lane.b32.xlu0 %v1504, 32
  %v1508 = vpop.permute.xlu0 %1507
  %v1510 = vmul.f32 %v1503, %v1508
  %1512 = vrot.lane.b32.xlu0 %v1510, 32
  %v1513 = vpop.permute.xlu0 %1512
  %v1515 = vadd.f32 %v1505, %v1513
  %v1516 = vtanh.pop %v1515
  %1518 = vrot.lane.b32.xlu0 %v1516, 32
  %v1519 = vpop.permute.xlu0 %1518
  %v1521 = vmul.f32 %v1503, %v1519
  %v1522 = vsel %vm1420, %v1521, %v1231
  %v1523 = vsel %vm1420, %v1515, %v1232
  %v1524 = vsel %vm1420, %v1521, 0.0
  %1526 = vrot.lane.b32.xlu0 %v1524, 64
  %v1527 = vpop.permute.xlu0 %1526
  %1529 = vst.msk [vmem:[#allocation2 + $0x20] sm:$0xff] %vm65, %v1527
  %vm1530 = vcmp.gt.s32.totalorder %v51, 5
  %1532 = vrot.lane.b32.xlu0 %v1522, 64
  %v1533 = vpop.permute.xlu0 %1532
  %v1534 = vsel %vm65, %v1533, 0
  %1536 = vmatprep.subr.mxu0 0.0
  %1537 = vmatpush1.msra.mxu0 %v46
  %1538 = vmatprep.subr.mxu0 0.0
  %1539 = vmatpush1.msra.mxu0 %v47
  %1540 = vmatprep.subr.mxu0 0.0
  %1541 = vmatpush1.msra.mxu0 %v48
  %1542 = vmatprep.subr.mxu0 0.0
  %1543 = vmatpush1.msra.mxu0 %v49
  %1544 = vmatprep.subr.mxu0 0.0
  %1545 = vmatpush1.msra.mxu0 0.0
  %1546 = vmatprep.subr.mxu0 0.0
  %1547 = vmatpush1.msra.mxu0 0.0
  %1548 = vmatprep.subr.mxu0 0.0
  %1549 = vmatpush1.msra.mxu0 0.0
  %1550 = vmatprep.subr.mxu0 0.0
  %1551 = vmatpush1.msra.mxu0 0.0
  %1552 = vmatprep.subr.mxu0 0.0
  %1553 = vmatpush1.msra.mxu0 0.0
  %1554 = vmatprep.subr.mxu0 0.0
  %1555 = vmatpush1.msra.mxu0 0.0
  %1556 = vmatprep.subr.mxu0 0.0
  %1557 = vmatpush1.msra.mxu0 0.0
  %1558 = vmatprep.subr.mxu0 0.0
  %1559 = vmatpush1.msra.mxu0 0.0
  %1560 = vmatprep.subr.mxu0 0.0
  %1561 = vmatpush1.msra.mxu0 0.0
  %1562 = vmatprep.subr.mxu0 0.0
  %1563 = vmatpush1.msra.mxu0 0.0
  %1564 = vmatprep.subr.mxu0 0.0
  %1565 = vmatpush1.msra.mxu0 0.0
  %1566 = vmatprep.subr.mxu0 0.0
  %1567 = vmatpush1.msra.mxu0 0.0
  %1568 = vmatprep.subr.mxu0 0.0
  %1569 = vmatpush1.msra.mxu0 0.0
  %1570 = vmatprep.subr.mxu0 0.0
  %1571 = vmatpush1.msra.mxu0 0.0
  %1572 = vmatprep.subr.mxu0 0.0
  %1573 = vmatpush1.msra.mxu0 0.0
  %1574 = vmatprep.subr.mxu0 0.0
  %1575 = vmatpush1.msra.mxu0 0.0
  %1576 = vmatprep.subr.mxu0 0.0
  %1577 = vmatpush1.msra.mxu0 0.0
  %1578 = vmatprep.subr.mxu0 0.0
  %1579 = vmatpush1.msra.mxu0 0.0
  %1580 = vmatprep.subr.mxu0 0.0
  %1581 = vmatpush1.msra.mxu0 0.0
  %1582 = vmatprep.subr.mxu0 0.0
  %1583 = vmatpush1.msra.mxu0 0.0
  %1584 = vmatprep.subr.mxu0 0.0
  %1585 = vmatpush1.msra.mxu0 0.0
  %1586 = vmatprep.subr.mxu0 0.0
  %1587 = vmatpush1.msra.mxu0 0.0
  %1588 = vmatprep.subr.mxu0 0.0
  %1589 = vmatpush1.msra.mxu0 0.0
  %1590 = vmatprep.subr.mxu0 0.0
  %1591 = vmatpush1.msra.mxu0 0.0
  %1592 = vmatprep.subr.mxu0 0.0
  %1593 = vmatpush1.msra.mxu0 0.0
  %1594 = vmatprep.subr.mxu0 0.0
  %1595 = vmatpush1.msra.mxu0 0.0
  %1596 = vmatprep.subr.mxu0 0.0
  %1597 = vmatpush1.msra.mxu0 0.0
  %1598 = vmatprep.subr.mxu0 0.0
  %1599 = vmatpush1.msra.mxu0 0.0
  %1600 = vmatprep.mubr.f32.mxu0 0.0
  %1601 = vmatmul.mubr.f32.gmra.mrb[0].mxu0 %v1534
  %v1602 = vpop.f32.mrb[0].mxu0
  %v1603 = vadd.f32 %v63, %v1602
  %v1604 = vpop.f32.mrb[0].mxu0
  %1605 = vdwg.mxu0
  %v1606 = vld [vmem:[%s0 + $0x28] sm:$0xff]
  %1608 = vrot.lane.b32.xlu0 %v1421, 64
  %v1609 = vpop.permute.xlu0 %1608
  %v1610 = vsel %vm65, %v1609, 0
  %1612 = vmatprep.subr.mxu0 0.0
  %1613 = vmatpush1.msra.mxu0 %v38
  %1614 = vmatprep.subr.mxu0 0.0
  %1615 = vmatpush1.msra.mxu0 %v39
  %1616 = vmatprep.subr.mxu0 0.0
  %1617 = vmatpush1.msra.mxu0 %v40
  %1618 = vmatprep.subr.mxu0 0.0
  %1619 = vmatpush1.msra.mxu0 %v41
  %1620 = vmatprep.subr.mxu0 0.0
  %1621 = vmatpush1.msra.mxu0 0.0
  %1622 = vmatprep.subr.mxu0 0.0
  %1623 = vmatpush1.msra.mxu0 0.0
  %1624 = vmatprep.subr.mxu0 0.0
  %1625 = vmatpush1.msra.mxu0 0.0
  %1626 = vmatprep.subr.mxu0 0.0
  %1627 = vmatpush1.msra.mxu0 0.0
  %1628 = vmatprep.subr.mxu0 0.0
  %1629 = vmatpush1.msra.mxu0 0.0
  %1630 = vmatprep.subr.mxu0 0.0
  %1631 = vmatpush1.msra.mxu0 0.0
  %1632 = vmatprep.subr.mxu0 0.0
  %1633 = vmatpush1.msra.mxu0 0.0
  %1634 = vmatprep.subr.mxu0 0.0
  %1635 = vmatpush1.msra.mxu0 0.0
  %1636 = vmatprep.subr.mxu0 0.0
  %1637 = vmatpush1.msra.mxu0 0.0
  %1638 = vmatprep.subr.mxu0 0.0
  %1639 = vmatpush1.msra.mxu0 0.0
  %1640 = vmatprep.subr.mxu0 0.0
  %1641 = vmatpush1.msra.mxu0 0.0
  %1642 = vmatprep.subr.mxu0 0.0
  %1643 = vmatpush1.msra.mxu0 0.0
  %1644 = vmatprep.subr.mxu0 0.0
  %1645 = vmatpush1.msra.mxu0 0.0
  %1646 = vmatprep.subr.mxu0 0.0
  %1647 = vmatpush1.msra.mxu0 0.0
  %1648 = vmatprep.subr.mxu0 0.0
  %1649 = vmatpush1.msra.mxu0 0.0
  %1650 = vmatprep.subr.mxu0 0.0
  %1651 = vmatpush1.msra.mxu0 0.0
  %1652 = vmatprep.subr.mxu0 0.0
  %1653 = vmatpush1.msra.mxu0 0.0
  %1654 = vmatprep.subr.mxu0 0.0
  %1655 = vmatpush1.msra.mxu0 0.0
  %1656 = vmatprep.subr.mxu0 0.0
  %1657 = vmatpush1.msra.mxu0 0.0
  %1658 = vmatprep.subr.mxu0 0.0
  %1659 = vmatpush1.msra.mxu0 0.0
  %1660 = vmatprep.subr.mxu0 0.0
  %1661 = vmatpush1.msra.mxu0 0.0
  %1662 = vmatprep.subr.mxu0 0.0
  %1663 = vmatpush1.msra.mxu0 0.0
  %1664 = vmatprep.subr.mxu0 0.0
  %1665 = vmatpush1.msra.mxu0 0.0
  %1666 = vmatprep.subr.mxu0 0.0
  %1667 = vmatpush1.msra.mxu0 0.0
  %1668 = vmatprep.subr.mxu0 0.0
  %1669 = vmatpush1.msra.mxu0 0.0
  %1670 = vmatprep.subr.mxu0 0.0
  %1671 = vmatpush1.msra.mxu0 0.0
  %1672 = vmatprep.subr.mxu0 0.0
  %1673 = vmatpush1.msra.mxu0 0.0
  %1674 = vmatprep.subr.mxu0 0.0
  %1675 = vmatpush1.msra.mxu0 0.0
  %1676 = vmatprep.mubr.f32.mxu0 0.0
  %1677 = vmatmul.mubr.f32.gmra.mrb[0].mxu0 %v1610
  %v1678 = vpop.f32.mrb[0].mxu0
  %v1679 = vadd.f32 0.0, %v1678
  %v1680 = vpop.f32.mrb[0].mxu0
  %1681 = vdwg.mxu0
  %v1682 = vadd.f32 %v1606, %v1679
  %v1683 = vxor.u32 %v1682, 2147483648
  %v1684 = vmul.f32 %v1683, 1.442695
  %v1685 = vpow.pop %v1684
  %v1686 = vadd.f32 %v1685, 1.0
  %v1687 = vrcp.pop %v1686
  %v1688 = vmul.f32 1.0, %v1687
  %v1689 = vtanh.pop %v1682
  %v1690 = vmul.f32 %v1688, %v1422
  %1692 = vrot.lane.b32.xlu0 %v1689, 32
  %v1693 = vpop.permute.xlu0 %1692
  %v1695 = vmul.f32 %v1688, %v1693
  %1697 = vrot.lane.b32.xlu0 %v1695, 32
  %v1698 = vpop.permute.xlu0 %1697
  %v1700 = vadd.f32 %v1690, %v1698
  %v1701 = vtanh.pop %v1700
  %1703 = vrot.lane.b32.xlu0 %v1701, 32
  %v1704 = vpop.permute.xlu0 %1703
  %v1706 = vmul.f32 %v1688, %v1704
  %v1707 = vsel %vm1530, 1, 0
  %1708 = vset.pattern.permute.xlu0 0
  %1709 = vperm.xlu0 %1708, %v1707
  %v1710 = vpop.permute.xlu0 %1709
  %vm1711 = vcmp.eq.s32.totalorder %v1710, 1
  %v1712 = vsel %vm1711, %v1706, %v1421
  %v1713 = vsel %vm1711, %v1700, %v1422
  %1715 = vrot.lane.b32.xlu0 %v1706, 64
  %v1716 = vpop.permute.xlu0 %1715
  %v1717 = vsel %vm65, %v1716, 0
  %1719 = vmatprep.subr.mxu0 0.0
  %1720 = vmatpush1.msra.mxu0 %v42
  %1721 = vmatprep.subr.mxu0 0.0
  %1722 = vmatpush1.msra.mxu0 %v43
  %1723 = vmatprep.subr.mxu0 0.0
  %1724 = vmatpush1.msra.mxu0 %v44
  %1725 = vmatprep.subr.mxu0 0.0
  %1726 = vmatpush1.msra.mxu0 %v45
  %1727 = vmatprep.subr.mxu0 0.0
  %1728 = vmatpush1.msra.mxu0 0.0
  %1729 = vmatprep.subr.mxu0 0.0
  %1730 = vmatpush1.msra.mxu0 0.0
  %1731 = vmatprep.subr.mxu0 0.0
  %1732 = vmatpush1.msra.mxu0 0.0
  %1733 = vmatprep.subr.mxu0 0.0
  %1734 = vmatpush1.msra.mxu0 0.0
  %1735 = vmatprep.subr.mxu0 0.0
  %1736 = vmatpush1.msra.mxu0 0.0
  %1737 = vmatprep.subr.mxu0 0.0
  %1738 = vmatpush1.msra.mxu0 0.0
  %1739 = vmatprep.subr.mxu0 0.0
  %1740 = vmatpush1.msra.mxu0 0.0
  %1741 = vmatprep.subr.mxu0 0.0
  %1742 = vmatpush1.msra.mxu0 0.0
  %1743 = vmatprep.subr.mxu0 0.0
  %1744 = vmatpush1.msra.mxu0 0.0
  %1745 = vmatprep.subr.mxu0 0.0
  %1746 = vmatpush1.msra.mxu0 0.0
  %1747 = vmatprep.subr.mxu0 0.0
  %1748 = vmatpush1.msra.mxu0 0.0
  %1749 = vmatprep.subr.mxu0 0.0
  %1750 = vmatpush1.msra.mxu0 0.0
  %1751 = vmatprep.subr.mxu0 0.0
  %1752 = vmatpush1.msra.mxu0 0.0
  %1753 = vmatprep.subr.mxu0 0.0
  %1754 = vmatpush1.msra.mxu0 0.0
  %1755 = vmatprep.subr.mxu0 0.0
  %1756 = vmatpush1.msra.mxu0 0.0
  %1757 = vmatprep.subr.mxu0 0.0
  %1758 = vmatpush1.msra.mxu0 0.0
  %1759 = vmatprep.subr.mxu0 0.0
  %1760 = vmatpush1.msra.mxu0 0.0
  %1761 = vmatprep.subr.mxu0 0.0
  %1762 = vmatpush1.msra.mxu0 0.0
  %1763 = vmatprep.subr.mxu0 0.0
  %1764 = vmatpush1.msra.mxu0 0.0
  %1765 = vmatprep.subr.mxu0 0.0
  %1766 = vmatpush1.msra.mxu0 0.0
  %1767 = vmatprep.subr.mxu0 0.0
  %1768 = vmatpush1.msra.mxu0 0.0
  %1769 = vmatprep.subr.mxu0 0.0
  %1770 = vmatpush1.msra.mxu0 0.0
  %1771 = vmatprep.subr.mxu0 0.0
  %1772 = vmatpush1.msra.mxu0 0.0
  %1773 = vmatprep.subr.mxu0 0.0
  %1774 = vmatpush1.msra.mxu0 0.0
  %1775 = vmatprep.subr.mxu0 0.0
  %1776 = vmatpush1.msra.mxu0 0.0
  %1777 = vmatprep.subr.mxu0 0.0
  %1778 = vmatpush1.msra.mxu0 0.0
  %1779 = vmatprep.subr.mxu0 0.0
  %1780 = vmatpush1.msra.mxu0 0.0
  %1781 = vmatprep.subr.mxu0 0.0
  %1782 = vmatpush1.msra.mxu0 0.0
  %1783 = vmatprep.mubr.f32.mxu0 0.0
  %1784 = vmatmul.mubr.f32.gmra.mrb[0].mxu0 %v1717
  %v1785 = vpop.f32.mrb[0].mxu0
  %v1786 = vadd.f32 %v1603, %v1785
  %v1787 = vpop.f32.mrb[0].mxu0
  %1788 = vdwg.mxu0
  %v1789 = vxor.u32 %v1786, 2147483648
  %v1790 = vmul.f32 %v1789, 1.442695
  %v1791 = vpow.pop %v1790
  %v1792 = vadd.f32 %v1791, 1.0
  %v1793 = vrcp.pop %v1792
  %v1794 = vmul.f32 1.0, %v1793
  %v1795 = vtanh.pop %v1786
  %v1796 = vmul.f32 %v1794, %v1523
  %1798 = vrot.lane.b32.xlu0 %v1795, 32
  %v1799 = vpop.permute.xlu0 %1798
  %v1801 = vmul.f32 %v1794, %v1799
  %1803 = vrot.lane.b32.xlu0 %v1801, 32
  %v1804 = vpop.permute.xlu0 %1803
  %v1806 = vadd.f32 %v1796, %v1804
  %v1807 = vtanh.pop %v1806
  %1809 = vrot.lane.b32.xlu0 %v1807, 32
  %v1810 = vpop.permute.xlu0 %1809
  %v1812 = vmul.f32 %v1794, %v1810
  %v1813 = vsel %vm1711, %v1812, %v1522
  %v1814 = vsel %vm1711, %v1806, %v1523
  %v1815 = vsel %vm1711, %v1812, 0.0
  %1817 = vrot.lane.b32.xlu0 %v1815, 64
  %v1818 = vpop.permute.xlu0 %1817
  %1820 = vst.msk [vmem:[#allocation2 + $0x28] sm:$0xff] %vm65, %v1818
  %vm1821 = vcmp.gt.s32.totalorder %v51, 6
  %1823 = vrot.lane.b32.xlu0 %v1813, 64
  %v1824 = vpop.permute.xlu0 %1823
  %v1825 = vsel %vm65, %v1824, 0
  %1827 = vmatprep.subr.mxu0 0.0
  %1828 = vmatpush1.msra.mxu0 %v46
  %1829 = vmatprep.subr.mxu0 0.0
  %1830 = vmatpush1.msra.mxu0 %v47
  %1831 = vmatprep.subr.mxu0 0.0
  %1832 = vmatpush1.msra.mxu0 %v48
  %1833 = vmatprep.subr.mxu0 0.0
  %1834 = vmatpush1.msra.mxu0 %v49
  %1835 = vmatprep.subr.mxu0 0.0
  %1836 = vmatpush1.msra.mxu0 0.0
  %1837 = vmatprep.subr.mxu0 0.0
  %1838 = vmatpush1.msra.mxu0 0.0
  %1839 = vmatprep.subr.mxu0 0.0
  %1840 = vmatpush1.msra.mxu0 0.0
  %1841 = vmatprep.subr.mxu0 0.0
  %1842 = vmatpush1.msra.mxu0 0.0
  %1843 = vmatprep.subr.mxu0 0.0
  %1844 = vmatpush1.msra.mxu0 0.0
  %1845 = vmatprep.subr.mxu0 0.0
  %1846 = vmatpush1.msra.mxu0 0.0
  %1847 = vmatprep.subr.mxu0 0.0
  %1848 = vmatpush1.msra.mxu0 0.0
  %1849 = vmatprep.subr.mxu0 0.0
  %1850 = vmatpush1.msra.mxu0 0.0
  %1851 = vmatprep.subr.mxu0 0.0
  %1852 = vmatpush1.msra.mxu0 0.0
  %1853 = vmatprep.subr.mxu0 0.0
  %1854 = vmatpush1.msra.mxu0 0.0
  %1855 = vmatprep.subr.mxu0 0.0
  %1856 = vmatpush1.msra.mxu0 0.0
  %1857 = vmatprep.subr.mxu0 0.0
  %1858 = vmatpush1.msra.mxu0 0.0
  %1859 = vmatprep.subr.mxu0 0.0
  %1860 = vmatpush1.msra.mxu0 0.0
  %1861 = vmatprep.subr.mxu0 0.0
  %1862 = vmatpush1.msra.mxu0 0.0
  %1863 = vmatprep.subr.mxu0 0.0
  %1864 = vmatpush1.msra.mxu0 0.0
  %1865 = vmatprep.subr.mxu0 0.0
  %1866 = vmatpush1.msra.mxu0 0.0
  %1867 = vmatprep.subr.mxu0 0.0
  %1868 = vmatpush1.msra.mxu0 0.0
  %1869 = vmatprep.subr.mxu0 0.0
  %1870 = vmatpush1.msra.mxu0 0.0
  %1871 = vmatprep.subr.mxu0 0.0
  %1872 = vmatpush1.msra.mxu0 0.0
  %1873 = vmatprep.subr.mxu0 0.0
  %1874 = vmatpush1.msra.mxu0 0.0
  %1875 = vmatprep.subr.mxu0 0.0
  %1876 = vmatpush1.msra.mxu0 0.0
  %1877 = vmatprep.subr.mxu0 0.0
  %1878 = vmatpush1.msra.mxu0 0.0
  %1879 = vmatprep.subr.mxu0 0.0
  %1880 = vmatpush1.msra.mxu0 0.0
  %1881 = vmatprep.subr.mxu0 0.0
  %1882 = vmatpush1.msra.mxu0 0.0
  %1883 = vmatprep.subr.mxu0 0.0
  %1884 = vmatpush1.msra.mxu0 0.0
  %1885 = vmatprep.subr.mxu0 0.0
  %1886 = vmatpush1.msra.mxu0 0.0
  %1887 = vmatprep.subr.mxu0 0.0
  %1888 = vmatpush1.msra.mxu0 0.0
  %1889 = vmatprep.subr.mxu0 0.0
  %1890 = vmatpush1.msra.mxu0 0.0
  %1891 = vmatprep.mubr.f32.mxu0 0.0
  %1892 = vmatmul.mubr.f32.gmra.mrb[0].mxu0 %v1825
  %v1893 = vpop.f32.mrb[0].mxu0
  %v1894 = vadd.f32 %v63, %v1893
  %v1895 = vpop.f32.mrb[0].mxu0
  %1896 = vdwg.mxu0
  %v1897 = vld [vmem:[%s0 + $0x30] sm:$0xff]
  %1899 = vrot.lane.b32.xlu0 %v1712, 64
  %v1900 = vpop.permute.xlu0 %1899
  %v1901 = vsel %vm65, %v1900, 0
  %1903 = vmatprep.subr.mxu0 0.0
  %1904 = vmatpush1.msra.mxu0 %v38
  %1905 = vmatprep.subr.mxu0 0.0
  %1906 = vmatpush1.msra.mxu0 %v39
  %1907 = vmatprep.subr.mxu0 0.0
  %1908 = vmatpush1.msra.mxu0 %v40
  %1909 = vmatprep.subr.mxu0 0.0
  %1910 = vmatpush1.msra.mxu0 %v41
  %1911 = vmatprep.subr.mxu0 0.0
  %1912 = vmatpush1.msra.mxu0 0.0
  %1913 = vmatprep.subr.mxu0 0.0
  %1914 = vmatpush1.msra.mxu0 0.0
  %1915 = vmatprep.subr.mxu0 0.0
  %1916 = vmatpush1.msra.mxu0 0.0
  %1917 = vmatprep.subr.mxu0 0.0
  %1918 = vmatpush1.msra.mxu0 0.0
  %1919 = vmatprep.subr.mxu0 0.0
  %1920 = vmatpush1.msra.mxu0 0.0
  %1921 = vmatprep.subr.mxu0 0.0
  %1922 = vmatpush1.msra.mxu0 0.0
  %1923 = vmatprep.subr.mxu0 0.0
  %1924 = vmatpush1.msra.mxu0 0.0
  %1925 = vmatprep.subr.mxu0 0.0
  %1926 = vmatpush1.msra.mxu0 0.0
  %1927 = vmatprep.subr.mxu0 0.0
  %1928 = vmatpush1.msra.mxu0 0.0
  %1929 = vmatprep.subr.mxu0 0.0
  %1930 = vmatpush1.msra.mxu0 0.0
  %1931 = vmatprep.subr.mxu0 0.0
  %1932 = vmatpush1.msra.mxu0 0.0
  %1933 = vmatprep.subr.mxu0 0.0
  %1934 = vmatpush1.msra.mxu0 0.0
  %1935 = vmatprep.subr.mxu0 0.0
  %1936 = vmatpush1.msra.mxu0 0.0
  %1937 = vmatprep.subr.mxu0 0.0
  %1938 = vmatpush1.msra.mxu0 0.0
  %1939 = vmatprep.subr.mxu0 0.0
  %1940 = vmatpush1.msra.mxu0 0.0
  %1941 = vmatprep.subr.mxu0 0.0
  %1942 = vmatpush1.msra.mxu0 0.0
  %1943 = vmatprep.subr.mxu0 0.0
  %1944 = vmatpush1.msra.mxu0 0.0
  %1945 = vmatprep.subr.mxu0 0.0
  %1946 = vmatpush1.msra.mxu0 0.0
  %1947 = vmatprep.subr.mxu0 0.0
  %1948 = vmatpush1.msra.mxu0 0.0
  %1949 = vmatprep.subr.mxu0 0.0
  %1950 = vmatpush1.msra.mxu0 0.0
  %1951 = vmatprep.subr.mxu0 0.0
  %1952 = vmatpush1.msra.mxu0 0.0
  %1953 = vmatprep.subr.mxu0 0.0
  %1954 = vmatpush1.msra.mxu0 0.0
  %1955 = vmatprep.subr.mxu0 0.0
  %1956 = vmatpush1.msra.mxu0 0.0
  %1957 = vmatprep.subr.mxu0 0.0
  %1958 = vmatpush1.msra.mxu0 0.0
  %1959 = vmatprep.subr.mxu0 0.0
  %1960 = vmatpush1.msra.mxu0 0.0
  %1961 = vmatprep.subr.mxu0 0.0
  %1962 = vmatpush1.msra.mxu0 0.0
  %1963 = vmatprep.subr.mxu0 0.0
  %1964 = vmatpush1.msra.mxu0 0.0
  %1965 = vmatprep.subr.mxu0 0.0
  %1966 = vmatpush1.msra.mxu0 0.0
  %1967 = vmatprep.mubr.f32.mxu0 0.0
  %1968 = vmatmul.mubr.f32.gmra.mrb[0].mxu0 %v1901
  %v1969 = vpop.f32.mrb[0].mxu0
  %v1970 = vadd.f32 0.0, %v1969
  %v1971 = vpop.f32.mrb[0].mxu0
  %1972 = vdwg.mxu0
  %v1973 = vadd.f32 %v1897, %v1970
  %v1974 = vxor.u32 %v1973, 2147483648
  %v1975 = vmul.f32 %v1974, 1.442695
  %v1976 = vpow.pop %v1975
  %v1977 = vadd.f32 %v1976, 1.0
  %v1978 = vrcp.pop %v1977
  %v1979 = vmul.f32 1.0, %v1978
  %v1980 = vtanh.pop %v1973
  %v1981 = vmul.f32 %v1979, %v1713
  %1983 = vrot.lane.b32.xlu0 %v1980, 32
  %v1984 = vpop.permute.xlu0 %1983
  %v1986 = vmul.f32 %v1979, %v1984
  %1988 = vrot.lane.b32.xlu0 %v1986, 32
  %v1989 = vpop.permute.xlu0 %1988
  %v1991 = vadd.f32 %v1981, %v1989
  %v1992 = vtanh.pop %v1991
  %1994 = vrot.lane.b32.xlu0 %v1992, 32
  %v1995 = vpop.permute.xlu0 %1994
  %v1997 = vmul.f32 %v1979, %v1995
  %v1998 = vsel %vm1821, 1, 0
  %1999 = vset.pattern.permute.xlu0 0
  %2000 = vperm.xlu0 %1999, %v1998
  %v2001 = vpop.permute.xlu0 %2000
  %vm2002 = vcmp.eq.s32.totalorder %v2001, 1
  %v2003 = vsel %vm2002, %v1997, %v1712
  %v2004 = vsel %vm2002, %v1991, %v1713
  %2006 = vrot.lane.b32.xlu0 %v1997, 64
  %v2007 = vpop.permute.xlu0 %2006
  %v2008 = vsel %vm65, %v2007, 0
  %2010 = vmatprep.subr.mxu0 0.0
  %2011 = vmatpush1.msra.mxu0 %v42
  %2012 = vmatprep.subr.mxu0 0.0
  %2013 = vmatpush1.msra.mxu0 %v43
  %2014 = vmatprep.subr.mxu0 0.0
  %2015 = vmatpush1.msra.mxu0 %v44
  %2016 = vmatprep.subr.mxu0 0.0
  %2017 = vmatpush1.msra.mxu0 %v45
  %2018 = vmatprep.subr.mxu0 0.0
  %2019 = vmatpush1.msra.mxu0 0.0
  %2020 = vmatprep.subr.mxu0 0.0
  %2021 = vmatpush1.msra.mxu0 0.0
  %2022 = vmatprep.subr.mxu0 0.0
  %2023 = vmatpush1.msra.mxu0 0.0
  %2024 = vmatprep.subr.mxu0 0.0
  %2025 = vmatpush1.msra.mxu0 0.0
  %2026 = vmatprep.subr.mxu0 0.0
  %2027 = vmatpush1.msra.mxu0 0.0
  %2028 = vmatprep.subr.mxu0 0.0
  %2029 = vmatpush1.msra.mxu0 0.0
  %2030 = vmatprep.subr.mxu0 0.0
  %2031 = vmatpush1.msra.mxu0 0.0
  %2032 = vmatprep.subr.mxu0 0.0
  %2033 = vmatpush1.msra.mxu0 0.0
  %2034 = vmatprep.subr.mxu0 0.0
  %2035 = vmatpush1.msra.mxu0 0.0
  %2036 = vmatprep.subr.mxu0 0.0
  %2037 = vmatpush1.msra.mxu0 0.0
  %2038 = vmatprep.subr.mxu0 0.0
  %2039 = vmatpush1.msra.mxu0 0.0
  %2040 = vmatprep.subr.mxu0 0.0
  %2041 = vmatpush1.msra.mxu0 0.0
  %2042 = vmatprep.subr.mxu0 0.0
  %2043 = vmatpush1.msra.mxu0 0.0
  %2044 = vmatprep.subr.mxu0 0.0
  %2045 = vmatpush1.msra.mxu0 0.0
  %2046 = vmatprep.subr.mxu0 0.0
  %2047 = vmatpush1.msra.mxu0 0.0
  %2048 = vmatprep.subr.mxu0 0.0
  %2049 = vmatpush1.msra.mxu0 0.0
  %2050 = vmatprep.subr.mxu0 0.0
  %2051 = vmatpush1.msra.mxu0 0.0
  %2052 = vmatprep.subr.mxu0 0.0
  %2053 = vmatpush1.msra.mxu0 0.0
  %2054 = vmatprep.subr.mxu0 0.0
  %2055 = vmatpush1.msra.mxu0 0.0
  %2056 = vmatprep.subr.mxu0 0.0
  %2057 = vmatpush1.msra.mxu0 0.0
  %2058 = vmatprep.subr.mxu0 0.0
  %2059 = vmatpush1.msra.mxu0 0.0
  %2060 = vmatprep.subr.mxu0 0.0
  %2061 = vmatpush1.msra.mxu0 0.0
  %2062 = vmatprep.subr.mxu0 0.0
  %2063 = vmatpush1.msra.mxu0 0.0
  %2064 = vmatprep.subr.mxu0 0.0
  %2065 = vmatpush1.msra.mxu0 0.0
  %2066 = vmatprep.subr.mxu0 0.0
  %2067 = vmatpush1.msra.mxu0 0.0
  %2068 = vmatprep.subr.mxu0 0.0
  %2069 = vmatpush1.msra.mxu0 0.0
  %2070 = vmatprep.subr.mxu0 0.0
  %2071 = vmatpush1.msra.mxu0 0.0
  %2072 = vmatprep.subr.mxu0 0.0
  %2073 = vmatpush1.msra.mxu0 0.0
  %2074 = vmatprep.mubr.f32.mxu0 0.0
  %2075 = vmatmul.mubr.f32.gmra.mrb[0].mxu0 %v2008
  %v2076 = vpop.f32.mrb[0].mxu0
  %v2077 = vadd.f32 %v1894, %v2076
  %v2078 = vpop.f32.mrb[0].mxu0
  %2079 = vdwg.mxu0
  %v2080 = vxor.u32 %v2077, 2147483648
  %v2081 = vmul.f32 %v2080, 1.442695
  %v2082 = vpow.pop %v2081
  %v2083 = vadd.f32 %v2082, 1.0
  %v2084 = vrcp.pop %v2083
  %v2085 = vmul.f32 1.0, %v2084
  %v2086 = vtanh.pop %v2077
  %v2087 = vmul.f32 %v2085, %v1814
  %2089 = vrot.lane.b32.xlu0 %v2086, 32
  %v2090 = vpop.permute.xlu0 %2089
  %v2092 = vmul.f32 %v2085, %v2090
  %2094 = vrot.lane.b32.xlu0 %v2092, 32
  %v2095 = vpop.permute.xlu0 %2094
  %v2097 = vadd.f32 %v2087, %v2095
  %v2098 = vtanh.pop %v2097
  %2100 = vrot.lane.b32.xlu0 %v2098, 32
  %v2101 = vpop.permute.xlu0 %2100
  %v2103 = vmul.f32 %v2085, %v2101
  %v2104 = vsel %vm2002, %v2103, %v1813
  %v2105 = vsel %vm2002, %v2097, %v1814
  %v2106 = vsel %vm2002, %v2103, 0.0
  %2108 = vrot.lane.b32.xlu0 %v2106, 64
  %v2109 = vpop.permute.xlu0 %2108
  %2111 = vst.msk [vmem:[#allocation2 + $0x30] sm:$0xff] %vm65, %v2109
  %vm2112 = vcmp.gt.s32.totalorder %v51, 7
  %2114 = vrot.lane.b32.xlu0 %v2104, 64
  %v2115 = vpop.permute.xlu0 %2114
  %v2116 = vsel %vm65, %v2115, 0
  %2118 = vmatprep.subr.mxu0 0.0
  %2119 = vmatpush1.msra.mxu0 %v46
  %2120 = vmatprep.subr.mxu0 0.0
  %2121 = vmatpush1.msra.mxu0 %v47
  %2122 = vmatprep.subr.mxu0 0.0
  %2123 = vmatpush1.msra.mxu0 %v48
  %2124 = vmatprep.subr.mxu0 0.0
  %2125 = vmatpush1.msra.mxu0 %v49
  %2126 = vmatprep.subr.mxu0 0.0
  %2127 = vmatpush1.msra.mxu0 0.0
  %2128 = vmatprep.subr.mxu0 0.0
  %2129 = vmatpush1.msra.mxu0 0.0
  %2130 = vmatprep.subr.mxu0 0.0
  %2131 = vmatpush1.msra.mxu0 0.0
  %2132 = vmatprep.subr.mxu0 0.0
  %2133 = vmatpush1.msra.mxu0 0.0
  %2134 = vmatprep.subr.mxu0 0.0
  %2135 = vmatpush1.msra.mxu0 0.0
  %2136 = vmatprep.subr.mxu0 0.0
  %2137 = vmatpush1.msra.mxu0 0.0
  %2138 = vmatprep.subr.mxu0 0.0
  %2139 = vmatpush1.msra.mxu0 0.0
  %2140 = vmatprep.subr.mxu0 0.0
  %2141 = vmatpush1.msra.mxu0 0.0
  %2142 = vmatprep.subr.mxu0 0.0
  %2143 = vmatpush1.msra.mxu0 0.0
  %2144 = vmatprep.subr.mxu0 0.0
  %2145 = vmatpush1.msra.mxu0 0.0
  %2146 = vmatprep.subr.mxu0 0.0
  %2147 = vmatpush1.msra.mxu0 0.0
  %2148 = vmatprep.subr.mxu0 0.0
  %2149 = vmatpush1.msra.mxu0 0.0
  %2150 = vmatprep.subr.mxu0 0.0
  %2151 = vmatpush1.msra.mxu0 0.0
  %2152 = vmatprep.subr.mxu0 0.0
  %2153 = vmatpush1.msra.mxu0 0.0
  %2154 = vmatprep.subr.mxu0 0.0
  %2155 = vmatpush1.msra.mxu0 0.0
  %2156 = vmatprep.subr.mxu0 0.0
  %2157 = vmatpush1.msra.mxu0 0.0
  %2158 = vmatprep.subr.mxu0 0.0
  %2159 = vmatpush1.msra.mxu0 0.0
  %2160 = vmatprep.subr.mxu0 0.0
  %2161 = vmatpush1.msra.mxu0 0.0
  %2162 = vmatprep.subr.mxu0 0.0
  %2163 = vmatpush1.msra.mxu0 0.0
  %2164 = vmatprep.subr.mxu0 0.0
  %2165 = vmatpush1.msra.mxu0 0.0
  %2166 = vmatprep.subr.mxu0 0.0
  %2167 = vmatpush1.msra.mxu0 0.0
  %2168 = vmatprep.subr.mxu0 0.0
  %2169 = vmatpush1.msra.mxu0 0.0
  %2170 = vmatprep.subr.mxu0 0.0
  %2171 = vmatpush1.msra.mxu0 0.0
  %2172 = vmatprep.subr.mxu0 0.0
  %2173 = vmatpush1.msra.mxu0 0.0
  %2174 = vmatprep.subr.mxu0 0.0
  %2175 = vmatpush1.msra.mxu0 0.0
  %2176 = vmatprep.subr.mxu0 0.0
  %2177 = vmatpush1.msra.mxu0 0.0
  %2178 = vmatprep.subr.mxu0 0.0
  %2179 = vmatpush1.msra.mxu0 0.0
  %2180 = vmatprep.subr.mxu0 0.0
  %2181 = vmatpush1.msra.mxu0 0.0
  %2182 = vmatprep.mubr.f32.mxu0 0.0
  %2183 = vmatmul.mubr.f32.gmra.mrb[0].mxu0 %v2116
  %v2184 = vpop.f32.mrb[0].mxu0
  %v2185 = vadd.f32 %v63, %v2184
  %v2186 = vpop.f32.mrb[0].mxu0
  %2187 = vdwg.mxu0
  %v2188 = vld [vmem:[%s0 + $0x38] sm:$0xff]
  %2190 = vrot.lane.b32.xlu0 %v2003, 64
  %v2191 = vpop.permute.xlu0 %2190
  %v2192 = vsel %vm65, %v2191, 0
  %2194 = vmatprep.subr.mxu0 0.0
  %2195 = vmatpush1.msra.mxu0 %v38
  %2196 = vmatprep.subr.mxu0 0.0
  %2197 = vmatpush1.msra.mxu0 %v39
  %2198 = vmatprep.subr.mxu0 0.0
  %2199 = vmatpush1.msra.mxu0 %v40
  %2200 = vmatprep.subr.mxu0 0.0
  %2201 = vmatpush1.msra.mxu0 %v41
  %2202 = vmatprep.subr.mxu0 0.0
  %2203 = vmatpush1.msra.mxu0 0.0
  %2204 = vmatprep.subr.mxu0 0.0
  %2205 = vmatpush1.msra.mxu0 0.0
  %2206 = vmatprep.subr.mxu0 0.0
  %2207 = vmatpush1.msra.mxu0 0.0
  %2208 = vmatprep.subr.mxu0 0.0
  %2209 = vmatpush1.msra.mxu0 0.0
  %2210 = vmatprep.subr.mxu0 0.0
  %2211 = vmatpush1.msra.mxu0 0.0
  %2212 = vmatprep.subr.mxu0 0.0
  %2213 = vmatpush1.msra.mxu0 0.0
  %2214 = vmatprep.subr.mxu0 0.0
  %2215 = vmatpush1.msra.mxu0 0.0
  %2216 = vmatprep.subr.mxu0 0.0
  %2217 = vmatpush1.msra.mxu0 0.0
  %2218 = vmatprep.subr.mxu0 0.0
  %2219 = vmatpush1.msra.mxu0 0.0
  %2220 = vmatprep.subr.mxu0 0.0
  %2221 = vmatpush1.msra.mxu0 0.0
  %2222 = vmatprep.subr.mxu0 0.0
  %2223 = vmatpush1.msra.mxu0 0.0
  %2224 = vmatprep.subr.mxu0 0.0
  %2225 = vmatpush1.msra.mxu0 0.0
  %2226 = vmatprep.subr.mxu0 0.0
  %2227 = vmatpush1.msra.mxu0 0.0
  %2228 = vmatprep.subr.mxu0 0.0
  %2229 = vmatpush1.msra.mxu0 0.0
  %2230 = vmatprep.subr.mxu0 0.0
  %2231 = vmatpush1.msra.mxu0 0.0
  %2232 = vmatprep.subr.mxu0 0.0
  %2233 = vmatpush1.msra.mxu0 0.0
  %2234 = vmatprep.subr.mxu0 0.0
  %2235 = vmatpush1.msra.mxu0 0.0
  %2236 = vmatprep.subr.mxu0 0.0
  %2237 = vmatpush1.msra.mxu0 0.0
  %2238 = vmatprep.subr.mxu0 0.0
  %2239 = vmatpush1.msra.mxu0 0.0
  %2240 = vmatprep.subr.mxu0 0.0
  %2241 = vmatpush1.msra.mxu0 0.0
  %2242 = vmatprep.subr.mxu0 0.0
  %2243 = vmatpush1.msra.mxu0 0.0
  %2244 = vmatprep.subr.mxu0 0.0
  %2245 = vmatpush1.msra.mxu0 0.0
  %2246 = vmatprep.subr.mxu0 0.0
  %2247 = vmatpush1.msra.mxu0 0.0
  %2248 = vmatprep.subr.mxu0 0.0
  %2249 = vmatpush1.msra.mxu0 0.0
  %2250 = vmatprep.subr.mxu0 0.0
  %2251 = vmatpush1.msra.mxu0 0.0
  %2252 = vmatprep.subr.mxu0 0.0
  %2253 = vmatpush1.msra.mxu0 0.0
  %2254 = vmatprep.subr.mxu0 0.0
  %2255 = vmatpush1.msra.mxu0 0.0
  %2256 = vmatprep.subr.mxu0 0.0
  %2257 = vmatpush1.msra.mxu0 0.0
  %2258 = vmatprep.mubr.f32.mxu0 0.0
  %2259 = vmatmul.mubr.f32.gmra.mrb[0].mxu0 %v2192
  %v2260 = vpop.f32.mrb[0].mxu0
  %v2261 = vadd.f32 0.0, %v2260
  %v2262 = vpop.f32.mrb[0].mxu0
  %2263 = vdwg.mxu0
  %v2264 = vadd.f32 %v2188, %v2261
  %v2265 = vxor.u32 %v2264, 2147483648
  %v2266 = vmul.f32 %v2265, 1.442695
  %v2267 = vpow.pop %v2266
  %v2268 = vadd.f32 %v2267, 1.0
  %v2269 = vrcp.pop %v2268
  %v2270 = vmul.f32 1.0, %v2269
  %v2271 = vtanh.pop %v2264
  %v2272 = vmul.f32 %v2270, %v2004
  %2274 = vrot.lane.b32.xlu0 %v2271, 32
  %v2275 = vpop.permute.xlu0 %2274
  %v2277 = vmul.f32 %v2270, %v2275
  %2279 = vrot.lane.b32.xlu0 %v2277, 32
  %v2280 = vpop.permute.xlu0 %2279
  %v2282 = vadd.f32 %v2272, %v2280
  %v2283 = vtanh.pop %v2282
  %2285 = vrot.lane.b32.xlu0 %v2283, 32
  %v2286 = vpop.permute.xlu0 %2285
  %v2288 = vmul.f32 %v2270, %v2286
  %v2289 = vsel %vm2112, 1, 0
  %2290 = vset.pattern.permute.xlu0 0
  %2291 = vperm.xlu0 %2290, %v2289
  %v2292 = vpop.permute.xlu0 %2291
  %vm2293 = vcmp.eq.s32.totalorder %v2292, 1
  %v2294 = vsel %vm2293, %v2288, %v2003
  %v2295 = vsel %vm2293, %v2282, %v2004
  %2297 = vrot.lane.b32.xlu0 %v2288, 64
  %v2298 = vpop.permute.xlu0 %2297
  %v2299 = vsel %vm65, %v2298, 0
  %2301 = vmatprep.subr.mxu0 0.0
  %2302 = vmatpush1.msra.mxu0 %v42
  %2303 = vmatprep.subr.mxu0 0.0
  %2304 = vmatpush1.msra.mxu0 %v43
  %2305 = vmatprep.subr.mxu0 0.0
  %2306 = vmatpush1.msra.mxu0 %v44
  %2307 = vmatprep.subr.mxu0 0.0
  %2308 = vmatpush1.msra.mxu0 %v45
  %2309 = vmatprep.subr.mxu0 0.0
  %2310 = vmatpush1.msra.mxu0 0.0
  %2311 = vmatprep.subr.mxu0 0.0
  %2312 = vmatpush1.msra.mxu0 0.0
  %2313 = vmatprep.subr.mxu0 0.0
  %2314 = vmatpush1.msra.mxu0 0.0
  %2315 = vmatprep.subr.mxu0 0.0
  %2316 = vmatpush1.msra.mxu0 0.0
  %2317 = vmatprep.subr.mxu0 0.0
  %2318 = vmatpush1.msra.mxu0 0.0
  %2319 = vmatprep.subr.mxu0 0.0
  %2320 = vmatpush1.msra.mxu0 0.0
  %2321 = vmatprep.subr.mxu0 0.0
  %2322 = vmatpush1.msra.mxu0 0.0
  %2323 = vmatprep.subr.mxu0 0.0
  %2324 = vmatpush1.msra.mxu0 0.0
  %2325 = vmatprep.subr.mxu0 0.0
  %2326 = vmatpush1.msra.mxu0 0.0
  %2327 = vmatprep.subr.mxu0 0.0
  %2328 = vmatpush1.msra.mxu0 0.0
  %2329 = vmatprep.subr.mxu0 0.0
  %2330 = vmatpush1.msra.mxu0 0.0
  %2331 = vmatprep.subr.mxu0 0.0
  %2332 = vmatpush1.msra.mxu0 0.0
  %2333 = vmatprep.subr.mxu0 0.0
  %2334 = vmatpush1.msra.mxu0 0.0
  %2335 = vmatprep.subr.mxu0 0.0
  %2336 = vmatpush1.msra.mxu0 0.0
  %2337 = vmatprep.subr.mxu0 0.0
  %2338 = vmatpush1.msra.mxu0 0.0
  %2339 = vmatprep.subr.mxu0 0.0
  %2340 = vmatpush1.msra.mxu0 0.0
  %2341 = vmatprep.subr.mxu0 0.0
  %2342 = vmatpush1.msra.mxu0 0.0
  %2343 = vmatprep.subr.mxu0 0.0
  %2344 = vmatpush1.msra.mxu0 0.0
  %2345 = vmatprep.subr.mxu0 0.0
  %2346 = vmatpush1.msra.mxu0 0.0
  %2347 = vmatprep.subr.mxu0 0.0
  %2348 = vmatpush1.msra.mxu0 0.0
  %2349 = vmatprep.subr.mxu0 0.0
  %2350 = vmatpush1.msra.mxu0 0.0
  %2351 = vmatprep.subr.mxu0 0.0
  %2352 = vmatpush1.msra.mxu0 0.0
  %2353 = vmatprep.subr.mxu0 0.0
  %2354 = vmatpush1.msra.mxu0 0.0
  %2355 = vmatprep.subr.mxu0 0.0
  %2356 = vmatpush1.msra.mxu0 0.0
  %2357 = vmatprep.subr.mxu0 0.0
  %2358 = vmatpush1.msra.mxu0 0.0
  %2359 = vmatprep.subr.mxu0 0.0
  %2360 = vmatpush1.msra.mxu0 0.0
  %2361 = vmatprep.subr.mxu0 0.0
  %2362 = vmatpush1.msra.mxu0 0.0
  %2363 = vmatprep.subr.mxu0 0.0
  %2364 = vmatpush1.msra.mxu0 0.0
  %2365 = vmatprep.mubr.f32.mxu0 0.0
  %2366 = vmatmul.mubr.f32.gmra.mrb[0].mxu0 %v2299
  %v2367 = vpop.f32.mrb[0].mxu0
  %v2368 = vadd.f32 %v2185, %v2367
  %v2369 = vpop.f32.mrb[0].mxu0
  %2370 = vdwg.mxu0
  %v2371 = vxor.u32 %v2368, 2147483648
  %v2372 = vmul.f32 %v2371, 1.442695
  %v2373 = vpow.pop %v2372
  %v2374 = vadd.f32 %v2373, 1.0
  %v2375 = vrcp.pop %v2374
  %v2376 = vmul.f32 1.0, %v2375
  %v2377 = vtanh.pop %v2368
  %v2378 = vmul.f32 %v2376, %v2105
  %2380 = vrot.lane.b32.xlu0 %v2377, 32
  %v2381 = vpop.permute.xlu0 %2380
  %v2383 = vmul.f32 %v2376, %v2381
  %2385 = vrot.lane.b32.xlu0 %v2383, 32
  %v2386 = vpop.permute.xlu0 %2385
  %v2388 = vadd.f32 %v2378, %v2386
  %v2389 = vtanh.pop %v2388
  %2391 = vrot.lane.b32.xlu0 %v2389, 32
  %v2392 = vpop.permute.xlu0 %2391
  %v2394 = vmul.f32 %v2376, %v2392
  %v2395 = vsel %vm2293, %v2394, %v2104
  %v2396 = vsel %vm2293, %v2388, %v2105
  %v2397 = vsel %vm2293, %v2394, 0.0
  %2399 = vrot.lane.b32.xlu0 %v2397, 64
  %v2400 = vpop.permute.xlu0 %2399
  %2402 = vst.msk [vmem:[#allocation2 + $0x38] sm:$0xff] %vm65, %v2400
  %v2403 = vld [vmem:[#allocation2] sm:$0xff]
  %v2404 = vld [vmem:[#allocation2 + $0x8] sm:$0xff]
  %v2405 = vld [vmem:[#allocation2 + $0x10] sm:$0xff]
  %v2406 = vld [vmem:[#allocation2 + $0x18] sm:$0xff]
  %v2407 = vld [vmem:[#allocation2 + $0x20] sm:$0xff]
  %v2408 = vld [vmem:[#allocation2 + $0x28] sm:$0xff]
  %v2409 = vld [vmem:[#allocation2 + $0x30] sm:$0xff]
  %v2410 = vld [vmem:[#allocation2 + $0x38] sm:$0xff]
  %v2411 = vld [vmem:[%s8] sm:$0xff]
  %v2412 = vld [vmem:[%s8 + $0x8] sm:$0xff]
  %v2413 = vld [vmem:[%s8 + $0x10] sm:$0xff]
  %v2414 = vld [vmem:[%s8 + $0x18] sm:$0xff]
  %v2415 = vld [vmem:[%s9] sm:$0x1]
  %v2417 = vlaneseq
  %v2418 = vshrl.u32 %v2417, 7
  %v2419 = vsub.s32 0, %v2418
  %v2420 = vrot.slane %v2415, %v2419
  %v2423 = vsel %vm65, %v2403, 0
  %v2426 = vsel %vm65, %v2404, 0
  %v2429 = vsel %vm65, %v2405, 0
  %v2432 = vsel %vm65, %v2406, 0
  %v2435 = vsel %vm65, %v2407, 0
  %v2438 = vsel %vm65, %v2408, 0
  %v2441 = vsel %vm65, %v2409, 0
  %v2444 = vsel %vm65, %v2410, 0
  %2446 = vmatprep.subr.mxu0 0.0
  %2447 = vmatpush1.msra.mxu0 %v2411
  %2448 = vmatprep.subr.mxu0 0.0
  %2449 = vmatpush1.msra.mxu0 %v2412
  %2450 = vmatprep.subr.mxu0 0.0
  %2451 = vmatpush1.msra.mxu0 %v2413
  %2452 = vmatprep.subr.mxu0 0.0
  %2453 = vmatpush1.msra.mxu0 %v2414
  %2454 = vmatprep.subr.mxu0 0.0
  %2455 = vmatpush1.msra.mxu0 0.0
  %2456 = vmatprep.subr.mxu0 0.0
  %2457 = vmatpush1.msra.mxu0 0.0
  %2458 = vmatprep.subr.mxu0 0.0
  %2459 = vmatpush1.msra.mxu0 0.0
  %2460 = vmatprep.subr.mxu0 0.0
  %2461 = vmatpush1.msra.mxu0 0.0
  %2462 = vmatprep.subr.mxu0 0.0
  %2463 = vmatpush1.msra.mxu0 0.0
  %2464 = vmatprep.subr.mxu0 0.0
  %2465 = vmatpush1.msra.mxu0 0.0
  %2466 = vmatprep.subr.mxu0 0.0
  %2467 = vmatpush1.msra.mxu0 0.0
  %2468 = vmatprep.subr.mxu0 0.0
  %2469 = vmatpush1.msra.mxu0 0.0
  %2470 = vmatprep.subr.mxu0 0.0
  %2471 = vmatpush1.msra.mxu0 0.0
  %2472 = vmatprep.subr.mxu0 0.0
  %2473 = vmatpush1.msra.mxu0 0.0
  %2474 = vmatprep.subr.mxu0 0.0
  %2475 = vmatpush1.msra.mxu0 0.0
  %2476 = vmatprep.subr.mxu0 0.0
  %2477 = vmatpush1.msra.mxu0 0.0
  %2478 = vmatprep.subr.mxu0 0.0
  %2479 = vmatpush1.msra.mxu0 0.0
  %2480 = vmatprep.subr.mxu0 0.0
  %2481 = vmatpush1.msra.mxu0 0.0
  %2482 = vmatprep.subr.mxu0 0.0
  %2483 = vmatpush1.msra.mxu0 0.0
  %2484 = vmatprep.subr.mxu0 0.0
  %2485 = vmatpush1.msra.mxu0 0.0
  %2486 = vmatprep.subr.mxu0 0.0
  %2487 = vmatpush1.msra.mxu0 0.0
  %2488 = vmatprep.subr.mxu0 0.0
  %2489 = vmatpush1.msra.mxu0 0.0
  %2490 = vmatprep.subr.mxu0 0.0
  %2491 = vmatpush1.msra.mxu0 0.0
  %2492 = vmatprep.subr.mxu0 0.0
  %2493 = vmatpush1.msra.mxu0 0.0
  %2494 = vmatprep.subr.mxu0 0.0
  %2495 = vmatpush1.msra.mxu0 0.0
  %2496 = vmatprep.subr.mxu0 0.0
  %2497 = vmatpush1.msra.mxu0 0.0
  %2498 = vmatprep.subr.mxu0 0.0
  %2499 = vmatpush1.msra.mxu0 0.0
  %2500 = vmatprep.subr.mxu0 0.0
  %2501 = vmatpush1.msra.mxu0 0.0
  %2502 = vmatprep.subr.mxu0 0.0
  %2503 = vmatpush1.msra.mxu0 0.0
  %2504 = vmatprep.subr.mxu0 0.0
  %2505 = vmatpush1.msra.mxu0 0.0
  %2506 = vmatprep.subr.mxu0 0.0
  %2507 = vmatpush1.msra.mxu0 0.0
  %2508 = vmatprep.subr.mxu0 0.0
  %2509 = vmatpush1.msra.mxu0 0.0
  %2510 = vmatprep.mubr.f32.mxu0 0.0
  %2511 = vmatmul.mubr.f32.gmra.mrb[0].mxu0 %v2423
  %v2512 = vpop.f32.mrb[0].mxu0
  %v2513 = vadd.f32 %v2420, %v2512
  %v2514 = vpop.f32.mrb[0].mxu0
  %2515 = vmatprep.mubr.f32.mxu0 0.0
  %2516 = vmatmul.mubr.f32.gmra.mrb[0].mxu0 %v2426
  %v2517 = vpop.f32.mrb[0].mxu0
  %v2518 = vadd.f32 %v2420, %v2517
  %v2519 = vpop.f32.mrb[0].mxu0
  %2520 = vmatprep.mubr.f32.mxu0 0.0
  %2521 = vmatmul.mubr.f32.gmra.mrb[0].mxu0 %v2429
  %v2522 = vpop.f32.mrb[0].mxu0
  %v2523 = vadd.f32 %v2420, %v2522
  %v2524 = vpop.f32.mrb[0].mxu0
  %2525 = vmatprep.mubr.f32.mxu0 0.0
  %2526 = vmatmul.mubr.f32.gmra.mrb[0].mxu0 %v2432
  %v2527 = vpop.f32.mrb[0].mxu0
  %v2528 = vadd.f32 %v2420, %v2527
  %v2529 = vpop.f32.mrb[0].mxu0
  %2530 = vmatprep.mubr.f32.mxu0 0.0
  %2531 = vmatmul.mubr.f32.gmra.mrb[0].mxu0 %v2435
  %v2532 = vpop.f32.mrb[0].mxu0
  %v2533 = vadd.f32 %v2420, %v2532
  %v2534 = vpop.f32.mrb[0].mxu0
  %2535 = vmatprep.mubr.f32.mxu0 0.0
  %2536 = vmatmul.mubr.f32.gmra.mrb[0].mxu0 %v2438
  %v2537 = vpop.f32.mrb[0].mxu0
  %v2538 = vadd.f32 %v2420, %v2537
  %v2539 = vpop.f32.mrb[0].mxu0
  %2540 = vmatprep.mubr.f32.mxu0 0.0
  %2541 = vmatmul.mubr.f32.gmra.mrb[0].mxu0 %v2441
  %v2542 = vpop.f32.mrb[0].mxu0
  %v2543 = vadd.f32 %v2420, %v2542
  %v2544 = vpop.f32.mrb[0].mxu0
  %2545 = vmatprep.mubr.f32.mxu0 0.0
  %2546 = vmatmul.mubr.f32.gmra.mrb[0].mxu0 %v2444
  %v2547 = vpop.f32.mrb[0].mxu0
  %v2548 = vadd.f32 %v2420, %v2547
  %v2549 = vpop.f32.mrb[0].mxu0
  %2550 = vdwg.mxu0
  %v2551 = vxor.u32 %v2513, 2147483648
  %v2552 = vxor.u32 %v2518, 2147483648
  %v2553 = vxor.u32 %v2523, 2147483648
  %v2554 = vxor.u32 %v2528, 2147483648
  %v2555 = vxor.u32 %v2533, 2147483648
  %v2556 = vxor.u32 %v2538, 2147483648
  %v2557 = vxor.u32 %v2543, 2147483648
  %v2558 = vxor.u32 %v2548, 2147483648
  %v2559 = vmul.f32 %v2551, 1.442695
  %v2560 = vpow.pop %v2559
  %v2561 = vmul.f32 %v2552, 1.442695
  %v2562 = vpow.pop %v2561
  %v2563 = vmul.f32 %v2553, 1.442695
  %v2564 = vpow.pop %v2563
  %v2565 = vmul.f32 %v2554, 1.442695
  %v2566 = vpow.pop %v2565
  %v2567 = vmul.f32 %v2555, 1.442695
  %v2568 = vpow.pop %v2567
  %v2569 = vmul.f32 %v2556, 1.442695
  %v2570 = vpow.pop %v2569
  %v2571 = vmul.f32 %v2557, 1.442695
  %v2572 = vpow.pop %v2571
  %v2573 = vmul.f32 %v2558, 1.442695
  %v2574 = vpow.pop %v2573
  %v2575 = vadd.f32 %v2560, 1.0
  %v2576 = vadd.f32 %v2562, 1.0
  %v2577 = vadd.f32 %v2564, 1.0
  %v2578 = vadd.f32 %v2566, 1.0
  %v2579 = vadd.f32 %v2568, 1.0
  %v2580 = vadd.f32 %v2570, 1.0
  %v2581 = vadd.f32 %v2572, 1.0
  %v2582 = vadd.f32 %v2574, 1.0
  %v2583 = vrcp.pop %v2575
  %v2584 = vmul.f32 1.0, %v2583
  %v2585 = vrcp.pop %v2576
  %v2586 = vmul.f32 1.0, %v2585
  %v2587 = vrcp.pop %v2577
  %v2588 = vmul.f32 1.0, %v2587
  %v2589 = vrcp.pop %v2578
  %v2590 = vmul.f32 1.0, %v2589
  %v2591 = vrcp.pop %v2579
  %v2592 = vmul.f32 1.0, %v2591
  %v2593 = vrcp.pop %v2580
  %v2594 = vmul.f32 1.0, %v2593
  %v2595 = vrcp.pop %v2581
  %v2596 = vmul.f32 1.0, %v2595
  %v2597 = vrcp.pop %v2582
  %v2598 = vmul.f32 1.0, %v2597
  %2599 = vst [vmem:[%s10] sm:$0xff] %v2584
  %2600 = vst [vmem:[%s10 + $0x8] sm:$0xff] %v2586
  %2601 = vst [vmem:[%s10 + $0x10] sm:$0xff] %v2588
  %2602 = vst [vmem:[%s10 + $0x18] sm:$0xff] %v2590
  %2603 = vst [vmem:[%s10 + $0x20] sm:$0xff] %v2592
  %2604 = vst [vmem:[%s10 + $0x28] sm:$0xff] %v2594
  %2605 = vst [vmem:[%s10 + $0x30] sm:$0xff] %v2596
  %2606 = vst [vmem:[%s10 + $0x38] sm:$0xff] %v2598
  %2608 = vrot.lane.b32.xlu0 %v2294, 64
  %v2609 = vpop.permute.xlu0 %2608
  %2611 = vst.msk [vmem:[%s11] sm:$0xff] %vm65, %v2609
  %2613 = vrot.lane.b32.xlu0 %v2395, 64
  %v2614 = vpop.permute.xlu0 %2613
  %s2616 = scalar_lea.vmem %s11, 8
  %2617 = vst.msk [vmem:[%s2616] sm:$0xff] %vm65, %v2614
  %2619 = vrot.lane.b32.xlu0 %v2295, 96
  %v2620 = vpop.permute.xlu0 %2619
  %2622 = vst.msk [vmem:[%s12] sm:$0xff] %vm65, %v2620
  %2624 = vrot.lane.b32.xlu0 %v2396, 96
  %v2625 = vpop.permute.xlu0 %2624
  %s2627 = scalar_lea.vmem %s12, 8
  %2628 = vst.msk [vmem:[%s2627] sm:$0xff] %vm65, %v2625
  // Predicated region
  $region42: #{rnn_model_forward.1} parent=0 // pred_check
    _
  $region43: #{rnn_model_forward.1} parent=0 // pred_check_branch
    %2630 = sbr.rel (0) target = $region45
  $region44: #{rnn_model_forward.1} parent=0 // pred_region
    _
  $region45: #{rnn_model_forward.1} parent=0 // pred_fallthru
    _
  // Predicated region
  $region46: #{rnn_model_forward.1} parent=0 // pred_check
    _
  $region47: #{rnn_model_forward.1} parent=0 // pred_check_branch
    %2632 = sbr.rel (0) target = $region49
  $region48: #{rnn_model_forward.1} parent=0 // pred_region
    _
  $region49: #{rnn_model_forward.1} parent=0 // pred_fallthru
    _
  // Predicated region
  $region50: #{rnn_model_forward.1} parent=0 // pred_check
    _
  $region51: #{rnn_model_forward.1} parent=0 // pred_check_branch
    %2634 = sbr.rel (0) target = $region53
  $region52: #{rnn_model_forward.1} parent=0 // pred_region
    _
  $region53: #{rnn_model_forward.1} parent=0 // pred_fallthru
    _
  // Predicated region
  $region54: #{rnn_model_forward.1} parent=0 // pred_check
    _
  $region55: #{rnn_model_forward.1} parent=0 // pred_check_branch
    %2636 = sbr.rel (0) target = $region57
  $region56: #{rnn_model_forward.1} parent=0 // pred_region
    _
  $region57: #{rnn_model_forward.1} parent=0 // pred_fallthru
    _
  // Predicated region
  $region58: #{rnn_model_forward.1} parent=0 // pred_check
    _
  $region59: #{rnn_model_forward.1} parent=0 // pred_check_branch
    %2638 = sbr.rel (0) target = $region61
  $region60: #{rnn_model_forward.1} parent=0 // pred_region
    _
  $region61: #{rnn_model_forward.1} parent=0 // pred_fallthru
    _
  // Predicated region
  $region62: #{rnn_model_forward.1} parent=0 // pred_check
    _
  $region63: #{rnn_model_forward.1} parent=0 // pred_check_branch
    %2640 = sbr.rel (0) target = $region65
  $region64: #{rnn_model_forward.1} parent=0 // pred_region
    _
  $region65: #{rnn_model_forward.1} parent=0 // pred_fallthru
    _

</llo_original>
